<compile_context>
chip_gen: v7x
topology: tpu7x:2x2x1
jax: 0.10.0
libtpu: 0.0.40
codegen_flags: <defaults>
</compile_context>

<pallas_src>
import math
from functools import partial

import jax
import jax.numpy as jnp
from jax.experimental import pallas as pl
from jax.experimental.pallas import tpu as pltpu

_INV_SQRT2 = 1.0 / math.sqrt(2.0)


# ----------------------------- fused MLP kernel -----------------------------

def _mlp_kernel(x_ref, w1_ref, b1_ref, w2_ref, b2_ref, o_ref, acc_ref):
    """One (row-tile, hidden-tile) step of o = gelu(x@w1+b1) @ w2 + b2."""
    j = pl.program_id(1)

    @pl.when(j == 0)
    def _init():
        acc_ref[...] = jnp.zeros_like(acc_ref)

    # fc1 slice: bf16 operands, f32 accumulation on the MXU.
    h = jnp.dot(x_ref[...], w1_ref[...], preferred_element_type=jnp.float32)
    h = h + b1_ref[...]                       # f32 bias add
    # Exact (erf) GELU in f32 -- matches torch.nn.GELU() default.
    h = 0.5 * h * (1.0 + jax.lax.erf(h * _INV_SQRT2))
    # fc2 partial sum for this hidden slice; hidden never leaves VMEM/vregs.
    acc_ref[...] += jnp.dot(h.astype(w2_ref.dtype), w2_ref[...],
                            preferred_element_type=jnp.float32)

    @pl.when(j == pl.num_programs(1) - 1)
    def _finalize():
        # nn.Dropout(p=0.0) is the identity in forward -> nothing to do.
        o_ref[...] = acc_ref[...] + b2_ref[...]


# ------------------------------ tiling helpers -------------------------------

def _round_up(x, n):
    return ((x + n - 1) // n) * n


def _vmem_estimate(tm, in_f, th, out_f):
    """Rough per-step VMEM bytes (double-buffered inputs/outputs + scratch)."""
    bf2, f4 = 2, 4
    est = 0
    est += 2 * tm * in_f * bf2        # x tile (bf16, 2 buffers)
    est += 2 * in_f * th * bf2        # w1 tile
    est += 2 * 8 * th * f4            # b1 tile (sublane padded)
    est += 2 * th * out_f * bf2       # w2 tile
    est += 2 * 8 * out_f * f4         # b2 tile
    est += 2 * tm * out_f * f4        # out tile (f32)
    est += tm * out_f * f4            # acc scratch
    est += tm * th * f4               # hidden intermediate
    return est


def _vmem_capacity():
    try:
        return int(pltpu.get_tpu_info().vmem_capacity_bytes)
    except Exception:
        return 64 << 20  # conservative (v7x per-TC)


# --------------------------------- wrapper -----------------------------------

def mlp_forward(x, w1, b1, w2, b2):
    """Fused Mlp forward.

    x : (..., in_features)              float32/bf16
    w1: (in_features, hidden)           bfloat16   (torch Linear weight.T)
    b1: (1, hidden)                     float32
    w2: (hidden, out_features)          bfloat16
    b2: (1, out_features)               float32
    Returns (..., out_features) float32.
    """
    in_f, hid = w1.shape
    hid2, out_f = w2.shape
    assert hid2 == hid, "w2 must be (hidden, out_features)"
    assert b1.shape == (1, hid), "b1 must be pre-shaped to (1, hidden)"
    assert b2.shape == (1, out_f), "b2 must be pre-shaped to (1, out_features)"
    assert x.shape[-1] == in_f

    lead = x.shape[:-1]
    m = 1
    for d in lead:
        m *= d

    # Lane-dense / MXU-friendly padded feature sizes.
    in_f_p = _round_up(in_f, 128)
    out_f_p = _round_up(out_f, 128)

    # Tile choice: big row tiles, 256-multiple hidden tiles, shrunk to budget.
    vmem_cap = _vmem_capacity()
    budget = int(0.7 * vmem_cap)
    tm = min(512, _round_up(m, 8))
    th = min(512, _round_up(hid, 256))
    while _vmem_estimate(tm, in_f_p, th, out_f_p) > budget and th > 256:
        th = max(256, th // 2)
    while _vmem_estimate(tm, in_f_p, th, out_f_p) > budget and tm > 8:
        tm = max(8, _round_up(tm // 2, 8))

    m_p = _round_up(m, tm)
    hid_p = _round_up(hid, th)

    # bf16 operands for the MXU; zero padding is exact (gelu(0) == 0).
    x2 = x.reshape(m, in_f).astype(jnp.bfloat16)
    if (m_p, in_f_p) != (m, in_f):
        x2 = jnp.pad(x2, ((0, m_p - m), (0, in_f_p - in_f)))
    w1p = w1.astype(jnp.bfloat16)
    w2p = w2.astype(jnp.bfloat16)
    if (in_f_p, hid_p) != (in_f, hid):
        w1p = jnp.pad(w1p, ((0, in_f_p - in_f), (0, hid_p - hid)))
    if hid_p != hid:
        b1p = jnp.pad(b1, ((0, 0), (0, hid_p - hid)))
    else:
        b1p = b1
    if (hid_p, out_f_p) != (hid, out_f):
        w2p = jnp.pad(w2p, ((0, hid_p - hid), (0, out_f_p - out_f)))
    if out_f_p != out_f:
        b2p = jnp.pad(b2, ((0, 0), (0, out_f_p - out_f)))
    else:
        b2p = b2

    grid = (m_p // tm, hid_p // th)          # reduction (hidden) axis last

    est = _vmem_estimate(tm, in_f_p, th, out_f_p)
    vmem_limit = int(min(0.9 * vmem_cap, max(32 << 20, 2 * est)))

    flops = 2 * m_p * in_f_p * hid_p + 2 * m_p * hid_p * out_f_p
    bytes_accessed = (m_p * in_f_p * 2 + in_f_p * hid_p * 2
                      + hid_p * out_f_p * 2 + m_p * out_f_p * 4
                      + hid_p * 4 + out_f_p * 4)
    cost = pl.CostEstimate(flops=flops, transcendentals=m_p * hid_p,
                           bytes_accessed=bytes_accessed)

    out = pl.pallas_call(
        _mlp_kernel,
        out_shape=jax.ShapeDtypeStruct((m_p, out_f_p), jnp.float32),
        grid=grid,
        in_specs=[
            pl.BlockSpec((tm, in_f_p), lambda i, j: (i, 0)),
            pl.BlockSpec((in_f_p, th), lambda i, j: (0, j)),
            pl.BlockSpec((1, th), lambda i, j: (0, j)),
            pl.BlockSpec((th, out_f_p), lambda i, j: (j, 0)),
            pl.BlockSpec((1, out_f_p), lambda i, j: (0, 0)),
        ],
        out_specs=pl.BlockSpec((tm, out_f_p), lambda i, j: (i, 0)),
        scratch_shapes=[pltpu.VMEM((tm, out_f_p), jnp.float32)],
        compiler_params=pltpu.CompilerParams(
            dimension_semantics=("parallel", "arbitrary"),
            vmem_limit_bytes=vmem_limit),
        cost_estimate=cost,
    )(x2, w1p, b1p, w2p, b2p)

    if (m_p, out_f_p) != (m, out_f):
        out = out[:m, :out_f]
    return out.reshape(*lead, out_f)


# ----------------------------- pure-JAX reference -----------------------------

def mlp_reference(x, w1, b1, w2, b2):
    h = x @ w1 + b1[0]
    h = 0.5 * h * (1.0 + jax.lax.erf(h * _INV_SQRT2))
    return h @ w2 + b2[0]


# ----------------------------------- main -----------------------------------

if __name__ == "__main__":
    # Small but MXU-friendly shapes: 256-multiple K/N dims (v6e/v7x MXU is
    # 2x256x256), >= 2 grid steps on both the row axis (megacore) and the
    # hidden-reduction axis (exercises the accumulator path).
    B, L = 2, 512
    IN_F, HID = 256, 1024
    OUT_F = IN_F  # Mlp default: out_features = in_features

    key = jax.random.PRNGKey(0)
    kx, k1, k2, k3, k4 = jax.random.split(key, 5)
    x = jax.random.normal(kx, (B, L, IN_F), jnp.float32)
    # Weights stored in the (in, out) layout the kernel consumes (== torch
    # Linear weight.T); biases pre-shaped to (1, N).
    w1_f32 = 0.02 * jax.random.normal(k1, (IN_F, HID), jnp.float32)
    b1 = 0.02 * jax.random.normal(k2, (1, HID), jnp.float32)
    w2_f32 = 0.02 * jax.random.normal(k3, (HID, OUT_F), jnp.float32)
    b2 = 0.02 * jax.random.normal(k4, (1, OUT_F), jnp.float32)
    # bf16 weight storage for the MXU (f32 accumulation happens in-kernel).
    w1 = w1_f32.astype(jnp.bfloat16)
    w2 = w2_f32.astype(jnp.bfloat16)

    fwd = jax.jit(mlp_forward)
    out = fwd(x, w1, b1, w2, b2)
    jax.block_until_ready(out)

    ref = mlp_reference(x, w1_f32, b1, w2_f32, b2)
    assert out.shape == (B, L, OUT_F) and out.dtype == jnp.float32
    err = float(jnp.max(jnp.abs(out - ref)))
    # bf16 MXU operands (f32 accumulation) vs. pure-f32 reference -> loosened
    # tolerance, per review.
    assert err < 3e-2, err

    # TODO(synk): nn.Dropout with p>0 (training mode) is not implemented; the
    # module default drop=0.0 makes it an identity in forward.
    print("KERNEL_OK")
</pallas_src>

<mosaic_0001>
module attributes {stable_mosaic.version = 11 : i64} {
  func.func @_mlp_kernel(%arg0: i32, %arg1: i32, %arg2: memref<512x256xbf16, #tpu.memory_space<vmem>>, %arg3: memref<256x512xbf16, #tpu.memory_space<vmem>>, %arg4: memref<1x512xf32, #tpu.memory_space<vmem>>, %arg5: memref<512x256xbf16, #tpu.memory_space<vmem>>, %arg6: memref<1x256xf32, #tpu.memory_space<vmem>>, %arg7: memref<512x256xf32, #tpu.memory_space<vmem>>, %arg8: memref<512x256xf32, #tpu.memory_space<vmem>>) attributes {dimension_semantics = [#tpu.dimension_semantics<parallel>, #tpu.dimension_semantics<arbitrary>], iteration_bounds = array<i64: 2, 2>, scalar_prefetch = 0 : i64, scratch_operands = 1 : i64, tpu.core_type = #tpu.core_type<tc>, window_params = [{transform_indices = @transform_0, window_bounds = array<i64: 512, 256>}, {transform_indices = @transform_1, window_bounds = array<i64: 256, 512>}, {transform_indices = @transform_2, window_bounds = array<i64: 1, 512>}, {transform_indices = @transform_3, window_bounds = array<i64: 512, 256>}, {pipeline_mode = #tpu.pipeline_mode<synchronous>, transform_indices = @transform_4, window_bounds = array<i64: 1, 256>}, {transform_indices = @transform_5, window_bounds = array<i64: 512, 256>}]} {
    %c0_i32 = arith.constant 0 : i32
    %0 = arith.cmpi eq, %arg1, %c0_i32 : i32
    %1 = arith.extui %0 : i1 to i32
    %c0_i32_0 = arith.constant 0 : i32
    %2 = arith.cmpi ne, %1, %c0_i32_0 : i32
    scf.if %2 {
      %cst_17 = arith.constant 0.000000e+00 : f32
      %26 = vector.broadcast %cst_17 : f32 to vector<512x256xf32>
      %c0_18 = arith.constant 0 : index
      %c0_19 = arith.constant 0 : index
      %27 = vector.load %arg8[%c0_18, %c0_19] : memref<512x256xf32, #tpu.memory_space<vmem>>, vector<512x256xf32>
      tpu.vector_store %arg8[%c0_18, %c0_19], %26 {strides = array<i32>} : memref<512x256xf32, #tpu.memory_space<vmem>>, vector<512x256xf32>,
    } else {
    }
    %c0 = arith.constant 0 : index
    %c0_1 = arith.constant 0 : index
    %3 = vector.load %arg2[%c0, %c0_1] : memref<512x256xbf16, #tpu.memory_space<vmem>>, vector<512x256xbf16>
    %c0_2 = arith.constant 0 : index
    %c0_3 = arith.constant 0 : index
    %4 = vector.load %arg3[%c0_2, %c0_3] : memref<256x512xbf16, #tpu.memory_space<vmem>>, vector<256x512xbf16>
    %cst = arith.constant dense<0.000000e+00> : vector<512x512xf32>
    %5 = tpu.matmul %3, %4, %cst {dimension_numbers = #tpu.dot_dimension_numbers<[1], [0], [0], [1], [0, 0, 1, 1], [], []>} : vector<512x256xbf16>, vector<256x512xbf16>, vector<512x512xf32> -> vector<512x512xf32>
    %c0_4 = arith.constant 0 : index
    %c0_5 = arith.constant 0 : index
    %6 = vector.load %arg4[%c0_4, %c0_5] : memref<1x512xf32, #tpu.memory_space<vmem>>, vector<1x512xf32>
    %7 = vector.broadcast %6 : vector<1x512xf32> to vector<512x512xf32>
    %8 = arith.addf %5, %7 : vector<512x512xf32>
    %cst_6 = arith.constant 5.000000e-01 : f32
    %9 = vector.broadcast %cst_6 : f32 to vector<512x512xf32>
    %10 = arith.mulf %9, %8 : vector<512x512xf32>
    %cst_7 = arith.constant 0.707106769 : f32
    %11 = vector.broadcast %cst_7 : f32 to vector<512x512xf32>
    %12 = arith.mulf %8, %11 : vector<512x512xf32>
    %13 = math.erf %12 : vector<512x512xf32>
    %cst_8 = arith.constant 1.000000e+00 : f32
    %14 = vector.broadcast %cst_8 : f32 to vector<512x512xf32>
    %15 = arith.addf %14, %13 : vector<512x512xf32>
    %16 = arith.mulf %10, %15 : vector<512x512xf32>
    %c0_9 = arith.constant 0 : index
    %c0_10 = arith.constant 0 : index
    %17 = vector.load %arg8[%c0_9, %c0_10] : memref<512x256xf32, #tpu.memory_space<vmem>>, vector<512x256xf32>
    %18 = arith.truncf %16 : vector<512x512xf32> to vector<512x512xbf16>
    %c0_11 = arith.constant 0 : index
    %c0_12 = arith.constant 0 : index
    %19 = vector.load %arg5[%c0_11, %c0_12] : memref<512x256xbf16, #tpu.memory_space<vmem>>, vector<512x256xbf16>
    %cst_13 = arith.constant dense<0.000000e+00> : vector<512x256xf32>
    %20 = tpu.matmul %18, %19, %cst_13 {dimension_numbers = #tpu.dot_dimension_numbers<[1], [0], [0], [1], [0, 0, 1, 1], [], []>} : vector<512x512xbf16>, vector<512x256xbf16>, vector<512x256xf32> -> vector<512x256xf32>
    %21 = arith.addf %17, %20 : vector<512x256xf32>
    %c0_14 = arith.constant 0 : index
    %c0_15 = arith.constant 0 : index
    %22 = vector.load %arg8[%c0_14, %c0_15] : memref<512x256xf32, #tpu.memory_space<vmem>>, vector<512x256xf32>
    tpu.vector_store %arg8[%c0_14, %c0_15], %21 {strides = array<i32>} : memref<512x256xf32, #tpu.memory_space<vmem>>, vector<512x256xf32>,
    %c1_i32 = arith.constant 1 : i32
    %23 = arith.cmpi eq, %arg1, %c1_i32 : i32
    %24 = arith.extui %23 : i1 to i32
    %c0_i32_16 = arith.constant 0 : i32
    %25 = arith.cmpi ne, %24, %c0_i32_16 : i32
    scf.if %25 {
      %c0_17 = arith.constant 0 : index
      %c0_18 = arith.constant 0 : index
      %26 = vector.load %arg8[%c0_17, %c0_18] : memref<512x256xf32, #tpu.memory_space<vmem>>, vector<512x256xf32>
      %c0_19 = arith.constant 0 : index
      %c0_20 = arith.constant 0 : index
      %27 = vector.load %arg6[%c0_19, %c0_20] : memref<1x256xf32, #tpu.memory_space<vmem>>, vector<1x256xf32>
      %28 = vector.broadcast %27 : vector<1x256xf32> to vector<512x256xf32>
      %29 = arith.addf %26, %28 : vector<512x256xf32>
      %c0_21 = arith.constant 0 : index
      %c0_22 = arith.constant 0 : index
      %30 = vector.load %arg7[%c0_21, %c0_22] : memref<512x256xf32, #tpu.memory_space<vmem>>, vector<512x256xf32>
      tpu.vector_store %arg7[%c0_21, %c0_22], %29 {strides = array<i32>} : memref<512x256xf32, #tpu.memory_space<vmem>>, vector<512x256xf32>,
    } else {
    }
    return
  }
  func.func @transform_0(%arg0: i32, %arg1: i32) -> (i32, i32) {
    %c0_i32 = arith.constant 0 : i32
    %c0_i32_0 = arith.constant 0 : i32
    return %arg0, %c0_i32 : i32, i32
  }
  func.func @transform_1(%arg0: i32, %arg1: i32) -> (i32, i32) {
    %c0_i32 = arith.constant 0 : i32
    %c0_i32_0 = arith.constant 0 : i32
    return %c0_i32, %arg1 : i32, i32
  }
  func.func @transform_2(%arg0: i32, %arg1: i32) -> (i32, i32) {
    %c0_i32 = arith.constant 0 : i32
    %c0_i32_0 = arith.constant 0 : i32
    return %c0_i32, %arg1 : i32, i32
  }
  func.func @transform_3(%arg0: i32, %arg1: i32) -> (i32, i32) {
    %c0_i32 = arith.constant 0 : i32
    %c0_i32_0 = arith.constant 0 : i32
    return %arg1, %c0_i32 : i32, i32
  }
  func.func @transform_4(%arg0: i32, %arg1: i32) -> (i32, i32) {
    %c0_i32 = arith.constant 0 : i32
    %c0_i32_0 = arith.constant 0 : i32
    %c0_i32_1 = arith.constant 0 : i32
    return %c0_i32, %c0_i32_0 : i32, i32
  }
  func.func @transform_5(%arg0: i32, %arg1: i32) -> (i32, i32) {
    %c0_i32 = arith.constant 0 : i32
    %c0_i32_0 = arith.constant 0 : i32
    return %arg0, %c0_i32 : i32, i32
  }
}

</mosaic_0001>

<llo_original>
// kernel: mlp_forward.1
$region0: #{mlp_forward.1}
  #allocation0 [shape = 'u32[]', space=smem, size = 0x4, offset = 0x4, fixed_abs, tag = 'smem constant byte address 0x4 - core index']
  #allocation1 [shape = 'u32[144,128]{1,0:T(1,128)}', space=vmem, size = 0x12000, scoped, tag = 'internal scratch']
  #allocation2 [shape = 'f32[512,256]{1,0:T(8,128)}', space=vmem, size = 0x80000, scoped, tag = 'scratch operand']
  %s0 = inlined_call_operand.vmem [shape: bf16[1024,256], index: 0, kind: input, shape index: {}]
  %s1 = inlined_call_operand.vmem [shape: bf16[256,1024], index: 1, kind: input, shape index: {}]
  %s2 = inlined_call_operand.vmem [shape: f32[1,1024], index: 2, kind: input, shape index: {}]
  %s3 = inlined_call_operand.vmem [shape: bf16[1024,256], index: 3, kind: input, shape index: {}]
  %s4 = inlined_call_operand.vmem [shape: f32[1,256], index: 4, kind: input, shape index: {}]
  %s5 = inlined_call_operand.hbm [shape: f32[1024,256], index: 5, kind: output, shape index: {}]
  %s6 = sld [smem:[#allocation0]]
  $region84: #{mlp_forward.1} parent=0
    _
  %s8 = ssub.s32 1, %s6
  %s9 = scalar_select 0, %s8, %s6
  $region1: #{mlp_forward.1} parent=0
    #allocation3 [shape = 'u8[524288]{0}', space=vmem, size = 0x80000, scoped, tag = 'input window, operand 1']
    #allocation4 [shape = 'u8[1048576]{0}', space=vmem, size = 0x100000, scoped, tag = 'output window, operand 0']
    #allocation5 [shape = 's32[2]{0}', space=sflag, size = 0x8, scoped, tag = 'scoped memory for mlp_forward.1']
    %10 = vsyncpa [#allocation5], 0
    %s11 = scalar_lea.sflag [#allocation5], 1
    %12 = vsyncpa %s11, 0
    loop: start=0, step=1, limit=6
    $region2: #{mlp_forward.1} parent=1 // loop_pre_header
      _
    $region3: #{mlp_forward.1} parent=1 // loop_header
      %s14 = sphi 0, %s18
      %p15 = scmp.ge.s32.totalorder %s14, 6
      %s21 = sphi 0, %s33
      %s22 = sphi 0, %s29
      %s23 = sphi 0, %s21
      %s24 = sphi 0, %s22
      %s25 = sphi 0, %s23
      %s26 = sphi 0, %s24
      %s36 = sphi 0, %s38
      %s39 = sphi 0, %s36
      %s40 = sphi 0, %s39
      %s56 = sphi 0, %s40
      %s62 = sphi 0, %s64
      %s65 = sphi 0, %s62
      %s66 = sphi 0, %s65
      %s82 = sphi 0, %s66
      %s88 = sphi 0, %s90
      %s91 = sphi 0, %s88
      %s92 = sphi 0, %s91
      %s108 = sphi 0, %s92
      %s114 = sphi 0, %s116
      %s117 = sphi 0, %s114
      %s118 = sphi 0, %s117
      %s134 = sphi 0, %s118
      %s138 = sphi 0, %s138
      %s140 = sphi 0, %s138
      %s141 = sphi 0, %s140
      %s155 = sphi 0, %s141
      %s161 = sphi 0, %s163
      %s164 = sphi 0, %s161
      %s165 = sphi 0, %s164
      %s181 = sphi 0, %s165
    $region4: #{mlp_forward.1} parent=1 // loop_header_branch
      %17 = sbr.rel (%p15) target = $region8
    $region5: #{mlp_forward.1} parent=1 // loop_body
      %s19 = ssub.s32 %s14, 1
      %s20 = ssub.s32 %s14, 2
      %s27 = sadd.s32 1, %s22
      %p28 = scmp.ge.s32.totalorder %s27, 2
      %s29 = scalar_select %p28, 0, %s27
      %s30 = sadd.s32 1, %s21
      %s31 = scalar_select %p28, %s30, %s21
      %p32 = scmp.ge.s32.totalorder %s31, 2
      %s33 = scalar_select %p32, 0, %s31
      %s34 = ssub.s32 %s21, %s33
      %p35 = scmp.eq.s32.totalorder %s34, 0
      %s37 = sadd.s32 %s36, 1
      %s38 = scalar_select %p35, %s36, %s37
      %p41 = pneg %p35
      %p42 = scmp.eq.s32.totalorder %s14, 3
      %p43 = por %p41, %p42
      %p44 = scmp.ne.s32.totalorder %s36, %s39
      %p45 = scmp.eq.s32.totalorder %s14, 0
      %p46 = por %p44, %p45
      %p47 = scmp.ne.s32.totalorder %s36, %s39
      %p48 = scmp.eq.s32.totalorder %s19, 3
      %p49 = por %p47, %p48
      %p50 = scmp.ne.s32.totalorder %s39, %s40
      %p51 = scmp.eq.s32.totalorder %s19, 0
      %p52 = por %p50, %p51
      %p53 = scmp.ne.s32.totalorder %s39, %s40
      %p54 = scmp.eq.s32.totalorder %s20, 3
      %p55 = por %p53, %p54
      %p57 = scmp.ne.s32.totalorder %s40, %s56
      %p58 = scmp.eq.s32.totalorder %s20, 0
      %p59 = por %p57, %p58
      %s60 = ssub.s32 %s22, %s29
      %p61 = scmp.eq.s32.totalorder %s60, 0
      %s63 = sadd.s32 %s62, 1
      %s64 = scalar_select %p61, %s62, %s63
      %p67 = pneg %p61
      %p68 = scmp.eq.s32.totalorder %s14, 3
      %p69 = por %p67, %p68
      %p70 = scmp.ne.s32.totalorder %s62, %s65
      %p71 = scmp.eq.s32.totalorder %s14, 0
      %p72 = por %p70, %p71
      %p73 = scmp.ne.s32.totalorder %s62, %s65
      %p74 = scmp.eq.s32.totalorder %s19, 3
      %p75 = por %p73, %p74
      %p76 = scmp.ne.s32.totalorder %s65, %s66
      %p77 = scmp.eq.s32.totalorder %s19, 0
      %p78 = por %p76, %p77
      %p79 = scmp.ne.s32.totalorder %s65, %s66
      %p80 = scmp.eq.s32.totalorder %s20, 3
      %p81 = por %p79, %p80
      %p83 = scmp.ne.s32.totalorder %s66, %s82
      %p84 = scmp.eq.s32.totalorder %s20, 0
      %p85 = por %p83, %p84
      %s86 = ssub.s32 %s22, %s29
      %p87 = scmp.eq.s32.totalorder %s86, 0
      %s89 = sadd.s32 %s88, 1
      %s90 = scalar_select %p87, %s88, %s89
      %p93 = pneg %p87
      %p94 = scmp.eq.s32.totalorder %s14, 3
      %p95 = por %p93, %p94
      %p96 = scmp.ne.s32.totalorder %s88, %s91
      %p97 = scmp.eq.s32.totalorder %s14, 0
      %p98 = por %p96, %p97
      %p99 = scmp.ne.s32.totalorder %s88, %s91
      %p100 = scmp.eq.s32.totalorder %s19, 3
      %p101 = por %p99, %p100
      %p102 = scmp.ne.s32.totalorder %s91, %s92
      %p103 = scmp.eq.s32.totalorder %s19, 0
      %p104 = por %p102, %p103
      %p105 = scmp.ne.s32.totalorder %s91, %s92
      %p106 = scmp.eq.s32.totalorder %s20, 3
      %p107 = por %p105, %p106
      %p109 = scmp.ne.s32.totalorder %s92, %s108
      %p110 = scmp.eq.s32.totalorder %s20, 0
      %p111 = por %p109, %p110
      %s112 = ssub.s32 %s22, %s29
      %p113 = scmp.eq.s32.totalorder %s112, 0
      %s115 = sadd.s32 %s114, 1
      %s116 = scalar_select %p113, %s114, %s115
      %p119 = pneg %p113
      %p120 = scmp.eq.s32.totalorder %s14, 3
      %p121 = por %p119, %p120
      %p122 = scmp.ne.s32.totalorder %s114, %s117
      %p123 = scmp.eq.s32.totalorder %s14, 0
      %p124 = por %p122, %p123
      %p125 = scmp.ne.s32.totalorder %s114, %s117
      %p126 = scmp.eq.s32.totalorder %s19, 3
      %p127 = por %p125, %p126
      %p128 = scmp.ne.s32.totalorder %s117, %s118
      %p129 = scmp.eq.s32.totalorder %s19, 0
      %p130 = por %p128, %p129
      %p131 = scmp.ne.s32.totalorder %s117, %s118
      %p132 = scmp.eq.s32.totalorder %s20, 3
      %p133 = por %p131, %p132
      %p135 = scmp.ne.s32.totalorder %s118, %s134
      %p136 = scmp.eq.s32.totalorder %s20, 0
      %p137 = por %p135, %p136
      %s139 = sadd.s32 %s138, 1
      %p142 = scmp.eq.s32.totalorder %s14, 3
      %p143 = scmp.ne.s32.totalorder %s138, %s140
      %p144 = scmp.eq.s32.totalorder %s14, 0
      %p145 = por %p143, %p144
      %p146 = scmp.ne.s32.totalorder %s138, %s140
      %p147 = scmp.eq.s32.totalorder %s19, 3
      %p148 = por %p146, %p147
      %p149 = scmp.ne.s32.totalorder %s140, %s141
      %p150 = scmp.eq.s32.totalorder %s19, 0
      %p151 = por %p149, %p150
      %p152 = scmp.ne.s32.totalorder %s140, %s141
      %p153 = scmp.eq.s32.totalorder %s20, 3
      %p154 = por %p152, %p153
      %p156 = scmp.ne.s32.totalorder %s141, %s155
      %p157 = scmp.eq.s32.totalorder %s20, 0
      %p158 = por %p156, %p157
      %s159 = ssub.s32 %s21, %s33
      %p160 = scmp.eq.s32.totalorder %s159, 0
      %s162 = sadd.s32 %s161, 1
      %s163 = scalar_select %p160, %s161, %s162
      %p166 = pneg %p160
      %p167 = scmp.eq.s32.totalorder %s14, 3
      %p168 = por %p166, %p167
      %p169 = scmp.ne.s32.totalorder %s161, %s164
      %p170 = scmp.eq.s32.totalorder %s14, 0
      %p171 = por %p169, %p170
      %p172 = scmp.ne.s32.totalorder %s161, %s164
      %p173 = scmp.eq.s32.totalorder %s19, 3
      %p174 = por %p172, %p173
      %p175 = scmp.ne.s32.totalorder %s164, %s165
      %p176 = scmp.eq.s32.totalorder %s19, 0
      %p177 = por %p175, %p176
      %p178 = scmp.ne.s32.totalorder %s164, %s165
      %p179 = scmp.eq.s32.totalorder %s20, 3
      %p180 = por %p178, %p179
      %p182 = scmp.ne.s32.totalorder %s165, %s181
      %p183 = scmp.eq.s32.totalorder %s20, 0
      %p184 = por %p182, %p183
      %p185 = scmp.le.s32.totalorder 1, %s14
      %p186 = scmp.lt.s32.totalorder %s14, 5
      %p187 = pnand %p185, %p186
      %p188 = pneg %p187
      // Predicated region
      $region9: #{mlp_forward.1} parent=5 // pred_check
        _
      $region10: #{mlp_forward.1} parent=5 // pred_check_branch
        %190 = sbr.rel (%p187) target = $region12
      $region11: #{mlp_forward.1} parent=5 // pred_region
        %s191 = ssub.s32 %s14, 1
        // Predicated region
        $region13: #{mlp_forward.1} parent=11 // pred_check
          %p192 = pneg %p151
        $region14: #{mlp_forward.1} parent=11 // pred_check_branch
          %194 = sbr.rel (%p192) target = $region16
        $region15: #{mlp_forward.1} parent=11 // pred_region
          _
        $region16: #{mlp_forward.1} parent=11 // pred_fallthru
          _
      $region12: #{mlp_forward.1} parent=5 // pred_fallthru
        _
      %p195 = scmp.lt.s32.totalorder %s14, 4
      // Predicated region
      $region17: #{mlp_forward.1} parent=5 // pred_check
        %p196 = pneg %p195
      $region18: #{mlp_forward.1} parent=5 // pred_check_branch
        %198 = sbr.rel (%p196) target = $region20
      $region19: #{mlp_forward.1} parent=5 // pred_region
        // Predicated region
        $region21: #{mlp_forward.1} parent=19 // pred_check
          %p199 = pneg %p46
        $region22: #{mlp_forward.1} parent=19 // pred_check_branch
          %201 = sbr.rel (%p199) target = $region24
        $region23: #{mlp_forward.1} parent=19 // pred_region
          %s202 = smul.u32 64, %s21
          %p203 = scmp.lt.s32.totalorder %s202, 127
          %s204 = scalar_select %p203, %s202, 127
          %s205 = smul.addr %s204, 2
          %s206 = smul.addr %s205, 4
          %s207 = scalar_lea.vmem %s0, %s206
          %s208 = smul.u32 64, %s21
        $region24: #{mlp_forward.1} parent=19 // pred_fallthru
          _
        // Predicated region
        $region25: #{mlp_forward.1} parent=19 // pred_check
          %p209 = pneg %p72
        $region26: #{mlp_forward.1} parent=19 // pred_check_branch
          %211 = sbr.rel (%p209) target = $region28
        $region27: #{mlp_forward.1} parent=19 // pred_region
          %s212 = sand.u32 %s62, 1
          %s213 = sand.u32 %s62, 1
          %s214 = smul.addr %s213, 512
          %s215 = scalar_lea.vmem [#allocation3], %s214
          %s216 = smul.u32 4, %s22
          %s217 = smul.addr %s216, 4
          %s218 = scalar_lea.vmem %s1, %s217
          // Predicated region
          $region29: #{mlp_forward.1} parent=27 // pred_check
            _
          $region30: #{mlp_forward.1} parent=27 // pred_check_branch
            %220 = sbr.rel (0) target = $region32
          $region31: #{mlp_forward.1} parent=27 // pred_region
            // Predicated region
            $region33: #{mlp_forward.1} parent=31 // pred_check
              _
            $region34: #{mlp_forward.1} parent=31 // pred_check_branch
              %222 = sbr.rel (0) target = $region36
            $region35: #{mlp_forward.1} parent=31 // pred_region
              loop: start=0, step=1, limit=1
              $region37: #{mlp_forward.1} parent=35 // loop_pre_header
                _
              $region38: #{mlp_forward.1} parent=35 // loop_header
                %s224 = sphi 0, %s228
                %p225 = scmp.ge.s32.totalorder %s224, 1
                %s229 = sphi %s218, %s218
                %s230 = sphi %s215, %s215
              $region39: #{mlp_forward.1} parent=35 // loop_header_branch
                %227 = sbr.rel (%p225) target = $region43
              $region40: #{mlp_forward.1} parent=35 // loop_body
                %v231 = vld [vmem:[%s229] sm:$0xff]
                %232 = vst [vmem:[%s230] sm:$0xff] %v231
                %v233 = vld [vmem:[%s229 + $0x8] sm:$0xff]
                %234 = vst [vmem:[%s230 + $0x8] sm:$0xff] %v233
                %v235 = vld [vmem:[%s229 + $0x20] sm:$0xff]
                %236 = vst [vmem:[%s230 + $0x10] sm:$0xff] %v235
                %v237 = vld [vmem:[%s229 + $0x28] sm:$0xff]
                %238 = vst [vmem:[%s230 + $0x18] sm:$0xff] %v237
                %v239 = vld [vmem:[%s229 + $0x40] sm:$0xff]
                %240 = vst [vmem:[%s230 + $0x20] sm:$0xff] %v239
                %v241 = vld [vmem:[%s229 + $0x48] sm:$0xff]
                %242 = vst [vmem:[%s230 + $0x28] sm:$0xff] %v241
                %v243 = vld [vmem:[%s229 + $0x60] sm:$0xff]
                %244 = vst [vmem:[%s230 + $0x30] sm:$0xff] %v243
                %v245 = vld [vmem:[%s229 + $0x68] sm:$0xff]
                %246 = vst [vmem:[%s230 + $0x38] sm:$0xff] %v245
                %v247 = vld [vmem:[%s229 + $0x80] sm:$0xff]
                %248 = vst [vmem:[%s230 + $0x40] sm:$0xff] %v247
                %v249 = vld [vmem:[%s229 + $0x88] sm:$0xff]
                %250 = vst [vmem:[%s230 + $0x48] sm:$0xff] %v249
                %v251 = vld [vmem:[%s229 + $0xa0] sm:$0xff]
                %252 = vst [vmem:[%s230 + $0x50] sm:$0xff] %v251
                %v253 = vld [vmem:[%s229 + $0xa8] sm:$0xff]
                %254 = vst [vmem:[%s230 + $0x58] sm:$0xff] %v253
                %v255 = vld [vmem:[%s229 + $0xc0] sm:$0xff]
                %256 = vst [vmem:[%s230 + $0x60] sm:$0xff] %v255
                %v257 = vld [vmem:[%s229 + $0xc8] sm:$0xff]
                %258 = vst [vmem:[%s230 + $0x68] sm:$0xff] %v257
                %v259 = vld [vmem:[%s229 + $0xe0] sm:$0xff]
                %260 = vst [vmem:[%s230 + $0x70] sm:$0xff] %v259
                %v261 = vld [vmem:[%s229 + $0xe8] sm:$0xff]
                %262 = vst [vmem:[%s230 + $0x78] sm:$0xff] %v261
                %v263 = vld [vmem:[%s229 + $0x100] sm:$0xff]
                %264 = vst [vmem:[%s230 + $0x80] sm:$0xff] %v263
                %v265 = vld [vmem:[%s229 + $0x108] sm:$0xff]
                %266 = vst [vmem:[%s230 + $0x88] sm:$0xff] %v265
                %v267 = vld [vmem:[%s229 + $0x120] sm:$0xff]
                %268 = vst [vmem:[%s230 + $0x90] sm:$0xff] %v267
                %v269 = vld [vmem:[%s229 + $0x128] sm:$0xff]
                %270 = vst [vmem:[%s230 + $0x98] sm:$0xff] %v269
                %v271 = vld [vmem:[%s229 + $0x140] sm:$0xff]
                %272 = vst [vmem:[%s230 + $0xa0] sm:$0xff] %v271
                %v273 = vld [vmem:[%s229 + $0x148] sm:$0xff]
                %274 = vst [vmem:[%s230 + $0xa8] sm:$0xff] %v273
                %v275 = vld [vmem:[%s229 + $0x160] sm:$0xff]
                %276 = vst [vmem:[%s230 + $0xb0] sm:$0xff] %v275
                %v277 = vld [vmem:[%s229 + $0x168] sm:$0xff]
                %278 = vst [vmem:[%s230 + $0xb8] sm:$0xff] %v277
                %v279 = vld [vmem:[%s229 + $0x180] sm:$0xff]
                %280 = vst [vmem:[%s230 + $0xc0] sm:$0xff] %v279
                %v281 = vld [vmem:[%s229 + $0x188] sm:$0xff]
                %282 = vst [vmem:[%s230 + $0xc8] sm:$0xff] %v281
                %v283 = vld [vmem:[%s229 + $0x1a0] sm:$0xff]
                %284 = vst [vmem:[%s230 + $0xd0] sm:$0xff] %v283
                %v285 = vld [vmem:[%s229 + $0x1a8] sm:$0xff]
                %286 = vst [vmem:[%s230 + $0xd8] sm:$0xff] %v285
                %v287 = vld [vmem:[%s229 + $0x1c0] sm:$0xff]
                %288 = vst [vmem:[%s230 + $0xe0] sm:$0xff] %v287
                %v289 = vld [vmem:[%s229 + $0x1c8] sm:$0xff]
                %290 = vst [vmem:[%s230 + $0xe8] sm:$0xff] %v289
                %v291 = vld [vmem:[%s229 + $0x1e0] sm:$0xff]
                %292 = vst [vmem:[%s230 + $0xf0] sm:$0xff] %v291
                %v293 = vld [vmem:[%s229 + $0x1e8] sm:$0xff]
                %294 = vst [vmem:[%s230 + $0xf8] sm:$0xff] %v293
                %v295 = vld [vmem:[%s229 + $0x200] sm:$0xff]
                %296 = vst [vmem:[%s230 + $0x100] sm:$0xff] %v295
                %v297 = vld [vmem:[%s229 + $0x208] sm:$0xff]
                %298 = vst [vmem:[%s230 + $0x108] sm:$0xff] %v297
                %v299 = vld [vmem:[%s229 + $0x220] sm:$0xff]
                %300 = vst [vmem:[%s230 + $0x110] sm:$0xff] %v299
                %v301 = vld [vmem:[%s229 + $0x228] sm:$0xff]
                %302 = vst [vmem:[%s230 + $0x118] sm:$0xff] %v301
                %v303 = vld [vmem:[%s229 + $0x240] sm:$0xff]
                %304 = vst [vmem:[%s230 + $0x120] sm:$0xff] %v303
                %v305 = vld [vmem:[%s229 + $0x248] sm:$0xff]
                %306 = vst [vmem:[%s230 + $0x128] sm:$0xff] %v305
                %v307 = vld [vmem:[%s229 + $0x260] sm:$0xff]
                %308 = vst [vmem:[%s230 + $0x130] sm:$0xff] %v307
                %v309 = vld [vmem:[%s229 + $0x268] sm:$0xff]
                %310 = vst [vmem:[%s230 + $0x138] sm:$0xff] %v309
                %v311 = vld [vmem:[%s229 + $0x280] sm:$0xff]
                %312 = vst [vmem:[%s230 + $0x140] sm:$0xff] %v311
                %v313 = vld [vmem:[%s229 + $0x288] sm:$0xff]
                %314 = vst [vmem:[%s230 + $0x148] sm:$0xff] %v313
                %v315 = vld [vmem:[%s229 + $0x2a0] sm:$0xff]
                %316 = vst [vmem:[%s230 + $0x150] sm:$0xff] %v315
                %v317 = vld [vmem:[%s229 + $0x2a8] sm:$0xff]
                %318 = vst [vmem:[%s230 + $0x158] sm:$0xff] %v317
                %v319 = vld [vmem:[%s229 + $0x2c0] sm:$0xff]
                %320 = vst [vmem:[%s230 + $0x160] sm:$0xff] %v319
                %v321 = vld [vmem:[%s229 + $0x2c8] sm:$0xff]
                %322 = vst [vmem:[%s230 + $0x168] sm:$0xff] %v321
                %v323 = vld [vmem:[%s229 + $0x2e0] sm:$0xff]
                %324 = vst [vmem:[%s230 + $0x170] sm:$0xff] %v323
                %v325 = vld [vmem:[%s229 + $0x2e8] sm:$0xff]
                %326 = vst [vmem:[%s230 + $0x178] sm:$0xff] %v325
                %v327 = vld [vmem:[%s229 + $0x300] sm:$0xff]
                %328 = vst [vmem:[%s230 + $0x180] sm:$0xff] %v327
                %v329 = vld [vmem:[%s229 + $0x308] sm:$0xff]
                %330 = vst [vmem:[%s230 + $0x188] sm:$0xff] %v329
                %v331 = vld [vmem:[%s229 + $0x320] sm:$0xff]
                %332 = vst [vmem:[%s230 + $0x190] sm:$0xff] %v331
                %v333 = vld [vmem:[%s229 + $0x328] sm:$0xff]
                %334 = vst [vmem:[%s230 + $0x198] sm:$0xff] %v333
                %v335 = vld [vmem:[%s229 + $0x340] sm:$0xff]
                %336 = vst [vmem:[%s230 + $0x1a0] sm:$0xff] %v335
                %v337 = vld [vmem:[%s229 + $0x348] sm:$0xff]
                %338 = vst [vmem:[%s230 + $0x1a8] sm:$0xff] %v337
                %v339 = vld [vmem:[%s229 + $0x360] sm:$0xff]
                %340 = vst [vmem:[%s230 + $0x1b0] sm:$0xff] %v339
                %v341 = vld [vmem:[%s229 + $0x368] sm:$0xff]
                %342 = vst [vmem:[%s230 + $0x1b8] sm:$0xff] %v341
                %v343 = vld [vmem:[%s229 + $0x380] sm:$0xff]
                %344 = vst [vmem:[%s230 + $0x1c0] sm:$0xff] %v343
                %v345 = vld [vmem:[%s229 + $0x388] sm:$0xff]
                %346 = vst [vmem:[%s230 + $0x1c8] sm:$0xff] %v345
                %v347 = vld [vmem:[%s229 + $0x3a0] sm:$0xff]
                %348 = vst [vmem:[%s230 + $0x1d0] sm:$0xff] %v347
                %v349 = vld [vmem:[%s229 + $0x3a8] sm:$0xff]
                %350 = vst [vmem:[%s230 + $0x1d8] sm:$0xff] %v349
                %v351 = vld [vmem:[%s229 + $0x3c0] sm:$0xff]
                %352 = vst [vmem:[%s230 + $0x1e0] sm:$0xff] %v351
                %v353 = vld [vmem:[%s229 + $0x3c8] sm:$0xff]
                %354 = vst [vmem:[%s230 + $0x1e8] sm:$0xff] %v353
                %v355 = vld [vmem:[%s229 + $0x3e0] sm:$0xff]
                %356 = vst [vmem:[%s230 + $0x1f0] sm:$0xff] %v355
                %v357 = vld [vmem:[%s229 + $0x3e8] sm:$0xff]
                %358 = vst [vmem:[%s230 + $0x1f8] sm:$0xff] %v357
              $region41: #{mlp_forward.1} parent=35 // loop_footer
                %s228 = sadd.s32 1, %s224
              $region42: #{mlp_forward.1} parent=35 // loop_footer_branch
                %223 = sbr.rel target = $region38
              $region43: #{mlp_forward.1} parent=35 // loop_exit
                _
            $region36: #{mlp_forward.1} parent=31 // pred_fallthru
              _
            // Predicated region
            $region44: #{mlp_forward.1} parent=31 // pred_check
              _
            $region45: #{mlp_forward.1} parent=31 // pred_check_branch
              %360 = sbr.rel target = $region47
            $region46: #{mlp_forward.1} parent=31 // pred_region
              _
            $region47: #{mlp_forward.1} parent=31 // pred_fallthru
              _
          $region32: #{mlp_forward.1} parent=27 // pred_fallthru
            _
          %361 = vnop
        $region28: #{mlp_forward.1} parent=19 // pred_fallthru
          _
        // Predicated region
        $region48: #{mlp_forward.1} parent=19 // pred_check
          %p362 = pneg %p98
        $region49: #{mlp_forward.1} parent=19 // pred_check_branch
          %364 = sbr.rel (%p362) target = $region51
        $region50: #{mlp_forward.1} parent=19 // pred_region
          %s365 = smul.u32 4, %s22
          %p366 = scmp.lt.s32.totalorder %s365, 7
          %s367 = scalar_select %p366, %s365, 7
          %s368 = scalar_lea.vmem %s2, %s367
          %s369 = smul.u32 4, %s22
        $region51: #{mlp_forward.1} parent=19 // pred_fallthru
          _
        // Predicated region
        $region52: #{mlp_forward.1} parent=19 // pred_check
          %p370 = pneg %p124
        $region53: #{mlp_forward.1} parent=19 // pred_check_branch
          %372 = sbr.rel (%p370) target = $region55
        $region54: #{mlp_forward.1} parent=19 // pred_region
          %s373 = smul.u32 64, %s22
          %p374 = scmp.lt.s32.totalorder %s373, 127
          %s375 = scalar_select %p374, %s373, 127
          %s376 = smul.addr %s375, 2
          %s377 = smul.addr %s376, 4
          %s378 = scalar_lea.vmem %s3, %s377
          %s379 = smul.u32 64, %s22
        $region55: #{mlp_forward.1} parent=19 // pred_fallthru
          _
      $region20: #{mlp_forward.1} parent=5 // pred_fallthru
        _
      %p380 = scmp.le.s32.totalorder 1, %s14
      %p381 = scmp.lt.s32.totalorder %s14, 5
      %p382 = pnand %p380, %p381
      %p383 = pneg %p382
      // Predicated region
      $region56: #{mlp_forward.1} parent=5 // pred_check
        _
      $region57: #{mlp_forward.1} parent=5 // pred_check_branch
        %385 = sbr.rel (%p382) target = $region59
      $region58: #{mlp_forward.1} parent=5 // pred_region
        %s386 = ssub.s32 %s14, 1
        %s387 = sand.u32 %s65, 1
        %s388 = sand.u32 %s65, 1
        %s389 = smul.addr %s388, 512
        %s390 = scalar_lea.vmem [#allocation3], %s389
        // Predicated region
        $region60: #{mlp_forward.1} parent=58 // pred_check
          %p391 = pneg %p78
        $region61: #{mlp_forward.1} parent=58 // pred_check_branch
          %393 = sbr.rel (%p391) target = $region63
        $region62: #{mlp_forward.1} parent=58 // pred_region
          _
        $region63: #{mlp_forward.1} parent=58 // pred_fallthru
          _
        %s394 = smul.u32 64, %s23
        %p395 = scmp.lt.s32.totalorder %s394, 127
        %s396 = scalar_select %p395, %s394, 127
        %s397 = smul.addr %s396, 2
        %s398 = smul.addr %s397, 4
        %s399 = scalar_lea.vmem %s0, %s398
        %p400 = pneg %p52
        %p401 = pneg %p49
        %s402 = sand.u32 %s65, 1
        %s403 = sand.u32 %s65, 1
        %s404 = smul.addr %s403, 512
        %s405 = scalar_lea.vmem [#allocation3], %s404
        %p406 = pneg %p78
        %p407 = pneg %p75
        %s408 = smul.u32 4, %s24
        %p409 = scmp.lt.s32.totalorder %s408, 7
        %s410 = scalar_select %p409, %s408, 7
        %s411 = scalar_lea.vmem %s2, %s410
        %p412 = pneg %p104
        %p413 = pneg %p101
        %s414 = smul.u32 64, %s24
        %p415 = scmp.lt.s32.totalorder %s414, 127
        %s416 = scalar_select %p415, %s414, 127
        %s417 = smul.addr %s416, 2
        %s418 = smul.addr %s417, 4
        %s419 = scalar_lea.vmem %s3, %s418
        %p420 = pneg %p130
        %p421 = pneg %p127
        %p422 = pneg %p151
        %p423 = pneg %p148
        %p424 = pneg %p177
        %p425 = pneg %p174
        %s426 = sand.u32 %s164, 1
        %s427 = scalar_lea.sflag [#allocation5], %s426
        %s428 = sand.u32 %s164, 1
        %s429 = smul.addr %s428, 1024
        %s430 = scalar_lea.vmem [#allocation4], %s429
        %s431 = smul.u32 64, %s23
        %p432 = scmp.lt.s32.totalorder %s431, 127
        %s433 = scalar_select %p432, %s431, 127
        %s434 = smul.addr %s433, 2
        %s435 = smul.addr %s434, 4
        %s436 = scalar_lea.vmem %s0, %s435
        %s437 = smul.u32 64, %s23
        %s438 = smul.u32 4, %s24
        %s439 = smul.u32 4, %s24
        %p440 = scmp.lt.s32.totalorder %s439, 7
        %s441 = scalar_select %p440, %s439, 7
        %s442 = scalar_lea.vmem %s2, %s441
        %s443 = smul.u32 4, %s24
        %s444 = smul.u32 64, %s24
        %p445 = scmp.lt.s32.totalorder %s444, 127
        %s446 = scalar_select %p445, %s444, 127
        %s447 = smul.addr %s446, 2
        %s448 = smul.addr %s447, 4
        %s449 = scalar_lea.vmem %s3, %s448
        %s450 = smul.u32 64, %s24
        %s451 = smul.u32 64, %s23
        %p452 = scmp.eq.s32.totalorder %s24, 0
        // Predicated region
        $region64: #{mlp_forward.1} parent=58 // pred_check
          %p453 = pneg %p452
        $region65: #{mlp_forward.1} parent=58 // pred_check_branch
          %455 = sbr.rel (%p453) target = $region67
        $region66: #{mlp_forward.1} parent=58 // pred_region
          %456 = vst [vmem:[#allocation2] sm:$0xff] 0.0
          %457 = vst [vmem:[#allocation2 + $0x8] sm:$0xff] 0.0
          %458 = vst [vmem:[#allocation2 + $0x10] sm:$0xff] 0.0
          %459 = vst [vmem:[#allocation2 + $0x18] sm:$0xff] 0.0
          %460 = vst [vmem:[#allocation2 + $0x20] sm:$0xff] 0.0
          %461 = vst [vmem:[#allocation2 + $0x28] sm:$0xff] 0.0
          %462 = vst [vmem:[#allocation2 + $0x30] sm:$0xff] 0.0
          %463 = vst [vmem:[#allocation2 + $0x38] sm:$0xff] 0.0
          %464 = vst [vmem:[#allocation2 + $0x40] sm:$0xff] 0.0
          %465 = vst [vmem:[#allocation2 + $0x48] sm:$0xff] 0.0
          %466 = vst [vmem:[#allocation2 + $0x50] sm:$0xff] 0.0
          %467 = vst [vmem:[#allocation2 + $0x58] sm:$0xff] 0.0
          %468 = vst [vmem:[#allocation2 + $0x60] sm:$0xff] 0.0
          %469 = vst [vmem:[#allocation2 + $0x68] sm:$0xff] 0.0
          %470 = vst [vmem:[#allocation2 + $0x70] sm:$0xff] 0.0
          %471 = vst [vmem:[#allocation2 + $0x78] sm:$0xff] 0.0
          %472 = vst [vmem:[#allocation2 + $0x80] sm:$0xff] 0.0
          %473 = vst [vmem:[#allocation2 + $0x88] sm:$0xff] 0.0
          %474 = vst [vmem:[#allocation2 + $0x90] sm:$0xff] 0.0
          %475 = vst [vmem:[#allocation2 + $0x98] sm:$0xff] 0.0
          %476 = vst [vmem:[#allocation2 + $0xa0] sm:$0xff] 0.0
          %477 = vst [vmem:[#allocation2 + $0xa8] sm:$0xff] 0.0
          %478 = vst [vmem:[#allocation2 + $0xb0] sm:$0xff] 0.0
          %479 = vst [vmem:[#allocation2 + $0xb8] sm:$0xff] 0.0
          %480 = vst [vmem:[#allocation2 + $0xc0] sm:$0xff] 0.0
          %481 = vst [vmem:[#allocation2 + $0xc8] sm:$0xff] 0.0
          %482 = vst [vmem:[#allocation2 + $0xd0] sm:$0xff] 0.0
          %483 = vst [vmem:[#allocation2 + $0xd8] sm:$0xff] 0.0
          %484 = vst [vmem:[#allocation2 + $0xe0] sm:$0xff] 0.0
          %485 = vst [vmem:[#allocation2 + $0xe8] sm:$0xff] 0.0
          %486 = vst [vmem:[#allocation2 + $0xf0] sm:$0xff] 0.0
          %487 = vst [vmem:[#allocation2 + $0xf8] sm:$0xff] 0.0
          %488 = vst [vmem:[#allocation2 + $0x100] sm:$0xff] 0.0
          %489 = vst [vmem:[#allocation2 + $0x108] sm:$0xff] 0.0
          %490 = vst [vmem:[#allocation2 + $0x110] sm:$0xff] 0.0
          %491 = vst [vmem:[#allocation2 + $0x118] sm:$0xff] 0.0
          %492 = vst [vmem:[#allocation2 + $0x120] sm:$0xff] 0.0
          %493 = vst [vmem:[#allocation2 + $0x128] sm:$0xff] 0.0
          %494 = vst [vmem:[#allocation2 + $0x130] sm:$0xff] 0.0
          %495 = vst [vmem:[#allocation2 + $0x138] sm:$0xff] 0.0
          %496 = vst [vmem:[#allocation2 + $0x140] sm:$0xff] 0.0
          %497 = vst [vmem:[#allocation2 + $0x148] sm:$0xff] 0.0
          %498 = vst [vmem:[#allocation2 + $0x150] sm:$0xff] 0.0
          %499 = vst [vmem:[#allocation2 + $0x158] sm:$0xff] 0.0
          %500 = vst [vmem:[#allocation2 + $0x160] sm:$0xff] 0.0
          %501 = vst [vmem:[#allocation2 + $0x168] sm:$0xff] 0.0
          %502 = vst [vmem:[#allocation2 + $0x170] sm:$0xff] 0.0
          %503 = vst [vmem:[#allocation2 + $0x178] sm:$0xff] 0.0
          %504 = vst [vmem:[#allocation2 + $0x180] sm:$0xff] 0.0
          %505 = vst [vmem:[#allocation2 + $0x188] sm:$0xff] 0.0
          %506 = vst [vmem:[#allocation2 + $0x190] sm:$0xff] 0.0
          %507 = vst [vmem:[#allocation2 + $0x198] sm:$0xff] 0.0
          %508 = vst [vmem:[#allocation2 + $0x1a0] sm:$0xff] 0.0
          %509 = vst [vmem:[#allocation2 + $0x1a8] sm:$0xff] 0.0
          %510 = vst [vmem:[#allocation2 + $0x1b0] sm:$0xff] 0.0
          %511 = vst [vmem:[#allocation2 + $0x1b8] sm:$0xff] 0.0
          %512 = vst [vmem:[#allocation2 + $0x1c0] sm:$0xff] 0.0
          %513 = vst [vmem:[#allocation2 + $0x1c8] sm:$0xff] 0.0
          %514 = vst [vmem:[#allocation2 + $0x1d0] sm:$0xff] 0.0
          %515 = vst [vmem:[#allocation2 + $0x1d8] sm:$0xff] 0.0
          %516 = vst [vmem:[#allocation2 + $0x1e0] sm:$0xff] 0.0
          %517 = vst [vmem:[#allocation2 + $0x1e8] sm:$0xff] 0.0
          %518 = vst [vmem:[#allocation2 + $0x1f0] sm:$0xff] 0.0
          %519 = vst [vmem:[#allocation2 + $0x1f8] sm:$0xff] 0.0
          %520 = vst [vmem:[#allocation2 + $0x200] sm:$0xff] 0.0
          %521 = vst [vmem:[#allocation2 + $0x208] sm:$0xff] 0.0
          %522 = vst [vmem:[#allocation2 + $0x210] sm:$0xff] 0.0
          %523 = vst [vmem:[#allocation2 + $0x218] sm:$0xff] 0.0
          %524 = vst [vmem:[#allocation2 + $0x220] sm:$0xff] 0.0
          %525 = vst [vmem:[#allocation2 + $0x228] sm:$0xff] 0.0
          %526 = vst [vmem:[#allocation2 + $0x230] sm:$0xff] 0.0
          %527 = vst [vmem:[#allocation2 + $0x238] sm:$0xff] 0.0
          %528 = vst [vmem:[#allocation2 + $0x240] sm:$0xff] 0.0
          %529 = vst [vmem:[#allocation2 + $0x248] sm:$0xff] 0.0
          %530 = vst [vmem:[#allocation2 + $0x250] sm:$0xff] 0.0
          %531 = vst [vmem:[#allocation2 + $0x258] sm:$0xff] 0.0
          %532 = vst [vmem:[#allocation2 + $0x260] sm:$0xff] 0.0
          %533 = vst [vmem:[#allocation2 + $0x268] sm:$0xff] 0.0
          %534 = vst [vmem:[#allocation2 + $0x270] sm:$0xff] 0.0
          %535 = vst [vmem:[#allocation2 + $0x278] sm:$0xff] 0.0
          %536 = vst [vmem:[#allocation2 + $0x280] sm:$0xff] 0.0
          %537 = vst [vmem:[#allocation2 + $0x288] sm:$0xff] 0.0
          %538 = vst [vmem:[#allocation2 + $0x290] sm:$0xff] 0.0
          %539 = vst [vmem:[#allocation2 + $0x298] sm:$0xff] 0.0
          %540 = vst [vmem:[#allocation2 + $0x2a0] sm:$0xff] 0.0
          %541 = vst [vmem:[#allocation2 + $0x2a8] sm:$0xff] 0.0
          %542 = vst [vmem:[#allocation2 + $0x2b0] sm:$0xff] 0.0
          %543 = vst [vmem:[#allocation2 + $0x2b8] sm:$0xff] 0.0
          %544 = vst [vmem:[#allocation2 + $0x2c0] sm:$0xff] 0.0
          %545 = vst [vmem:[#allocation2 + $0x2c8] sm:$0xff] 0.0
          %546 = vst [vmem:[#allocation2 + $0x2d0] sm:$0xff] 0.0
          %547 = vst [vmem:[#allocation2 + $0x2d8] sm:$0xff] 0.0
          %548 = vst [vmem:[#allocation2 + $0x2e0] sm:$0xff] 0.0
          %549 = vst [vmem:[#allocation2 + $0x2e8] sm:$0xff] 0.0
          %550 = vst [vmem:[#allocation2 + $0x2f0] sm:$0xff] 0.0
          %551 = vst [vmem:[#allocation2 + $0x2f8] sm:$0xff] 0.0
          %552 = vst [vmem:[#allocation2 + $0x300] sm:$0xff] 0.0
          %553 = vst [vmem:[#allocation2 + $0x308] sm:$0xff] 0.0
          %554 = vst [vmem:[#allocation2 + $0x310] sm:$0xff] 0.0
          %555 = vst [vmem:[#allocation2 + $0x318] sm:$0xff] 0.0
          %556 = vst [vmem:[#allocation2 + $0x320] sm:$0xff] 0.0
          %557 = vst [vmem:[#allocation2 + $0x328] sm:$0xff] 0.0
          %558 = vst [vmem:[#allocation2 + $0x330] sm:$0xff] 0.0
          %559 = vst [vmem:[#allocation2 + $0x338] sm:$0xff] 0.0
          %560 = vst [vmem:[#allocation2 + $0x340] sm:$0xff] 0.0
          %561 = vst [vmem:[#allocation2 + $0x348] sm:$0xff] 0.0
          %562 = vst [vmem:[#allocation2 + $0x350] sm:$0xff] 0.0
          %563 = vst [vmem:[#allocation2 + $0x358] sm:$0xff] 0.0
          %564 = vst [vmem:[#allocation2 + $0x360] sm:$0xff] 0.0
          %565 = vst [vmem:[#allocation2 + $0x368] sm:$0xff] 0.0
          %566 = vst [vmem:[#allocation2 + $0x370] sm:$0xff] 0.0
          %567 = vst [vmem:[#allocation2 + $0x378] sm:$0xff] 0.0
          %568 = vst [vmem:[#allocation2 + $0x380] sm:$0xff] 0.0
          %569 = vst [vmem:[#allocation2 + $0x388] sm:$0xff] 0.0
          %570 = vst [vmem:[#allocation2 + $0x390] sm:$0xff] 0.0
          %571 = vst [vmem:[#allocation2 + $0x398] sm:$0xff] 0.0
          %572 = vst [vmem:[#allocation2 + $0x3a0] sm:$0xff] 0.0
          %573 = vst [vmem:[#allocation2 + $0x3a8] sm:$0xff] 0.0
          %574 = vst [vmem:[#allocation2 + $0x3b0] sm:$0xff] 0.0
          %575 = vst [vmem:[#allocation2 + $0x3b8] sm:$0xff] 0.0
          %576 = vst [vmem:[#allocation2 + $0x3c0] sm:$0xff] 0.0
          %577 = vst [vmem:[#allocation2 + $0x3c8] sm:$0xff] 0.0
          %578 = vst [vmem:[#allocation2 + $0x3d0] sm:$0xff] 0.0
          %579 = vst [vmem:[#allocation2 + $0x3d8] sm:$0xff] 0.0
          %580 = vst [vmem:[#allocation2 + $0x3e0] sm:$0xff] 0.0
          %581 = vst [vmem:[#allocation2 + $0x3e8] sm:$0xff] 0.0
          %582 = vst [vmem:[#allocation2 + $0x3f0] sm:$0xff] 0.0
          %583 = vst [vmem:[#allocation2 + $0x3f8] sm:$0xff] 0.0
        $region67: #{mlp_forward.1} parent=58 // pred_fallthru
          _
        %v584 = vld [vmem:[%s436] sm:$0xff]
        %v585 = vld [vmem:[%s436 + $0x8] sm:$0xff]
        %v586 = vld [vmem:[%s436 + $0x10] sm:$0xff]
        %v587 = vld [vmem:[%s436 + $0x18] sm:$0xff]
        %v588 = vld [vmem:[%s436 + $0x20] sm:$0xff]
        %v589 = vld [vmem:[%s436 + $0x28] sm:$0xff]
        %v590 = vld [vmem:[%s436 + $0x30] sm:$0xff]
        %v591 = vld [vmem:[%s436 + $0x38] sm:$0xff]
        %v592 = vld [vmem:[%s436 + $0x40] sm:$0xff]
        %v593 = vld [vmem:[%s436 + $0x48] sm:$0xff]
        %v594 = vld [vmem:[%s436 + $0x50] sm:$0xff]
        %v595 = vld [vmem:[%s436 + $0x58] sm:$0xff]
        %v596 = vld [vmem:[%s436 + $0x60] sm:$0xff]
        %v597 = vld [vmem:[%s436 + $0x68] sm:$0xff]
        %v598 = vld [vmem:[%s436 + $0x70] sm:$0xff]
        %v599 = vld [vmem:[%s436 + $0x78] sm:$0xff]
        %v600 = vld [vmem:[%s436 + $0x80] sm:$0xff]
        %v601 = vld [vmem:[%s436 + $0x88] sm:$0xff]
        %v602 = vld [vmem:[%s436 + $0x90] sm:$0xff]
        %v603 = vld [vmem:[%s436 + $0x98] sm:$0xff]
        %v604 = vld [vmem:[%s436 + $0xa0] sm:$0xff]
        %v605 = vld [vmem:[%s436 + $0xa8] sm:$0xff]
        %v606 = vld [vmem:[%s436 + $0xb0] sm:$0xff]
        %v607 = vld [vmem:[%s436 + $0xb8] sm:$0xff]
        %v608 = vld [vmem:[%s436 + $0xc0] sm:$0xff]
        %v609 = vld [vmem:[%s436 + $0xc8] sm:$0xff]
        %v610 = vld [vmem:[%s436 + $0xd0] sm:$0xff]
        %v611 = vld [vmem:[%s436 + $0xd8] sm:$0xff]
        %v612 = vld [vmem:[%s436 + $0xe0] sm:$0xff]
        %v613 = vld [vmem:[%s436 + $0xe8] sm:$0xff]
        %v614 = vld [vmem:[%s436 + $0xf0] sm:$0xff]
        %v615 = vld [vmem:[%s436 + $0xf8] sm:$0xff]
        %v616 = vld [vmem:[%s436 + $0x100] sm:$0xff]
        %v617 = vld [vmem:[%s436 + $0x108] sm:$0xff]
        %v618 = vld [vmem:[%s436 + $0x110] sm:$0xff]
        %v619 = vld [vmem:[%s436 + $0x118] sm:$0xff]
        %v620 = vld [vmem:[%s436 + $0x120] sm:$0xff]
        %v621 = vld [vmem:[%s436 + $0x128] sm:$0xff]
        %v622 = vld [vmem:[%s436 + $0x130] sm:$0xff]
        %v623 = vld [vmem:[%s436 + $0x138] sm:$0xff]
        %v624 = vld [vmem:[%s436 + $0x140] sm:$0xff]
        %v625 = vld [vmem:[%s436 + $0x148] sm:$0xff]
        %v626 = vld [vmem:[%s436 + $0x150] sm:$0xff]
        %v627 = vld [vmem:[%s436 + $0x158] sm:$0xff]
        %v628 = vld [vmem:[%s436 + $0x160] sm:$0xff]
        %v629 = vld [vmem:[%s436 + $0x168] sm:$0xff]
        %v630 = vld [vmem:[%s436 + $0x170] sm:$0xff]
        %v631 = vld [vmem:[%s436 + $0x178] sm:$0xff]
        %v632 = vld [vmem:[%s436 + $0x180] sm:$0xff]
        %v633 = vld [vmem:[%s436 + $0x188] sm:$0xff]
        %v634 = vld [vmem:[%s436 + $0x190] sm:$0xff]
        %v635 = vld [vmem:[%s436 + $0x198] sm:$0xff]
        %v636 = vld [vmem:[%s436 + $0x1a0] sm:$0xff]
        %v637 = vld [vmem:[%s436 + $0x1a8] sm:$0xff]
        %v638 = vld [vmem:[%s436 + $0x1b0] sm:$0xff]
        %v639 = vld [vmem:[%s436 + $0x1b8] sm:$0xff]
        %v640 = vld [vmem:[%s436 + $0x1c0] sm:$0xff]
        %v641 = vld [vmem:[%s436 + $0x1c8] sm:$0xff]
        %v642 = vld [vmem:[%s436 + $0x1d0] sm:$0xff]
        %v643 = vld [vmem:[%s436 + $0x1d8] sm:$0xff]
        %v644 = vld [vmem:[%s436 + $0x1e0] sm:$0xff]
        %v645 = vld [vmem:[%s436 + $0x1e8] sm:$0xff]
        %v646 = vld [vmem:[%s436 + $0x1f0] sm:$0xff]
        %v647 = vld [vmem:[%s436 + $0x1f8] sm:$0xff]
        %v648 = vld [vmem:[%s390] sm:$0xff]
        %v649 = vld [vmem:[%s390 + $0x8] sm:$0xff]
        %v650 = vld [vmem:[%s390 + $0x10] sm:$0xff]
        %v651 = vld [vmem:[%s390 + $0x18] sm:$0xff]
        %v652 = vld [vmem:[%s390 + $0x20] sm:$0xff]
        %v653 = vld [vmem:[%s390 + $0x28] sm:$0xff]
        %v654 = vld [vmem:[%s390 + $0x30] sm:$0xff]
        %v655 = vld [vmem:[%s390 + $0x38] sm:$0xff]
        %v656 = vld [vmem:[%s390 + $0x40] sm:$0xff]
        %v657 = vld [vmem:[%s390 + $0x48] sm:$0xff]
        %v658 = vld [vmem:[%s390 + $0x50] sm:$0xff]
        %v659 = vld [vmem:[%s390 + $0x58] sm:$0xff]
        %v660 = vld [vmem:[%s390 + $0x60] sm:$0xff]
        %v661 = vld [vmem:[%s390 + $0x68] sm:$0xff]
        %v662 = vld [vmem:[%s390 + $0x70] sm:$0xff]
        %v663 = vld [vmem:[%s390 + $0x78] sm:$0xff]
        %v664 = vld [vmem:[%s390 + $0x80] sm:$0xff]
        %v665 = vld [vmem:[%s390 + $0x88] sm:$0xff]
        %v666 = vld [vmem:[%s390 + $0x90] sm:$0xff]
        %v667 = vld [vmem:[%s390 + $0x98] sm:$0xff]
        %v668 = vld [vmem:[%s390 + $0xa0] sm:$0xff]
        %v669 = vld [vmem:[%s390 + $0xa8] sm:$0xff]
        %v670 = vld [vmem:[%s390 + $0xb0] sm:$0xff]
        %v671 = vld [vmem:[%s390 + $0xb8] sm:$0xff]
        %v672 = vld [vmem:[%s390 + $0xc0] sm:$0xff]
        %v673 = vld [vmem:[%s390 + $0xc8] sm:$0xff]
        %v674 = vld [vmem:[%s390 + $0xd0] sm:$0xff]
        %v675 = vld [vmem:[%s390 + $0xd8] sm:$0xff]
        %v676 = vld [vmem:[%s390 + $0xe0] sm:$0xff]
        %v677 = vld [vmem:[%s390 + $0xe8] sm:$0xff]
        %v678 = vld [vmem:[%s390 + $0xf0] sm:$0xff]
        %v679 = vld [vmem:[%s390 + $0xf8] sm:$0xff]
        %v680 = vld [vmem:[%s390 + $0x100] sm:$0xff]
        %v681 = vld [vmem:[%s390 + $0x108] sm:$0xff]
        %v682 = vld [vmem:[%s390 + $0x110] sm:$0xff]
        %v683 = vld [vmem:[%s390 + $0x118] sm:$0xff]
        %v684 = vld [vmem:[%s390 + $0x120] sm:$0xff]
        %v685 = vld [vmem:[%s390 + $0x128] sm:$0xff]
        %v686 = vld [vmem:[%s390 + $0x130] sm:$0xff]
        %v687 = vld [vmem:[%s390 + $0x138] sm:$0xff]
        %v688 = vld [vmem:[%s390 + $0x140] sm:$0xff]
        %v689 = vld [vmem:[%s390 + $0x148] sm:$0xff]
        %v690 = vld [vmem:[%s390 + $0x150] sm:$0xff]
        %v691 = vld [vmem:[%s390 + $0x158] sm:$0xff]
        %v692 = vld [vmem:[%s390 + $0x160] sm:$0xff]
        %v693 = vld [vmem:[%s390 + $0x168] sm:$0xff]
        %v694 = vld [vmem:[%s390 + $0x170] sm:$0xff]
        %v695 = vld [vmem:[%s390 + $0x178] sm:$0xff]
        %v696 = vld [vmem:[%s390 + $0x180] sm:$0xff]
        %v697 = vld [vmem:[%s390 + $0x188] sm:$0xff]
        %v698 = vld [vmem:[%s390 + $0x190] sm:$0xff]
        %v699 = vld [vmem:[%s390 + $0x198] sm:$0xff]
        %v700 = vld [vmem:[%s390 + $0x1a0] sm:$0xff]
        %v701 = vld [vmem:[%s390 + $0x1a8] sm:$0xff]
        %v702 = vld [vmem:[%s390 + $0x1b0] sm:$0xff]
        %v703 = vld [vmem:[%s390 + $0x1b8] sm:$0xff]
        %v704 = vld [vmem:[%s390 + $0x1c0] sm:$0xff]
        %v705 = vld [vmem:[%s390 + $0x1c8] sm:$0xff]
        %v706 = vld [vmem:[%s390 + $0x1d0] sm:$0xff]
        %v707 = vld [vmem:[%s390 + $0x1d8] sm:$0xff]
        %v708 = vld [vmem:[%s390 + $0x1e0] sm:$0xff]
        %v709 = vld [vmem:[%s390 + $0x1e8] sm:$0xff]
        %v710 = vld [vmem:[%s390 + $0x1f0] sm:$0xff]
        %v711 = vld [vmem:[%s390 + $0x1f8] sm:$0xff]
        %v712 = vld [vmem:[%s442] sm:$0xf]
        %v714 = vlaneseq
        %v715 = vshrl.u32 %v714, 7
        %v716 = vsub.s32 0, %v715
        %v717 = vrot.slane %v712, %v716
        %v718 = vlaneseq
        %v719 = vshrl.u32 %v718, 7
        %v720 = vsub.s32 1, %v719
        %v721 = vrot.slane %v712, %v720
        %v722 = vlaneseq
        %v723 = vshrl.u32 %v722, 7
        %v724 = vsub.s32 2, %v723
        %v725 = vrot.slane %v712, %v724
        %v726 = vlaneseq
        %v727 = vshrl.u32 %v726, 7
        %v728 = vsub.s32 3, %v727
        %v729 = vrot.slane %v712, %v728
        %v798 = vunpack.c.l.b16 %v584
        %v799 = vunpack.c.h.b16 %v584
        %v800 = vunpack.c.l.b16 %v585
        %v801 = vunpack.c.h.b16 %v585
        %v802 = vunpack.c.l.b16 %v586
        %v803 = vunpack.c.h.b16 %v586
        %v804 = vunpack.c.l.b16 %v587
        %v805 = vunpack.c.h.b16 %v587
        %v806 = vunpack.c.l.b16 %v588
        %v807 = vunpack.c.h.b16 %v588
        %v808 = vunpack.c.l.b16 %v589
        %v809 = vunpack.c.h.b16 %v589
        %v810 = vunpack.c.l.b16 %v590
        %v811 = vunpack.c.h.b16 %v590
        %v812 = vunpack.c.l.b16 %v591
        %v813 = vunpack.c.h.b16 %v591
        %v814 = vunpack.c.l.b16 %v592
        %v815 = vunpack.c.h.b16 %v592
        %v816 = vunpack.c.l.b16 %v593
        %v817 = vunpack.c.h.b16 %v593
        %v818 = vunpack.c.l.b16 %v594
        %v819 = vunpack.c.h.b16 %v594
        %v820 = vunpack.c.l.b16 %v595
        %v821 = vunpack.c.h.b16 %v595
        %v822 = vunpack.c.l.b16 %v596
        %v823 = vunpack.c.h.b16 %v596
        %v824 = vunpack.c.l.b16 %v597
        %v825 = vunpack.c.h.b16 %v597
        %v826 = vunpack.c.l.b16 %v598
        %v827 = vunpack.c.h.b16 %v598
        %v828 = vunpack.c.l.b16 %v599
        %v829 = vunpack.c.h.b16 %v599
        %v830 = vunpack.c.l.b16 %v600
        %v831 = vunpack.c.h.b16 %v600
        %v832 = vunpack.c.l.b16 %v601
        %v833 = vunpack.c.h.b16 %v601
        %v834 = vunpack.c.l.b16 %v602
        %v835 = vunpack.c.h.b16 %v602
        %v836 = vunpack.c.l.b16 %v603
        %v837 = vunpack.c.h.b16 %v603
        %v838 = vunpack.c.l.b16 %v604
        %v839 = vunpack.c.h.b16 %v604
        %v840 = vunpack.c.l.b16 %v605
        %v841 = vunpack.c.h.b16 %v605
        %v842 = vunpack.c.l.b16 %v606
        %v843 = vunpack.c.h.b16 %v606
        %v844 = vunpack.c.l.b16 %v607
        %v845 = vunpack.c.h.b16 %v607
        %v846 = vunpack.c.l.b16 %v608
        %v847 = vunpack.c.h.b16 %v608
        %v848 = vunpack.c.l.b16 %v609
        %v849 = vunpack.c.h.b16 %v609
        %v850 = vunpack.c.l.b16 %v610
        %v851 = vunpack.c.h.b16 %v610
        %v852 = vunpack.c.l.b16 %v611
        %v853 = vunpack.c.h.b16 %v611
        %v854 = vunpack.c.l.b16 %v612
        %v855 = vunpack.c.h.b16 %v612
        %v856 = vunpack.c.l.b16 %v613
        %v857 = vunpack.c.h.b16 %v613
        %v858 = vunpack.c.l.b16 %v614
        %v859 = vunpack.c.h.b16 %v614
        %v860 = vunpack.c.l.b16 %v615
        %v861 = vunpack.c.h.b16 %v615
        %v862 = vunpack.c.l.b16 %v616
        %v863 = vunpack.c.h.b16 %v616
        %v864 = vunpack.c.l.b16 %v617
        %v865 = vunpack.c.h.b16 %v617
        %v866 = vunpack.c.l.b16 %v618
        %v867 = vunpack.c.h.b16 %v618
        %v868 = vunpack.c.l.b16 %v619
        %v869 = vunpack.c.h.b16 %v619
        %v870 = vunpack.c.l.b16 %v620
        %v871 = vunpack.c.h.b16 %v620
        %v872 = vunpack.c.l.b16 %v621
        %v873 = vunpack.c.h.b16 %v621
        %v874 = vunpack.c.l.b16 %v622
        %v875 = vunpack.c.h.b16 %v622
        %v876 = vunpack.c.l.b16 %v623
        %v877 = vunpack.c.h.b16 %v623
        %v878 = vunpack.c.l.b16 %v624
        %v879 = vunpack.c.h.b16 %v624
        %v880 = vunpack.c.l.b16 %v625
        %v881 = vunpack.c.h.b16 %v625
        %v882 = vunpack.c.l.b16 %v626
        %v883 = vunpack.c.h.b16 %v626
        %v884 = vunpack.c.l.b16 %v627
        %v885 = vunpack.c.h.b16 %v627
        %v886 = vunpack.c.l.b16 %v628
        %v887 = vunpack.c.h.b16 %v628
        %v888 = vunpack.c.l.b16 %v629
        %v889 = vunpack.c.h.b16 %v629
        %v890 = vunpack.c.l.b16 %v630
        %v891 = vunpack.c.h.b16 %v630
        %v892 = vunpack.c.l.b16 %v631
        %v893 = vunpack.c.h.b16 %v631
        %v894 = vunpack.c.l.b16 %v632
        %v895 = vunpack.c.h.b16 %v632
        %v896 = vunpack.c.l.b16 %v633
        %v897 = vunpack.c.h.b16 %v633
        %v898 = vunpack.c.l.b16 %v634
        %v899 = vunpack.c.h.b16 %v634
        %v900 = vunpack.c.l.b16 %v635
        %v901 = vunpack.c.h.b16 %v635
        %v902 = vunpack.c.l.b16 %v636
        %v903 = vunpack.c.h.b16 %v636
        %v904 = vunpack.c.l.b16 %v637
        %v905 = vunpack.c.h.b16 %v637
        %v906 = vunpack.c.l.b16 %v638
        %v907 = vunpack.c.h.b16 %v638
        %v908 = vunpack.c.l.b16 %v639
        %v909 = vunpack.c.h.b16 %v639
        %v910 = vunpack.c.l.b16 %v640
        %v911 = vunpack.c.h.b16 %v640
        %v912 = vunpack.c.l.b16 %v641
        %v913 = vunpack.c.h.b16 %v641
        %v914 = vunpack.c.l.b16 %v642
        %v915 = vunpack.c.h.b16 %v642
        %v916 = vunpack.c.l.b16 %v643
        %v917 = vunpack.c.h.b16 %v643
        %v918 = vunpack.c.l.b16 %v644
        %v919 = vunpack.c.h.b16 %v644
        %v920 = vunpack.c.l.b16 %v645
        %v921 = vunpack.c.h.b16 %v645
        %v922 = vunpack.c.l.b16 %v646
        %v923 = vunpack.c.h.b16 %v646
        %v924 = vunpack.c.l.b16 %v647
        %v925 = vunpack.c.h.b16 %v647
        %v926 = vpack.c.b16 %v800, %v798
        %v927 = vpack.c.b16 %v801, %v799
        %v928 = vpack.c.b16 %v804, %v802
        %v929 = vpack.c.b16 %v805, %v803
        %v930 = vpack.c.b16 %v808, %v806
        %v931 = vpack.c.b16 %v809, %v807
        %v932 = vpack.c.b16 %v812, %v810
        %v933 = vpack.c.b16 %v813, %v811
        %v934 = vpack.c.b16 %v816, %v814
        %v935 = vpack.c.b16 %v817, %v815
        %v936 = vpack.c.b16 %v820, %v818
        %v937 = vpack.c.b16 %v821, %v819
        %v938 = vpack.c.b16 %v824, %v822
        %v939 = vpack.c.b16 %v825, %v823
        %v940 = vpack.c.b16 %v828, %v826
        %v941 = vpack.c.b16 %v829, %v827
        %v942 = vpack.c.b16 %v832, %v830
        %v943 = vpack.c.b16 %v833, %v831
        %v944 = vpack.c.b16 %v836, %v834
        %v945 = vpack.c.b16 %v837, %v835
        %v946 = vpack.c.b16 %v840, %v838
        %v947 = vpack.c.b16 %v841, %v839
        %v948 = vpack.c.b16 %v844, %v842
        %v949 = vpack.c.b16 %v845, %v843
        %v950 = vpack.c.b16 %v848, %v846
        %v951 = vpack.c.b16 %v849, %v847
        %v952 = vpack.c.b16 %v852, %v850
        %v953 = vpack.c.b16 %v853, %v851
        %v954 = vpack.c.b16 %v856, %v854
        %v955 = vpack.c.b16 %v857, %v855
        %v956 = vpack.c.b16 %v860, %v858
        %v957 = vpack.c.b16 %v861, %v859
        %v958 = vpack.c.b16 %v864, %v862
        %v959 = vpack.c.b16 %v865, %v863
        %v960 = vpack.c.b16 %v868, %v866
        %v961 = vpack.c.b16 %v869, %v867
        %v962 = vpack.c.b16 %v872, %v870
        %v963 = vpack.c.b16 %v873, %v871
        %v964 = vpack.c.b16 %v876, %v874
        %v965 = vpack.c.b16 %v877, %v875
        %v966 = vpack.c.b16 %v880, %v878
        %v967 = vpack.c.b16 %v881, %v879
        %v968 = vpack.c.b16 %v884, %v882
        %v969 = vpack.c.b16 %v885, %v883
        %v970 = vpack.c.b16 %v888, %v886
        %v971 = vpack.c.b16 %v889, %v887
        %v972 = vpack.c.b16 %v892, %v890
        %v973 = vpack.c.b16 %v893, %v891
        %v974 = vpack.c.b16 %v896, %v894
        %v975 = vpack.c.b16 %v897, %v895
        %v976 = vpack.c.b16 %v900, %v898
        %v977 = vpack.c.b16 %v901, %v899
        %v978 = vpack.c.b16 %v904, %v902
        %v979 = vpack.c.b16 %v905, %v903
        %v980 = vpack.c.b16 %v908, %v906
        %v981 = vpack.c.b16 %v909, %v907
        %v982 = vpack.c.b16 %v912, %v910
        %v983 = vpack.c.b16 %v913, %v911
        %v984 = vpack.c.b16 %v916, %v914
        %v985 = vpack.c.b16 %v917, %v915
        %v986 = vpack.c.b16 %v920, %v918
        %v987 = vpack.c.b16 %v921, %v919
        %v988 = vpack.c.b16 %v924, %v922
        %v989 = vpack.c.b16 %v925, %v923
        %v1118 = vunpack.c.l.b16 %v648
        %v1119 = vunpack.c.h.b16 %v648
        %v1120 = vunpack.c.l.b16 %v649
        %v1121 = vunpack.c.h.b16 %v649
        %v1122 = vunpack.c.l.b16 %v650
        %v1123 = vunpack.c.h.b16 %v650
        %v1124 = vunpack.c.l.b16 %v651
        %v1125 = vunpack.c.h.b16 %v651
        %v1126 = vunpack.c.l.b16 %v652
        %v1127 = vunpack.c.h.b16 %v652
        %v1128 = vunpack.c.l.b16 %v653
        %v1129 = vunpack.c.h.b16 %v653
        %v1130 = vunpack.c.l.b16 %v654
        %v1131 = vunpack.c.h.b16 %v654
        %v1132 = vunpack.c.l.b16 %v655
        %v1133 = vunpack.c.h.b16 %v655
        %v1134 = vunpack.c.l.b16 %v656
        %v1135 = vunpack.c.h.b16 %v656
        %v1136 = vunpack.c.l.b16 %v657
        %v1137 = vunpack.c.h.b16 %v657
        %v1138 = vunpack.c.l.b16 %v658
        %v1139 = vunpack.c.h.b16 %v658
        %v1140 = vunpack.c.l.b16 %v659
        %v1141 = vunpack.c.h.b16 %v659
        %v1142 = vunpack.c.l.b16 %v660
        %v1143 = vunpack.c.h.b16 %v660
        %v1144 = vunpack.c.l.b16 %v661
        %v1145 = vunpack.c.h.b16 %v661
        %v1146 = vunpack.c.l.b16 %v662
        %v1147 = vunpack.c.h.b16 %v662
        %v1148 = vunpack.c.l.b16 %v663
        %v1149 = vunpack.c.h.b16 %v663
        %v1150 = vunpack.c.l.b16 %v664
        %v1151 = vunpack.c.h.b16 %v664
        %v1152 = vunpack.c.l.b16 %v665
        %v1153 = vunpack.c.h.b16 %v665
        %v1154 = vunpack.c.l.b16 %v666
        %v1155 = vunpack.c.h.b16 %v666
        %v1156 = vunpack.c.l.b16 %v667
        %v1157 = vunpack.c.h.b16 %v667
        %v1158 = vunpack.c.l.b16 %v668
        %v1159 = vunpack.c.h.b16 %v668
        %v1160 = vunpack.c.l.b16 %v669
        %v1161 = vunpack.c.h.b16 %v669
        %v1162 = vunpack.c.l.b16 %v670
        %v1163 = vunpack.c.h.b16 %v670
        %v1164 = vunpack.c.l.b16 %v671
        %v1165 = vunpack.c.h.b16 %v671
        %v1166 = vunpack.c.l.b16 %v672
        %v1167 = vunpack.c.h.b16 %v672
        %v1168 = vunpack.c.l.b16 %v673
        %v1169 = vunpack.c.h.b16 %v673
        %v1170 = vunpack.c.l.b16 %v674
        %v1171 = vunpack.c.h.b16 %v674
        %v1172 = vunpack.c.l.b16 %v675
        %v1173 = vunpack.c.h.b16 %v675
        %v1174 = vunpack.c.l.b16 %v676
        %v1175 = vunpack.c.h.b16 %v676
        %v1176 = vunpack.c.l.b16 %v677
        %v1177 = vunpack.c.h.b16 %v677
        %v1178 = vunpack.c.l.b16 %v678
        %v1179 = vunpack.c.h.b16 %v678
        %v1180 = vunpack.c.l.b16 %v679
        %v1181 = vunpack.c.h.b16 %v679
        %v1182 = vunpack.c.l.b16 %v680
        %v1183 = vunpack.c.h.b16 %v680
        %v1184 = vunpack.c.l.b16 %v681
        %v1185 = vunpack.c.h.b16 %v681
        %v1186 = vunpack.c.l.b16 %v682
        %v1187 = vunpack.c.h.b16 %v682
        %v1188 = vunpack.c.l.b16 %v683
        %v1189 = vunpack.c.h.b16 %v683
        %v1190 = vunpack.c.l.b16 %v684
        %v1191 = vunpack.c.h.b16 %v684
        %v1192 = vunpack.c.l.b16 %v685
        %v1193 = vunpack.c.h.b16 %v685
        %v1194 = vunpack.c.l.b16 %v686
        %v1195 = vunpack.c.h.b16 %v686
        %v1196 = vunpack.c.l.b16 %v687
        %v1197 = vunpack.c.h.b16 %v687
        %v1198 = vunpack.c.l.b16 %v688
        %v1199 = vunpack.c.h.b16 %v688
        %v1200 = vunpack.c.l.b16 %v689
        %v1201 = vunpack.c.h.b16 %v689
        %v1202 = vunpack.c.l.b16 %v690
        %v1203 = vunpack.c.h.b16 %v690
        %v1204 = vunpack.c.l.b16 %v691
        %v1205 = vunpack.c.h.b16 %v691
        %v1206 = vunpack.c.l.b16 %v692
        %v1207 = vunpack.c.h.b16 %v692
        %v1208 = vunpack.c.l.b16 %v693
        %v1209 = vunpack.c.h.b16 %v693
        %v1210 = vunpack.c.l.b16 %v694
        %v1211 = vunpack.c.h.b16 %v694
        %v1212 = vunpack.c.l.b16 %v695
        %v1213 = vunpack.c.h.b16 %v695
        %v1214 = vunpack.c.l.b16 %v696
        %v1215 = vunpack.c.h.b16 %v696
        %v1216 = vunpack.c.l.b16 %v697
        %v1217 = vunpack.c.h.b16 %v697
        %v1218 = vunpack.c.l.b16 %v698
        %v1219 = vunpack.c.h.b16 %v698
        %v1220 = vunpack.c.l.b16 %v699
        %v1221 = vunpack.c.h.b16 %v699
        %v1222 = vunpack.c.l.b16 %v700
        %v1223 = vunpack.c.h.b16 %v700
        %v1224 = vunpack.c.l.b16 %v701
        %v1225 = vunpack.c.h.b16 %v701
        %v1226 = vunpack.c.l.b16 %v702
        %v1227 = vunpack.c.h.b16 %v702
        %v1228 = vunpack.c.l.b16 %v703
        %v1229 = vunpack.c.h.b16 %v703
        %v1230 = vunpack.c.l.b16 %v704
        %v1231 = vunpack.c.h.b16 %v704
        %v1232 = vunpack.c.l.b16 %v705
        %v1233 = vunpack.c.h.b16 %v705
        %v1234 = vunpack.c.l.b16 %v706
        %v1235 = vunpack.c.h.b16 %v706
        %v1236 = vunpack.c.l.b16 %v707
        %v1237 = vunpack.c.h.b16 %v707
        %v1238 = vunpack.c.l.b16 %v708
        %v1239 = vunpack.c.h.b16 %v708
        %v1240 = vunpack.c.l.b16 %v709
        %v1241 = vunpack.c.h.b16 %v709
        %v1242 = vunpack.c.l.b16 %v710
        %v1243 = vunpack.c.h.b16 %v710
        %v1244 = vunpack.c.l.b16 %v711
        %v1245 = vunpack.c.h.b16 %v711
        %v1246 = vpack.c.b16 %v1122, %v1118
        %v1247 = vpack.c.b16 %v1123, %v1119
        %v1248 = vpack.c.b16 %v1124, %v1120
        %v1249 = vpack.c.b16 %v1125, %v1121
        %v1250 = vpack.c.b16 %v1130, %v1126
        %v1251 = vpack.c.b16 %v1131, %v1127
        %v1252 = vpack.c.b16 %v1132, %v1128
        %v1253 = vpack.c.b16 %v1133, %v1129
        %v1254 = vpack.c.b16 %v1138, %v1134
        %v1255 = vpack.c.b16 %v1139, %v1135
        %v1256 = vpack.c.b16 %v1140, %v1136
        %v1257 = vpack.c.b16 %v1141, %v1137
        %v1258 = vpack.c.b16 %v1146, %v1142
        %v1259 = vpack.c.b16 %v1147, %v1143
        %v1260 = vpack.c.b16 %v1148, %v1144
        %v1261 = vpack.c.b16 %v1149, %v1145
        %v1262 = vpack.c.b16 %v1154, %v1150
        %v1263 = vpack.c.b16 %v1155, %v1151
        %v1264 = vpack.c.b16 %v1156, %v1152
        %v1265 = vpack.c.b16 %v1157, %v1153
        %v1266 = vpack.c.b16 %v1162, %v1158
        %v1267 = vpack.c.b16 %v1163, %v1159
        %v1268 = vpack.c.b16 %v1164, %v1160
        %v1269 = vpack.c.b16 %v1165, %v1161
        %v1270 = vpack.c.b16 %v1170, %v1166
        %v1271 = vpack.c.b16 %v1171, %v1167
        %v1272 = vpack.c.b16 %v1172, %v1168
        %v1273 = vpack.c.b16 %v1173, %v1169
        %v1274 = vpack.c.b16 %v1178, %v1174
        %v1275 = vpack.c.b16 %v1179, %v1175
        %v1276 = vpack.c.b16 %v1180, %v1176
        %v1277 = vpack.c.b16 %v1181, %v1177
        %v1278 = vpack.c.b16 %v1186, %v1182
        %v1279 = vpack.c.b16 %v1187, %v1183
        %v1280 = vpack.c.b16 %v1188, %v1184
        %v1281 = vpack.c.b16 %v1189, %v1185
        %v1282 = vpack.c.b16 %v1194, %v1190
        %v1283 = vpack.c.b16 %v1195, %v1191
        %v1284 = vpack.c.b16 %v1196, %v1192
        %v1285 = vpack.c.b16 %v1197, %v1193
        %v1286 = vpack.c.b16 %v1202, %v1198
        %v1287 = vpack.c.b16 %v1203, %v1199
        %v1288 = vpack.c.b16 %v1204, %v1200
        %v1289 = vpack.c.b16 %v1205, %v1201
        %v1290 = vpack.c.b16 %v1210, %v1206
        %v1291 = vpack.c.b16 %v1211, %v1207
        %v1292 = vpack.c.b16 %v1212, %v1208
        %v1293 = vpack.c.b16 %v1213, %v1209
        %v1294 = vpack.c.b16 %v1218, %v1214
        %v1295 = vpack.c.b16 %v1219, %v1215
        %v1296 = vpack.c.b16 %v1220, %v1216
        %v1297 = vpack.c.b16 %v1221, %v1217
        %v1298 = vpack.c.b16 %v1226, %v1222
        %v1299 = vpack.c.b16 %v1227, %v1223
        %v1300 = vpack.c.b16 %v1228, %v1224
        %v1301 = vpack.c.b16 %v1229, %v1225
        %v1302 = vpack.c.b16 %v1234, %v1230
        %v1303 = vpack.c.b16 %v1235, %v1231
        %v1304 = vpack.c.b16 %v1236, %v1232
        %v1305 = vpack.c.b16 %v1237, %v1233
        %v1306 = vpack.c.b16 %v1242, %v1238
        %v1307 = vpack.c.b16 %v1243, %v1239
        %v1308 = vpack.c.b16 %v1244, %v1240
        %v1309 = vpack.c.b16 %v1245, %v1241
        %1374 = vmatprep.subr.bf16.mxu0 %v1247
        %1375 = vmatpush1.bf16.msra.mxu0 %v1246
        %1376 = vmatprep.subr.bf16.mxu0 %v1251
        %1377 = vmatpush1.bf16.msra.mxu0 %v1250
        %1378 = vmatprep.subr.bf16.mxu0 %v1255
        %1379 = vmatpush1.bf16.msra.mxu0 %v1254
        %1380 = vmatprep.subr.bf16.mxu0 %v1259
        %1381 = vmatpush1.bf16.msra.mxu0 %v1258
        %1382 = vmatprep.subr.bf16.mxu0 %v1263
        %1383 = vmatpush1.bf16.msra.mxu0 %v1262
        %1384 = vmatprep.subr.bf16.mxu0 %v1267
        %1385 = vmatpush1.bf16.msra.mxu0 %v1266
        %1386 = vmatprep.subr.bf16.mxu0 %v1271
        %1387 = vmatpush1.bf16.msra.mxu0 %v1270
        %1388 = vmatprep.subr.bf16.mxu0 %v1275
        %1389 = vmatpush1.bf16.msra.mxu0 %v1274
        %1390 = vmatprep.subr.bf16.mxu0 %v1279
        %1391 = vmatpush1.bf16.msra.mxu0 %v1278
        %1392 = vmatprep.subr.bf16.mxu0 %v1283
        %1393 = vmatpush1.bf16.msra.mxu0 %v1282
        %1394 = vmatprep.subr.bf16.mxu0 %v1287
        %1395 = vmatpush1.bf16.msra.mxu0 %v1286
        %1396 = vmatprep.subr.bf16.mxu0 %v1291
        %1397 = vmatpush1.bf16.msra.mxu0 %v1290
        %1398 = vmatprep.subr.bf16.mxu0 %v1295
        %1399 = vmatpush1.bf16.msra.mxu0 %v1294
        %1400 = vmatprep.subr.bf16.mxu0 %v1299
        %1401 = vmatpush1.bf16.msra.mxu0 %v1298
        %1402 = vmatprep.subr.bf16.mxu0 %v1303
        %1403 = vmatpush1.bf16.msra.mxu0 %v1302
        %1404 = vmatprep.subr.bf16.mxu0 %v1307
        %1405 = vmatpush1.bf16.msra.mxu0 %v1306
        %1406 = vmatprep.mubr.bf16.mxu0 %v927
        %1407 = vmatmul.mubr.bf16.gmra.mrb[0].mxu0 %v926
        %v1408 = vpop.f32.mrb[0].mxu0
        %v1409 = vadd.f32 %v717, %v1408
        %v1410 = vpop.f32.mrb[0].mxu0
        %v1411 = vadd.f32 %v721, %v1410
        %v1412 = vpop.f32.mrb[0].mxu0
        %v1413 = vadd.f32 %v717, %v1412
        %v1414 = vpop.f32.mrb[0].mxu0
        %v1415 = vadd.f32 %v721, %v1414
        %1416 = vmatprep.mubr.bf16.mxu0 %v929
        %1417 = vmatmul.mubr.bf16.gmra.mrb[0].mxu0 %v928
        %v1418 = vpop.f32.mrb[0].mxu0
        %v1419 = vadd.f32 %v717, %v1418
        %v1420 = vpop.f32.mrb[0].mxu0
        %v1421 = vadd.f32 %v721, %v1420
        %v1422 = vpop.f32.mrb[0].mxu0
        %v1423 = vadd.f32 %v717, %v1422
        %v1424 = vpop.f32.mrb[0].mxu0
        %v1425 = vadd.f32 %v721, %v1424
        %1426 = vmatprep.mubr.bf16.mxu0 %v931
        %1427 = vmatmul.mubr.bf16.gmra.mrb[0].mxu0 %v930
        %v1428 = vpop.f32.mrb[0].mxu0
        %v1429 = vadd.f32 %v717, %v1428
        %v1430 = vpop.f32.mrb[0].mxu0
        %v1431 = vadd.f32 %v721, %v1430
        %v1432 = vpop.f32.mrb[0].mxu0
        %v1433 = vadd.f32 %v717, %v1432
        %v1434 = vpop.f32.mrb[0].mxu0
        %v1435 = vadd.f32 %v721, %v1434
        %1436 = vmatprep.mubr.bf16.mxu0 %v933
        %1437 = vmatmul.mubr.bf16.gmra.mrb[0].mxu0 %v932
        %v1438 = vpop.f32.mrb[0].mxu0
        %v1439 = vadd.f32 %v717, %v1438
        %v1440 = vpop.f32.mrb[0].mxu0
        %v1441 = vadd.f32 %v721, %v1440
        %v1442 = vpop.f32.mrb[0].mxu0
        %v1443 = vadd.f32 %v717, %v1442
        %v1444 = vpop.f32.mrb[0].mxu0
        %v1445 = vadd.f32 %v721, %v1444
        %1446 = vmatprep.mubr.bf16.mxu0 %v935
        %1447 = vmatmul.mubr.bf16.gmra.mrb[0].mxu0 %v934
        %v1448 = vpop.f32.mrb[0].mxu0
        %v1449 = vadd.f32 %v717, %v1448
        %v1450 = vpop.f32.mrb[0].mxu0
        %v1451 = vadd.f32 %v721, %v1450
        %v1452 = vpop.f32.mrb[0].mxu0
        %v1453 = vadd.f32 %v717, %v1452
        %v1454 = vpop.f32.mrb[0].mxu0
        %v1455 = vadd.f32 %v721, %v1454
        %1456 = vmatprep.mubr.bf16.mxu0 %v937
        %1457 = vmatmul.mubr.bf16.gmra.mrb[0].mxu0 %v936
        %v1458 = vpop.f32.mrb[0].mxu0
        %v1459 = vadd.f32 %v717, %v1458
        %v1460 = vpop.f32.mrb[0].mxu0
        %v1461 = vadd.f32 %v721, %v1460
        %v1462 = vpop.f32.mrb[0].mxu0
        %v1463 = vadd.f32 %v717, %v1462
        %v1464 = vpop.f32.mrb[0].mxu0
        %v1465 = vadd.f32 %v721, %v1464
        %1466 = vmatprep.mubr.bf16.mxu0 %v939
        %1467 = vmatmul.mubr.bf16.gmra.mrb[0].mxu0 %v938
        %v1468 = vpop.f32.mrb[0].mxu0
        %v1469 = vadd.f32 %v717, %v1468
        %v1470 = vpop.f32.mrb[0].mxu0
        %v1471 = vadd.f32 %v721, %v1470
        %v1472 = vpop.f32.mrb[0].mxu0
        %v1473 = vadd.f32 %v717, %v1472
        %v1474 = vpop.f32.mrb[0].mxu0
        %v1475 = vadd.f32 %v721, %v1474
        %1476 = vmatprep.mubr.bf16.mxu0 %v941
        %1477 = vmatmul.mubr.bf16.gmra.mrb[0].mxu0 %v940
        %v1478 = vpop.f32.mrb[0].mxu0
        %v1479 = vadd.f32 %v717, %v1478
        %v1480 = vpop.f32.mrb[0].mxu0
        %v1481 = vadd.f32 %v721, %v1480
        %v1482 = vpop.f32.mrb[0].mxu0
        %v1483 = vadd.f32 %v717, %v1482
        %v1484 = vpop.f32.mrb[0].mxu0
        %v1485 = vadd.f32 %v721, %v1484
        %1486 = vmatprep.mubr.bf16.mxu0 %v943
        %1487 = vmatmul.mubr.bf16.gmra.mrb[0].mxu0 %v942
        %v1488 = vpop.f32.mrb[0].mxu0
        %v1489 = vadd.f32 %v717, %v1488
        %v1490 = vpop.f32.mrb[0].mxu0
        %v1491 = vadd.f32 %v721, %v1490
        %v1492 = vpop.f32.mrb[0].mxu0
        %v1493 = vadd.f32 %v717, %v1492
        %v1494 = vpop.f32.mrb[0].mxu0
        %v1495 = vadd.f32 %v721, %v1494
        %1496 = vmatprep.mubr.bf16.mxu0 %v945
        %1497 = vmatmul.mubr.bf16.gmra.mrb[0].mxu0 %v944
        %v1498 = vpop.f32.mrb[0].mxu0
        %v1499 = vadd.f32 %v717, %v1498
        %v1500 = vpop.f32.mrb[0].mxu0
        %v1501 = vadd.f32 %v721, %v1500
        %v1502 = vpop.f32.mrb[0].mxu0
        %v1503 = vadd.f32 %v717, %v1502
        %v1504 = vpop.f32.mrb[0].mxu0
        %v1505 = vadd.f32 %v721, %v1504
        %1506 = vmatprep.mubr.bf16.mxu0 %v947
        %1507 = vmatmul.mubr.bf16.gmra.mrb[0].mxu0 %v946
        %v1508 = vpop.f32.mrb[0].mxu0
        %v1509 = vadd.f32 %v717, %v1508
        %v1510 = vpop.f32.mrb[0].mxu0
        %v1511 = vadd.f32 %v721, %v1510
        %v1512 = vpop.f32.mrb[0].mxu0
        %v1513 = vadd.f32 %v717, %v1512
        %v1514 = vpop.f32.mrb[0].mxu0
        %v1515 = vadd.f32 %v721, %v1514
        %1516 = vmatprep.mubr.bf16.mxu0 %v949
        %1517 = vmatmul.mubr.bf16.gmra.mrb[0].mxu0 %v948
        %v1518 = vpop.f32.mrb[0].mxu0
        %v1519 = vadd.f32 %v717, %v1518
        %v1520 = vpop.f32.mrb[0].mxu0
        %v1521 = vadd.f32 %v721, %v1520
        %v1522 = vpop.f32.mrb[0].mxu0
        %v1523 = vadd.f32 %v717, %v1522
        %v1524 = vpop.f32.mrb[0].mxu0
        %v1525 = vadd.f32 %v721, %v1524
        %1526 = vmatprep.mubr.bf16.mxu0 %v951
        %1527 = vmatmul.mubr.bf16.gmra.mrb[0].mxu0 %v950
        %v1528 = vpop.f32.mrb[0].mxu0
        %v1529 = vadd.f32 %v717, %v1528
        %v1530 = vpop.f32.mrb[0].mxu0
        %v1531 = vadd.f32 %v721, %v1530
        %v1532 = vpop.f32.mrb[0].mxu0
        %v1533 = vadd.f32 %v717, %v1532
        %v1534 = vpop.f32.mrb[0].mxu0
        %v1535 = vadd.f32 %v721, %v1534
        %1536 = vmatprep.mubr.bf16.mxu0 %v953
        %1537 = vmatmul.mubr.bf16.gmra.mrb[0].mxu0 %v952
        %v1538 = vpop.f32.mrb[0].mxu0
        %v1539 = vadd.f32 %v717, %v1538
        %v1540 = vpop.f32.mrb[0].mxu0
        %v1541 = vadd.f32 %v721, %v1540
        %v1542 = vpop.f32.mrb[0].mxu0
        %v1543 = vadd.f32 %v717, %v1542
        %v1544 = vpop.f32.mrb[0].mxu0
        %v1545 = vadd.f32 %v721, %v1544
        %1546 = vmatprep.mubr.bf16.mxu0 %v955
        %1547 = vmatmul.mubr.bf16.gmra.mrb[0].mxu0 %v954
        %v1548 = vpop.f32.mrb[0].mxu0
        %v1549 = vadd.f32 %v717, %v1548
        %v1550 = vpop.f32.mrb[0].mxu0
        %v1551 = vadd.f32 %v721, %v1550
        %v1552 = vpop.f32.mrb[0].mxu0
        %v1553 = vadd.f32 %v717, %v1552
        %v1554 = vpop.f32.mrb[0].mxu0
        %v1555 = vadd.f32 %v721, %v1554
        %1556 = vmatprep.mubr.bf16.mxu0 %v957
        %1557 = vmatmul.mubr.bf16.gmra.mrb[0].mxu0 %v956
        %v1558 = vpop.f32.mrb[0].mxu0
        %v1559 = vadd.f32 %v717, %v1558
        %v1560 = vpop.f32.mrb[0].mxu0
        %v1561 = vadd.f32 %v721, %v1560
        %v1562 = vpop.f32.mrb[0].mxu0
        %v1563 = vadd.f32 %v717, %v1562
        %v1564 = vpop.f32.mrb[0].mxu0
        %v1565 = vadd.f32 %v721, %v1564
        %1566 = vmatprep.mubr.bf16.mxu0 %v959
        %1567 = vmatmul.mubr.bf16.gmra.mrb[0].mxu0 %v958
        %v1568 = vpop.f32.mrb[0].mxu0
        %v1569 = vadd.f32 %v717, %v1568
        %v1570 = vpop.f32.mrb[0].mxu0
        %v1571 = vadd.f32 %v721, %v1570
        %v1572 = vpop.f32.mrb[0].mxu0
        %v1573 = vadd.f32 %v717, %v1572
        %v1574 = vpop.f32.mrb[0].mxu0
        %v1575 = vadd.f32 %v721, %v1574
        %1576 = vmatprep.mubr.bf16.mxu0 %v961
        %1577 = vmatmul.mubr.bf16.gmra.mrb[0].mxu0 %v960
        %v1578 = vpop.f32.mrb[0].mxu0
        %v1579 = vadd.f32 %v717, %v1578
        %v1580 = vpop.f32.mrb[0].mxu0
        %v1581 = vadd.f32 %v721, %v1580
        %v1582 = vpop.f32.mrb[0].mxu0
        %v1583 = vadd.f32 %v717, %v1582
        %v1584 = vpop.f32.mrb[0].mxu0
        %v1585 = vadd.f32 %v721, %v1584
        %1586 = vmatprep.mubr.bf16.mxu0 %v963
        %1587 = vmatmul.mubr.bf16.gmra.mrb[0].mxu0 %v962
        %v1588 = vpop.f32.mrb[0].mxu0
        %v1589 = vadd.f32 %v717, %v1588
        %v1590 = vpop.f32.mrb[0].mxu0
        %v1591 = vadd.f32 %v721, %v1590
        %v1592 = vpop.f32.mrb[0].mxu0
        %v1593 = vadd.f32 %v717, %v1592
        %v1594 = vpop.f32.mrb[0].mxu0
        %v1595 = vadd.f32 %v721, %v1594
        %1596 = vmatprep.mubr.bf16.mxu0 %v965
        %1597 = vmatmul.mubr.bf16.gmra.mrb[0].mxu0 %v964
        %v1598 = vpop.f32.mrb[0].mxu0
        %v1599 = vadd.f32 %v717, %v1598
        %v1600 = vpop.f32.mrb[0].mxu0
        %v1601 = vadd.f32 %v721, %v1600
        %v1602 = vpop.f32.mrb[0].mxu0
        %v1603 = vadd.f32 %v717, %v1602
        %v1604 = vpop.f32.mrb[0].mxu0
        %v1605 = vadd.f32 %v721, %v1604
        %1606 = vmatprep.mubr.bf16.mxu0 %v967
        %1607 = vmatmul.mubr.bf16.gmra.mrb[0].mxu0 %v966
        %v1608 = vpop.f32.mrb[0].mxu0
        %v1609 = vadd.f32 %v717, %v1608
        %v1610 = vpop.f32.mrb[0].mxu0
        %v1611 = vadd.f32 %v721, %v1610
        %v1612 = vpop.f32.mrb[0].mxu0
        %v1613 = vadd.f32 %v717, %v1612
        %v1614 = vpop.f32.mrb[0].mxu0
        %v1615 = vadd.f32 %v721, %v1614
        %1616 = vmatprep.mubr.bf16.mxu0 %v969
        %1617 = vmatmul.mubr.bf16.gmra.mrb[0].mxu0 %v968
        %v1618 = vpop.f32.mrb[0].mxu0
        %v1619 = vadd.f32 %v717, %v1618
        %v1620 = vpop.f32.mrb[0].mxu0
        %v1621 = vadd.f32 %v721, %v1620
        %v1622 = vpop.f32.mrb[0].mxu0
        %v1623 = vadd.f32 %v717, %v1622
        %v1624 = vpop.f32.mrb[0].mxu0
        %v1625 = vadd.f32 %v721, %v1624
        %1626 = vmatprep.mubr.bf16.mxu0 %v971
        %1627 = vmatmul.mubr.bf16.gmra.mrb[0].mxu0 %v970
        %v1628 = vpop.f32.mrb[0].mxu0
        %v1629 = vadd.f32 %v717, %v1628
        %v1630 = vpop.f32.mrb[0].mxu0
        %v1631 = vadd.f32 %v721, %v1630
        %v1632 = vpop.f32.mrb[0].mxu0
        %v1633 = vadd.f32 %v717, %v1632
        %v1634 = vpop.f32.mrb[0].mxu0
        %v1635 = vadd.f32 %v721, %v1634
        %1636 = vmatprep.mubr.bf16.mxu0 %v973
        %1637 = vmatmul.mubr.bf16.gmra.mrb[0].mxu0 %v972
        %v1638 = vpop.f32.mrb[0].mxu0
        %v1639 = vadd.f32 %v717, %v1638
        %v1640 = vpop.f32.mrb[0].mxu0
        %v1641 = vadd.f32 %v721, %v1640
        %v1642 = vpop.f32.mrb[0].mxu0
        %v1643 = vadd.f32 %v717, %v1642
        %v1644 = vpop.f32.mrb[0].mxu0
        %v1645 = vadd.f32 %v721, %v1644
        %1646 = vmatprep.mubr.bf16.mxu0 %v975
        %1647 = vmatmul.mubr.bf16.gmra.mrb[0].mxu0 %v974
        %v1648 = vpop.f32.mrb[0].mxu0
        %v1649 = vadd.f32 %v717, %v1648
        %v1650 = vpop.f32.mrb[0].mxu0
        %v1651 = vadd.f32 %v721, %v1650
        %v1652 = vpop.f32.mrb[0].mxu0
        %v1653 = vadd.f32 %v717, %v1652
        %v1654 = vpop.f32.mrb[0].mxu0
        %v1655 = vadd.f32 %v721, %v1654
        %1656 = vmatprep.mubr.bf16.mxu0 %v977
        %1657 = vmatmul.mubr.bf16.gmra.mrb[0].mxu0 %v976
        %v1658 = vpop.f32.mrb[0].mxu0
        %v1659 = vadd.f32 %v717, %v1658
        %v1660 = vpop.f32.mrb[0].mxu0
        %v1661 = vadd.f32 %v721, %v1660
        %v1662 = vpop.f32.mrb[0].mxu0
        %v1663 = vadd.f32 %v717, %v1662
        %v1664 = vpop.f32.mrb[0].mxu0
        %v1665 = vadd.f32 %v721, %v1664
        %1666 = vmatprep.mubr.bf16.mxu0 %v979
        %1667 = vmatmul.mubr.bf16.gmra.mrb[0].mxu0 %v978
        %v1668 = vpop.f32.mrb[0].mxu0
        %v1669 = vadd.f32 %v717, %v1668
        %v1670 = vpop.f32.mrb[0].mxu0
        %v1671 = vadd.f32 %v721, %v1670
        %v1672 = vpop.f32.mrb[0].mxu0
        %v1673 = vadd.f32 %v717, %v1672
        %v1674 = vpop.f32.mrb[0].mxu0
        %v1675 = vadd.f32 %v721, %v1674
        %1676 = vmatprep.mubr.bf16.mxu0 %v981
        %1677 = vmatmul.mubr.bf16.gmra.mrb[0].mxu0 %v980
        %v1678 = vpop.f32.mrb[0].mxu0
        %v1679 = vadd.f32 %v717, %v1678
        %v1680 = vpop.f32.mrb[0].mxu0
        %v1681 = vadd.f32 %v721, %v1680
        %v1682 = vpop.f32.mrb[0].mxu0
        %v1683 = vadd.f32 %v717, %v1682
        %v1684 = vpop.f32.mrb[0].mxu0
        %v1685 = vadd.f32 %v721, %v1684
        %1686 = vmatprep.mubr.bf16.mxu0 %v983
        %1687 = vmatmul.mubr.bf16.gmra.mrb[0].mxu0 %v982
        %v1688 = vpop.f32.mrb[0].mxu0
        %v1689 = vadd.f32 %v717, %v1688
        %v1690 = vpop.f32.mrb[0].mxu0
        %v1691 = vadd.f32 %v721, %v1690
        %v1692 = vpop.f32.mrb[0].mxu0
        %v1693 = vadd.f32 %v717, %v1692
        %v1694 = vpop.f32.mrb[0].mxu0
        %v1695 = vadd.f32 %v721, %v1694
        %1696 = vmatprep.mubr.bf16.mxu0 %v985
        %1697 = vmatmul.mubr.bf16.gmra.mrb[0].mxu0 %v984
        %v1698 = vpop.f32.mrb[0].mxu0
        %v1699 = vadd.f32 %v717, %v1698
        %v1700 = vpop.f32.mrb[0].mxu0
        %v1701 = vadd.f32 %v721, %v1700
        %v1702 = vpop.f32.mrb[0].mxu0
        %v1703 = vadd.f32 %v717, %v1702
        %v1704 = vpop.f32.mrb[0].mxu0
        %v1705 = vadd.f32 %v721, %v1704
        %1706 = vmatprep.mubr.bf16.mxu0 %v987
        %1707 = vmatmul.mubr.bf16.gmra.mrb[0].mxu0 %v986
        %v1708 = vpop.f32.mrb[0].mxu0
        %v1709 = vadd.f32 %v717, %v1708
        %v1710 = vpop.f32.mrb[0].mxu0
        %v1711 = vadd.f32 %v721, %v1710
        %v1712 = vpop.f32.mrb[0].mxu0
        %v1713 = vadd.f32 %v717, %v1712
        %v1714 = vpop.f32.mrb[0].mxu0
        %v1715 = vadd.f32 %v721, %v1714
        %1716 = vmatprep.mubr.bf16.mxu0 %v989
        %1717 = vmatmul.mubr.bf16.gmra.mrb[0].mxu0 %v988
        %v1718 = vpop.f32.mrb[0].mxu0
        %v1719 = vadd.f32 %v717, %v1718
        %v1720 = vpop.f32.mrb[0].mxu0
        %v1721 = vadd.f32 %v721, %v1720
        %v1722 = vpop.f32.mrb[0].mxu0
        %v1723 = vadd.f32 %v717, %v1722
        %v1724 = vpop.f32.mrb[0].mxu0
        %v1725 = vadd.f32 %v721, %v1724
        %1726 = vdwg.mxu0
        %1727 = vmatprep.subr.bf16.mxu0 %v1249
        %1728 = vmatpush1.bf16.msra.mxu0 %v1248
        %1729 = vmatprep.subr.bf16.mxu0 %v1253
        %1730 = vmatpush1.bf16.msra.mxu0 %v1252
        %1731 = vmatprep.subr.bf16.mxu0 %v1257
        %1732 = vmatpush1.bf16.msra.mxu0 %v1256
        %1733 = vmatprep.subr.bf16.mxu0 %v1261
        %1734 = vmatpush1.bf16.msra.mxu0 %v1260
        %1735 = vmatprep.subr.bf16.mxu0 %v1265
        %1736 = vmatpush1.bf16.msra.mxu0 %v1264
        %1737 = vmatprep.subr.bf16.mxu0 %v1269
        %1738 = vmatpush1.bf16.msra.mxu0 %v1268
        %1739 = vmatprep.subr.bf16.mxu0 %v1273
        %1740 = vmatpush1.bf16.msra.mxu0 %v1272
        %1741 = vmatprep.subr.bf16.mxu0 %v1277
        %1742 = vmatpush1.bf16.msra.mxu0 %v1276
        %1743 = vmatprep.subr.bf16.mxu0 %v1281
        %1744 = vmatpush1.bf16.msra.mxu0 %v1280
        %1745 = vmatprep.subr.bf16.mxu0 %v1285
        %1746 = vmatpush1.bf16.msra.mxu0 %v1284
        %1747 = vmatprep.subr.bf16.mxu0 %v1289
        %1748 = vmatpush1.bf16.msra.mxu0 %v1288
        %1749 = vmatprep.subr.bf16.mxu0 %v1293
        %1750 = vmatpush1.bf16.msra.mxu0 %v1292
        %1751 = vmatprep.subr.bf16.mxu0 %v1297
        %1752 = vmatpush1.bf16.msra.mxu0 %v1296
        %1753 = vmatprep.subr.bf16.mxu0 %v1301
        %1754 = vmatpush1.bf16.msra.mxu0 %v1300
        %1755 = vmatprep.subr.bf16.mxu0 %v1305
        %1756 = vmatpush1.bf16.msra.mxu0 %v1304
        %1757 = vmatprep.subr.bf16.mxu0 %v1309
        %1758 = vmatpush1.bf16.msra.mxu0 %v1308
        %1759 = vmatprep.mubr.bf16.mxu0 %v927
        %1760 = vmatmul.mubr.bf16.gmra.mrb[0].mxu0 %v926
        %v1761 = vpop.f32.mrb[0].mxu0
        %v1762 = vadd.f32 %v725, %v1761
        %v1763 = vpop.f32.mrb[0].mxu0
        %v1764 = vadd.f32 %v729, %v1763
        %v1765 = vpop.f32.mrb[0].mxu0
        %v1766 = vadd.f32 %v725, %v1765
        %v1767 = vpop.f32.mrb[0].mxu0
        %v1768 = vadd.f32 %v729, %v1767
        %1769 = vmatprep.mubr.bf16.mxu0 %v929
        %1770 = vmatmul.mubr.bf16.gmra.mrb[0].mxu0 %v928
        %v1771 = vpop.f32.mrb[0].mxu0
        %v1772 = vadd.f32 %v725, %v1771
        %v1773 = vpop.f32.mrb[0].mxu0
        %v1774 = vadd.f32 %v729, %v1773
        %v1775 = vpop.f32.mrb[0].mxu0
        %v1776 = vadd.f32 %v725, %v1775
        %v1777 = vpop.f32.mrb[0].mxu0
        %v1778 = vadd.f32 %v729, %v1777
        %1779 = vmatprep.mubr.bf16.mxu0 %v931
        %1780 = vmatmul.mubr.bf16.gmra.mrb[0].mxu0 %v930
        %v1781 = vpop.f32.mrb[0].mxu0
        %v1782 = vadd.f32 %v725, %v1781
        %v1783 = vpop.f32.mrb[0].mxu0
        %v1784 = vadd.f32 %v729, %v1783
        %v1785 = vpop.f32.mrb[0].mxu0
        %v1786 = vadd.f32 %v725, %v1785
        %v1787 = vpop.f32.mrb[0].mxu0
        %v1788 = vadd.f32 %v729, %v1787
        %1789 = vmatprep.mubr.bf16.mxu0 %v933
        %1790 = vmatmul.mubr.bf16.gmra.mrb[0].mxu0 %v932
        %v1791 = vpop.f32.mrb[0].mxu0
        %v1792 = vadd.f32 %v725, %v1791
        %v1793 = vpop.f32.mrb[0].mxu0
        %v1794 = vadd.f32 %v729, %v1793
        %v1795 = vpop.f32.mrb[0].mxu0
        %v1796 = vadd.f32 %v725, %v1795
        %v1797 = vpop.f32.mrb[0].mxu0
        %v1798 = vadd.f32 %v729, %v1797
        %1799 = vmatprep.mubr.bf16.mxu0 %v935
        %1800 = vmatmul.mubr.bf16.gmra.mrb[0].mxu0 %v934
        %v1801 = vpop.f32.mrb[0].mxu0
        %v1802 = vadd.f32 %v725, %v1801
        %v1803 = vpop.f32.mrb[0].mxu0
        %v1804 = vadd.f32 %v729, %v1803
        %v1805 = vpop.f32.mrb[0].mxu0
        %v1806 = vadd.f32 %v725, %v1805
        %v1807 = vpop.f32.mrb[0].mxu0
        %v1808 = vadd.f32 %v729, %v1807
        %1809 = vmatprep.mubr.bf16.mxu0 %v937
        %1810 = vmatmul.mubr.bf16.gmra.mrb[0].mxu0 %v936
        %v1811 = vpop.f32.mrb[0].mxu0
        %v1812 = vadd.f32 %v725, %v1811
        %v1813 = vpop.f32.mrb[0].mxu0
        %v1814 = vadd.f32 %v729, %v1813
        %v1815 = vpop.f32.mrb[0].mxu0
        %v1816 = vadd.f32 %v725, %v1815
        %v1817 = vpop.f32.mrb[0].mxu0
        %v1818 = vadd.f32 %v729, %v1817
        %1819 = vmatprep.mubr.bf16.mxu0 %v939
        %1820 = vmatmul.mubr.bf16.gmra.mrb[0].mxu0 %v938
        %v1821 = vpop.f32.mrb[0].mxu0
        %v1822 = vadd.f32 %v725, %v1821
        %v1823 = vpop.f32.mrb[0].mxu0
        %v1824 = vadd.f32 %v729, %v1823
        %v1825 = vpop.f32.mrb[0].mxu0
        %v1826 = vadd.f32 %v725, %v1825
        %v1827 = vpop.f32.mrb[0].mxu0
        %v1828 = vadd.f32 %v729, %v1827
        %1829 = vmatprep.mubr.bf16.mxu0 %v941
        %1830 = vmatmul.mubr.bf16.gmra.mrb[0].mxu0 %v940
        %v1831 = vpop.f32.mrb[0].mxu0
        %v1832 = vadd.f32 %v725, %v1831
        %v1833 = vpop.f32.mrb[0].mxu0
        %v1834 = vadd.f32 %v729, %v1833
        %v1835 = vpop.f32.mrb[0].mxu0
        %v1836 = vadd.f32 %v725, %v1835
        %v1837 = vpop.f32.mrb[0].mxu0
        %v1838 = vadd.f32 %v729, %v1837
        %1839 = vmatprep.mubr.bf16.mxu0 %v943
        %1840 = vmatmul.mubr.bf16.gmra.mrb[0].mxu0 %v942
        %v1841 = vpop.f32.mrb[0].mxu0
        %v1842 = vadd.f32 %v725, %v1841
        %v1843 = vpop.f32.mrb[0].mxu0
        %v1844 = vadd.f32 %v729, %v1843
        %v1845 = vpop.f32.mrb[0].mxu0
        %v1846 = vadd.f32 %v725, %v1845
        %v1847 = vpop.f32.mrb[0].mxu0
        %v1848 = vadd.f32 %v729, %v1847
        %1849 = vmatprep.mubr.bf16.mxu0 %v945
        %1850 = vmatmul.mubr.bf16.gmra.mrb[0].mxu0 %v944
        %v1851 = vpop.f32.mrb[0].mxu0
        %v1852 = vadd.f32 %v725, %v1851
        %v1853 = vpop.f32.mrb[0].mxu0
        %v1854 = vadd.f32 %v729, %v1853
        %v1855 = vpop.f32.mrb[0].mxu0
        %v1856 = vadd.f32 %v725, %v1855
        %v1857 = vpop.f32.mrb[0].mxu0
        %v1858 = vadd.f32 %v729, %v1857
        %1859 = vmatprep.mubr.bf16.mxu0 %v947
        %1860 = vmatmul.mubr.bf16.gmra.mrb[0].mxu0 %v946
        %v1861 = vpop.f32.mrb[0].mxu0
        %v1862 = vadd.f32 %v725, %v1861
        %v1863 = vpop.f32.mrb[0].mxu0
        %v1864 = vadd.f32 %v729, %v1863
        %v1865 = vpop.f32.mrb[0].mxu0
        %v1866 = vadd.f32 %v725, %v1865
        %v1867 = vpop.f32.mrb[0].mxu0
        %v1868 = vadd.f32 %v729, %v1867
        %1869 = vmatprep.mubr.bf16.mxu0 %v949
        %1870 = vmatmul.mubr.bf16.gmra.mrb[0].mxu0 %v948
        %v1871 = vpop.f32.mrb[0].mxu0
        %v1872 = vadd.f32 %v725, %v1871
        %v1873 = vpop.f32.mrb[0].mxu0
        %v1874 = vadd.f32 %v729, %v1873
        %v1875 = vpop.f32.mrb[0].mxu0
        %v1876 = vadd.f32 %v725, %v1875
        %v1877 = vpop.f32.mrb[0].mxu0
        %v1878 = vadd.f32 %v729, %v1877
        %1879 = vmatprep.mubr.bf16.mxu0 %v951
        %1880 = vmatmul.mubr.bf16.gmra.mrb[0].mxu0 %v950
        %v1881 = vpop.f32.mrb[0].mxu0
        %v1882 = vadd.f32 %v725, %v1881
        %v1883 = vpop.f32.mrb[0].mxu0
        %v1884 = vadd.f32 %v729, %v1883
        %v1885 = vpop.f32.mrb[0].mxu0
        %v1886 = vadd.f32 %v725, %v1885
        %v1887 = vpop.f32.mrb[0].mxu0
        %v1888 = vadd.f32 %v729, %v1887
        %1889 = vmatprep.mubr.bf16.mxu0 %v953
        %1890 = vmatmul.mubr.bf16.gmra.mrb[0].mxu0 %v952
        %v1891 = vpop.f32.mrb[0].mxu0
        %v1892 = vadd.f32 %v725, %v1891
        %v1893 = vpop.f32.mrb[0].mxu0
        %v1894 = vadd.f32 %v729, %v1893
        %v1895 = vpop.f32.mrb[0].mxu0
        %v1896 = vadd.f32 %v725, %v1895
        %v1897 = vpop.f32.mrb[0].mxu0
        %v1898 = vadd.f32 %v729, %v1897
        %1899 = vmatprep.mubr.bf16.mxu0 %v955
        %1900 = vmatmul.mubr.bf16.gmra.mrb[0].mxu0 %v954
        %v1901 = vpop.f32.mrb[0].mxu0
        %v1902 = vadd.f32 %v725, %v1901
        %v1903 = vpop.f32.mrb[0].mxu0
        %v1904 = vadd.f32 %v729, %v1903
        %v1905 = vpop.f32.mrb[0].mxu0
        %v1906 = vadd.f32 %v725, %v1905
        %v1907 = vpop.f32.mrb[0].mxu0
        %v1908 = vadd.f32 %v729, %v1907
        %1909 = vmatprep.mubr.bf16.mxu0 %v957
        %1910 = vmatmul.mubr.bf16.gmra.mrb[0].mxu0 %v956
        %v1911 = vpop.f32.mrb[0].mxu0
        %v1912 = vadd.f32 %v725, %v1911
        %v1913 = vpop.f32.mrb[0].mxu0
        %v1914 = vadd.f32 %v729, %v1913
        %v1915 = vpop.f32.mrb[0].mxu0
        %v1916 = vadd.f32 %v725, %v1915
        %v1917 = vpop.f32.mrb[0].mxu0
        %v1918 = vadd.f32 %v729, %v1917
        %1919 = vmatprep.mubr.bf16.mxu0 %v959
        %1920 = vmatmul.mubr.bf16.gmra.mrb[0].mxu0 %v958
        %v1921 = vpop.f32.mrb[0].mxu0
        %v1922 = vadd.f32 %v725, %v1921
        %v1923 = vpop.f32.mrb[0].mxu0
        %v1924 = vadd.f32 %v729, %v1923
        %v1925 = vpop.f32.mrb[0].mxu0
        %v1926 = vadd.f32 %v725, %v1925
        %v1927 = vpop.f32.mrb[0].mxu0
        %v1928 = vadd.f32 %v729, %v1927
        %1929 = vmatprep.mubr.bf16.mxu0 %v961
        %1930 = vmatmul.mubr.bf16.gmra.mrb[0].mxu0 %v960
        %v1931 = vpop.f32.mrb[0].mxu0
        %v1932 = vadd.f32 %v725, %v1931
        %v1933 = vpop.f32.mrb[0].mxu0
        %v1934 = vadd.f32 %v729, %v1933
        %v1935 = vpop.f32.mrb[0].mxu0
        %v1936 = vadd.f32 %v725, %v1935
        %v1937 = vpop.f32.mrb[0].mxu0
        %v1938 = vadd.f32 %v729, %v1937
        %1939 = vmatprep.mubr.bf16.mxu0 %v963
        %1940 = vmatmul.mubr.bf16.gmra.mrb[0].mxu0 %v962
        %v1941 = vpop.f32.mrb[0].mxu0
        %v1942 = vadd.f32 %v725, %v1941
        %v1943 = vpop.f32.mrb[0].mxu0
        %v1944 = vadd.f32 %v729, %v1943
        %v1945 = vpop.f32.mrb[0].mxu0
        %v1946 = vadd.f32 %v725, %v1945
        %v1947 = vpop.f32.mrb[0].mxu0
        %v1948 = vadd.f32 %v729, %v1947
        %1949 = vmatprep.mubr.bf16.mxu0 %v965
        %1950 = vmatmul.mubr.bf16.gmra.mrb[0].mxu0 %v964
        %v1951 = vpop.f32.mrb[0].mxu0
        %v1952 = vadd.f32 %v725, %v1951
        %v1953 = vpop.f32.mrb[0].mxu0
        %v1954 = vadd.f32 %v729, %v1953
        %v1955 = vpop.f32.mrb[0].mxu0
        %v1956 = vadd.f32 %v725, %v1955
        %v1957 = vpop.f32.mrb[0].mxu0
        %v1958 = vadd.f32 %v729, %v1957
        %1959 = vmatprep.mubr.bf16.mxu0 %v967
        %1960 = vmatmul.mubr.bf16.gmra.mrb[0].mxu0 %v966
        %v1961 = vpop.f32.mrb[0].mxu0
        %v1962 = vadd.f32 %v725, %v1961
        %v1963 = vpop.f32.mrb[0].mxu0
        %v1964 = vadd.f32 %v729, %v1963
        %v1965 = vpop.f32.mrb[0].mxu0
        %v1966 = vadd.f32 %v725, %v1965
        %v1967 = vpop.f32.mrb[0].mxu0
        %v1968 = vadd.f32 %v729, %v1967
        %1969 = vmatprep.mubr.bf16.mxu0 %v969
        %1970 = vmatmul.mubr.bf16.gmra.mrb[0].mxu0 %v968
        %v1971 = vpop.f32.mrb[0].mxu0
        %v1972 = vadd.f32 %v725, %v1971
        %v1973 = vpop.f32.mrb[0].mxu0
        %v1974 = vadd.f32 %v729, %v1973
        %v1975 = vpop.f32.mrb[0].mxu0
        %v1976 = vadd.f32 %v725, %v1975
        %v1977 = vpop.f32.mrb[0].mxu0
        %v1978 = vadd.f32 %v729, %v1977
        %1979 = vmatprep.mubr.bf16.mxu0 %v971
        %1980 = vmatmul.mubr.bf16.gmra.mrb[0].mxu0 %v970
        %v1981 = vpop.f32.mrb[0].mxu0
        %v1982 = vadd.f32 %v725, %v1981
        %v1983 = vpop.f32.mrb[0].mxu0
        %v1984 = vadd.f32 %v729, %v1983
        %v1985 = vpop.f32.mrb[0].mxu0
        %v1986 = vadd.f32 %v725, %v1985
        %v1987 = vpop.f32.mrb[0].mxu0
        %v1988 = vadd.f32 %v729, %v1987
        %1989 = vmatprep.mubr.bf16.mxu0 %v973
        %1990 = vmatmul.mubr.bf16.gmra.mrb[0].mxu0 %v972
        %v1991 = vpop.f32.mrb[0].mxu0
        %v1992 = vadd.f32 %v725, %v1991
        %v1993 = vpop.f32.mrb[0].mxu0
        %v1994 = vadd.f32 %v729, %v1993
        %v1995 = vpop.f32.mrb[0].mxu0
        %v1996 = vadd.f32 %v725, %v1995
        %v1997 = vpop.f32.mrb[0].mxu0
        %v1998 = vadd.f32 %v729, %v1997
        %1999 = vmatprep.mubr.bf16.mxu0 %v975
        %2000 = vmatmul.mubr.bf16.gmra.mrb[0].mxu0 %v974
        %v2001 = vpop.f32.mrb[0].mxu0
        %v2002 = vadd.f32 %v725, %v2001
        %v2003 = vpop.f32.mrb[0].mxu0
        %v2004 = vadd.f32 %v729, %v2003
        %v2005 = vpop.f32.mrb[0].mxu0
        %v2006 = vadd.f32 %v725, %v2005
        %v2007 = vpop.f32.mrb[0].mxu0
        %v2008 = vadd.f32 %v729, %v2007
        %2009 = vmatprep.mubr.bf16.mxu0 %v977
        %2010 = vmatmul.mubr.bf16.gmra.mrb[0].mxu0 %v976
        %v2011 = vpop.f32.mrb[0].mxu0
        %v2012 = vadd.f32 %v725, %v2011
        %v2013 = vpop.f32.mrb[0].mxu0
        %v2014 = vadd.f32 %v729, %v2013
        %v2015 = vpop.f32.mrb[0].mxu0
        %v2016 = vadd.f32 %v725, %v2015
        %v2017 = vpop.f32.mrb[0].mxu0
        %v2018 = vadd.f32 %v729, %v2017
        %2019 = vmatprep.mubr.bf16.mxu0 %v979
        %2020 = vmatmul.mubr.bf16.gmra.mrb[0].mxu0 %v978
        %v2021 = vpop.f32.mrb[0].mxu0
        %v2022 = vadd.f32 %v725, %v2021
        %v2023 = vpop.f32.mrb[0].mxu0
        %v2024 = vadd.f32 %v729, %v2023
        %v2025 = vpop.f32.mrb[0].mxu0
        %v2026 = vadd.f32 %v725, %v2025
        %v2027 = vpop.f32.mrb[0].mxu0
        %v2028 = vadd.f32 %v729, %v2027
        %2029 = vmatprep.mubr.bf16.mxu0 %v981
        %2030 = vmatmul.mubr.bf16.gmra.mrb[0].mxu0 %v980
        %v2031 = vpop.f32.mrb[0].mxu0
        %v2032 = vadd.f32 %v725, %v2031
        %v2033 = vpop.f32.mrb[0].mxu0
        %v2034 = vadd.f32 %v729, %v2033
        %v2035 = vpop.f32.mrb[0].mxu0
        %v2036 = vadd.f32 %v725, %v2035
        %v2037 = vpop.f32.mrb[0].mxu0
        %v2038 = vadd.f32 %v729, %v2037
        %2039 = vmatprep.mubr.bf16.mxu0 %v983
        %2040 = vmatmul.mubr.bf16.gmra.mrb[0].mxu0 %v982
        %v2041 = vpop.f32.mrb[0].mxu0
        %v2042 = vadd.f32 %v725, %v2041
        %v2043 = vpop.f32.mrb[0].mxu0
        %v2044 = vadd.f32 %v729, %v2043
        %v2045 = vpop.f32.mrb[0].mxu0
        %v2046 = vadd.f32 %v725, %v2045
        %v2047 = vpop.f32.mrb[0].mxu0
        %v2048 = vadd.f32 %v729, %v2047
        %2049 = vmatprep.mubr.bf16.mxu0 %v985
        %2050 = vmatmul.mubr.bf16.gmra.mrb[0].mxu0 %v984
        %v2051 = vpop.f32.mrb[0].mxu0
        %v2052 = vadd.f32 %v725, %v2051
        %v2053 = vpop.f32.mrb[0].mxu0
        %v2054 = vadd.f32 %v729, %v2053
        %v2055 = vpop.f32.mrb[0].mxu0
        %v2056 = vadd.f32 %v725, %v2055
        %v2057 = vpop.f32.mrb[0].mxu0
        %v2058 = vadd.f32 %v729, %v2057
        %2059 = vmatprep.mubr.bf16.mxu0 %v987
        %2060 = vmatmul.mubr.bf16.gmra.mrb[0].mxu0 %v986
        %v2061 = vpop.f32.mrb[0].mxu0
        %v2062 = vadd.f32 %v725, %v2061
        %v2063 = vpop.f32.mrb[0].mxu0
        %v2064 = vadd.f32 %v729, %v2063
        %v2065 = vpop.f32.mrb[0].mxu0
        %v2066 = vadd.f32 %v725, %v2065
        %v2067 = vpop.f32.mrb[0].mxu0
        %v2068 = vadd.f32 %v729, %v2067
        %2069 = vmatprep.mubr.bf16.mxu0 %v989
        %2070 = vmatmul.mubr.bf16.gmra.mrb[0].mxu0 %v988
        %v2071 = vpop.f32.mrb[0].mxu0
        %v2072 = vadd.f32 %v725, %v2071
        %v2073 = vpop.f32.mrb[0].mxu0
        %v2074 = vadd.f32 %v729, %v2073
        %v2075 = vpop.f32.mrb[0].mxu0
        %v2076 = vadd.f32 %v725, %v2075
        %v2077 = vpop.f32.mrb[0].mxu0
        %v2078 = vadd.f32 %v729, %v2077
        %2079 = vdwg.mxu0
        %v2080 = vmul.f32 %v1409, 0.5
        %v2081 = vmul.f32 %v1411, 0.5
        %v2082 = vmul.f32 %v1762, 0.5
        %v2083 = vmul.f32 %v1764, 0.5
        %v2084 = vmul.f32 %v1413, 0.5
        %v2085 = vmul.f32 %v1415, 0.5
        %v2086 = vmul.f32 %v1766, 0.5
        %v2087 = vmul.f32 %v1768, 0.5
        %v2088 = vmul.f32 %v1419, 0.5
        %v2089 = vmul.f32 %v1421, 0.5
        %v2090 = vmul.f32 %v1772, 0.5
        %v2091 = vmul.f32 %v1774, 0.5
        %v2092 = vmul.f32 %v1423, 0.5
        %v2093 = vmul.f32 %v1425, 0.5
        %v2094 = vmul.f32 %v1776, 0.5
        %v2095 = vmul.f32 %v1778, 0.5
        %v2096 = vmul.f32 %v1429, 0.5
        %v2097 = vmul.f32 %v1431, 0.5
        %v2098 = vmul.f32 %v1782, 0.5
        %v2099 = vmul.f32 %v1784, 0.5
        %v2100 = vmul.f32 %v1433, 0.5
        %v2101 = vmul.f32 %v1435, 0.5
        %v2102 = vmul.f32 %v1786, 0.5
        %v2103 = vmul.f32 %v1788, 0.5
        %v2104 = vmul.f32 %v1439, 0.5
        %v2105 = vmul.f32 %v1441, 0.5
        %v2106 = vmul.f32 %v1792, 0.5
        %v2107 = vmul.f32 %v1794, 0.5
        %v2108 = vmul.f32 %v1443, 0.5
        %v2109 = vmul.f32 %v1445, 0.5
        %v2110 = vmul.f32 %v1796, 0.5
        %v2111 = vmul.f32 %v1798, 0.5
        %v2112 = vmul.f32 %v1449, 0.5
        %v2113 = vmul.f32 %v1451, 0.5
        %v2114 = vmul.f32 %v1802, 0.5
        %v2115 = vmul.f32 %v1804, 0.5
        %v2116 = vmul.f32 %v1453, 0.5
        %v2117 = vmul.f32 %v1455, 0.5
        %v2118 = vmul.f32 %v1806, 0.5
        %v2119 = vmul.f32 %v1808, 0.5
        %v2120 = vmul.f32 %v1459, 0.5
        %v2121 = vmul.f32 %v1461, 0.5
        %v2122 = vmul.f32 %v1812, 0.5
        %v2123 = vmul.f32 %v1814, 0.5
        %v2124 = vmul.f32 %v1463, 0.5
        %v2125 = vmul.f32 %v1465, 0.5
        %v2126 = vmul.f32 %v1816, 0.5
        %v2127 = vmul.f32 %v1818, 0.5
        %v2128 = vmul.f32 %v1469, 0.5
        %v2129 = vmul.f32 %v1471, 0.5
        %v2130 = vmul.f32 %v1822, 0.5
        %v2131 = vmul.f32 %v1824, 0.5
        %v2132 = vmul.f32 %v1473, 0.5
        %v2133 = vmul.f32 %v1475, 0.5
        %v2134 = vmul.f32 %v1826, 0.5
        %v2135 = vmul.f32 %v1828, 0.5
        %v2136 = vmul.f32 %v1479, 0.5
        %v2137 = vmul.f32 %v1481, 0.5
        %v2138 = vmul.f32 %v1832, 0.5
        %v2139 = vmul.f32 %v1834, 0.5
        %v2140 = vmul.f32 %v1483, 0.5
        %v2141 = vmul.f32 %v1485, 0.5
        %v2142 = vmul.f32 %v1836, 0.5
        %v2143 = vmul.f32 %v1838, 0.5
        %v2144 = vmul.f32 %v1489, 0.5
        %v2145 = vmul.f32 %v1491, 0.5
        %v2146 = vmul.f32 %v1842, 0.5
        %v2147 = vmul.f32 %v1844, 0.5
        %v2148 = vmul.f32 %v1493, 0.5
        %v2149 = vmul.f32 %v1495, 0.5
        %v2150 = vmul.f32 %v1846, 0.5
        %v2151 = vmul.f32 %v1848, 0.5
        %v2152 = vmul.f32 %v1499, 0.5
        %v2153 = vmul.f32 %v1501, 0.5
        %v2154 = vmul.f32 %v1852, 0.5
        %v2155 = vmul.f32 %v1854, 0.5
        %v2156 = vmul.f32 %v1503, 0.5
        %v2157 = vmul.f32 %v1505, 0.5
        %v2158 = vmul.f32 %v1856, 0.5
        %v2159 = vmul.f32 %v1858, 0.5
        %v2160 = vmul.f32 %v1509, 0.5
        %v2161 = vmul.f32 %v1511, 0.5
        %v2162 = vmul.f32 %v1862, 0.5
        %v2163 = vmul.f32 %v1864, 0.5
        %v2164 = vmul.f32 %v1513, 0.5
        %v2165 = vmul.f32 %v1515, 0.5
        %v2166 = vmul.f32 %v1866, 0.5
        %v2167 = vmul.f32 %v1868, 0.5
        %v2168 = vmul.f32 %v1519, 0.5
        %v2169 = vmul.f32 %v1521, 0.5
        %v2170 = vmul.f32 %v1872, 0.5
        %v2171 = vmul.f32 %v1874, 0.5
        %v2172 = vmul.f32 %v1523, 0.5
        %v2173 = vmul.f32 %v1525, 0.5
        %v2174 = vmul.f32 %v1876, 0.5
        %v2175 = vmul.f32 %v1878, 0.5
        %v2176 = vmul.f32 %v1529, 0.5
        %v2177 = vmul.f32 %v1531, 0.5
        %v2178 = vmul.f32 %v1882, 0.5
        %v2179 = vmul.f32 %v1884, 0.5
        %v2180 = vmul.f32 %v1533, 0.5
        %v2181 = vmul.f32 %v1535, 0.5
        %v2182 = vmul.f32 %v1886, 0.5
        %v2183 = vmul.f32 %v1888, 0.5
        %v2184 = vmul.f32 %v1539, 0.5
        %v2185 = vmul.f32 %v1541, 0.5
        %v2186 = vmul.f32 %v1892, 0.5
        %v2187 = vmul.f32 %v1894, 0.5
        %v2188 = vmul.f32 %v1543, 0.5
        %v2189 = vmul.f32 %v1545, 0.5
        %v2190 = vmul.f32 %v1896, 0.5
        %v2191 = vmul.f32 %v1898, 0.5
        %v2192 = vmul.f32 %v1549, 0.5
        %v2193 = vmul.f32 %v1551, 0.5
        %v2194 = vmul.f32 %v1902, 0.5
        %v2195 = vmul.f32 %v1904, 0.5
        %v2196 = vmul.f32 %v1553, 0.5
        %v2197 = vmul.f32 %v1555, 0.5
        %v2198 = vmul.f32 %v1906, 0.5
        %v2199 = vmul.f32 %v1908, 0.5
        %v2200 = vmul.f32 %v1559, 0.5
        %v2201 = vmul.f32 %v1561, 0.5
        %v2202 = vmul.f32 %v1912, 0.5
        %v2203 = vmul.f32 %v1914, 0.5
        %v2204 = vmul.f32 %v1563, 0.5
        %v2205 = vmul.f32 %v1565, 0.5
        %v2206 = vmul.f32 %v1916, 0.5
        %v2207 = vmul.f32 %v1918, 0.5
        %v2208 = vmul.f32 %v1569, 0.5
        %v2209 = vmul.f32 %v1571, 0.5
        %v2210 = vmul.f32 %v1922, 0.5
        %v2211 = vmul.f32 %v1924, 0.5
        %v2212 = vmul.f32 %v1573, 0.5
        %v2213 = vmul.f32 %v1575, 0.5
        %v2214 = vmul.f32 %v1926, 0.5
        %v2215 = vmul.f32 %v1928, 0.5
        %v2216 = vmul.f32 %v1579, 0.5
        %v2217 = vmul.f32 %v1581, 0.5
        %v2218 = vmul.f32 %v1932, 0.5
        %v2219 = vmul.f32 %v1934, 0.5
        %v2220 = vmul.f32 %v1583, 0.5
        %v2221 = vmul.f32 %v1585, 0.5
        %v2222 = vmul.f32 %v1936, 0.5
        %v2223 = vmul.f32 %v1938, 0.5
        %v2224 = vmul.f32 %v1589, 0.5
        %v2225 = vmul.f32 %v1591, 0.5
        %v2226 = vmul.f32 %v1942, 0.5
        %v2227 = vmul.f32 %v1944, 0.5
        %v2228 = vmul.f32 %v1593, 0.5
        %v2229 = vmul.f32 %v1595, 0.5
        %v2230 = vmul.f32 %v1946, 0.5
        %v2231 = vmul.f32 %v1948, 0.5
        %v2232 = vmul.f32 %v1599, 0.5
        %v2233 = vmul.f32 %v1601, 0.5
        %v2234 = vmul.f32 %v1952, 0.5
        %v2235 = vmul.f32 %v1954, 0.5
        %v2236 = vmul.f32 %v1603, 0.5
        %v2237 = vmul.f32 %v1605, 0.5
        %v2238 = vmul.f32 %v1956, 0.5
        %v2239 = vmul.f32 %v1958, 0.5
        %v2240 = vmul.f32 %v1609, 0.5
        %v2241 = vmul.f32 %v1611, 0.5
        %v2242 = vmul.f32 %v1962, 0.5
        %v2243 = vmul.f32 %v1964, 0.5
        %v2244 = vmul.f32 %v1613, 0.5
        %v2245 = vmul.f32 %v1615, 0.5
        %v2246 = vmul.f32 %v1966, 0.5
        %v2247 = vmul.f32 %v1968, 0.5
        %v2248 = vmul.f32 %v1619, 0.5
        %v2249 = vmul.f32 %v1621, 0.5
        %v2250 = vmul.f32 %v1972, 0.5
        %v2251 = vmul.f32 %v1974, 0.5
        %v2252 = vmul.f32 %v1623, 0.5
        %v2253 = vmul.f32 %v1625, 0.5
        %v2254 = vmul.f32 %v1976, 0.5
        %v2255 = vmul.f32 %v1978, 0.5
        %v2256 = vmul.f32 %v1629, 0.5
        %v2257 = vmul.f32 %v1631, 0.5
        %v2258 = vmul.f32 %v1982, 0.5
        %v2259 = vmul.f32 %v1984, 0.5
        %v2260 = vmul.f32 %v1633, 0.5
        %v2261 = vmul.f32 %v1635, 0.5
        %v2262 = vmul.f32 %v1986, 0.5
        %v2263 = vmul.f32 %v1988, 0.5
        %v2264 = vmul.f32 %v1639, 0.5
        %v2265 = vmul.f32 %v1641, 0.5
        %v2266 = vmul.f32 %v1992, 0.5
        %v2267 = vmul.f32 %v1994, 0.5
        %v2268 = vmul.f32 %v1643, 0.5
        %v2269 = vmul.f32 %v1645, 0.5
        %v2270 = vmul.f32 %v1996, 0.5
        %v2271 = vmul.f32 %v1998, 0.5
        %v2272 = vmul.f32 %v1649, 0.5
        %v2273 = vmul.f32 %v1651, 0.5
        %v2274 = vmul.f32 %v2002, 0.5
        %v2275 = vmul.f32 %v2004, 0.5
        %v2276 = vmul.f32 %v1653, 0.5
        %v2277 = vmul.f32 %v1655, 0.5
        %v2278 = vmul.f32 %v2006, 0.5
        %v2279 = vmul.f32 %v2008, 0.5
        %v2280 = vmul.f32 %v1659, 0.5
        %v2281 = vmul.f32 %v1661, 0.5
        %v2282 = vmul.f32 %v2012, 0.5
        %v2283 = vmul.f32 %v2014, 0.5
        %v2284 = vmul.f32 %v1663, 0.5
        %v2285 = vmul.f32 %v1665, 0.5
        %v2286 = vmul.f32 %v2016, 0.5
        %v2287 = vmul.f32 %v2018, 0.5
        %v2288 = vmul.f32 %v1669, 0.5
        %v2289 = vmul.f32 %v1671, 0.5
        %v2290 = vmul.f32 %v2022, 0.5
        %v2291 = vmul.f32 %v2024, 0.5
        %v2292 = vmul.f32 %v1673, 0.5
        %v2293 = vmul.f32 %v1675, 0.5
        %v2294 = vmul.f32 %v2026, 0.5
        %v2295 = vmul.f32 %v2028, 0.5
        %v2296 = vmul.f32 %v1679, 0.5
        %v2297 = vmul.f32 %v1681, 0.5
        %v2298 = vmul.f32 %v2032, 0.5
        %v2299 = vmul.f32 %v2034, 0.5
        %v2300 = vmul.f32 %v1683, 0.5
        %v2301 = vmul.f32 %v1685, 0.5
        %v2302 = vmul.f32 %v2036, 0.5
        %v2303 = vmul.f32 %v2038, 0.5
        %v2304 = vmul.f32 %v1689, 0.5
        %v2305 = vmul.f32 %v1691, 0.5
        %v2306 = vmul.f32 %v2042, 0.5
        %v2307 = vmul.f32 %v2044, 0.5
        %v2308 = vmul.f32 %v1693, 0.5
        %v2309 = vmul.f32 %v1695, 0.5
        %v2310 = vmul.f32 %v2046, 0.5
        %v2311 = vmul.f32 %v2048, 0.5
        %v2312 = vmul.f32 %v1699, 0.5
        %v2313 = vmul.f32 %v1701, 0.5
        %v2314 = vmul.f32 %v2052, 0.5
        %v2315 = vmul.f32 %v2054, 0.5
        %v2316 = vmul.f32 %v1703, 0.5
        %v2317 = vmul.f32 %v1705, 0.5
        %v2318 = vmul.f32 %v2056, 0.5
        %v2319 = vmul.f32 %v2058, 0.5
        %v2320 = vmul.f32 %v1709, 0.5
        %v2321 = vmul.f32 %v1711, 0.5
        %v2322 = vmul.f32 %v2062, 0.5
        %v2323 = vmul.f32 %v2064, 0.5
        %v2324 = vmul.f32 %v1713, 0.5
        %v2325 = vmul.f32 %v1715, 0.5
        %v2326 = vmul.f32 %v2066, 0.5
        %v2327 = vmul.f32 %v2068, 0.5
        %v2328 = vmul.f32 %v1719, 0.5
        %v2329 = vmul.f32 %v1721, 0.5
        %v2330 = vmul.f32 %v2072, 0.5
        %v2331 = vmul.f32 %v2074, 0.5
        %v2332 = vmul.f32 %v1723, 0.5
        %v2333 = vmul.f32 %v1725, 0.5
        %v2334 = vmul.f32 %v2076, 0.5
        %v2335 = vmul.f32 %v2078, 0.5
        %v2336 = vmul.f32 %v1409, 0.70710677
        %v2337 = vmul.f32 %v1411, 0.70710677
        %v2338 = vmul.f32 %v1762, 0.70710677
        %v2339 = vmul.f32 %v1764, 0.70710677
        %v2340 = vmul.f32 %v1413, 0.70710677
        %v2341 = vmul.f32 %v1415, 0.70710677
        %v2342 = vmul.f32 %v1766, 0.70710677
        %v2343 = vmul.f32 %v1768, 0.70710677
        %v2344 = vmul.f32 %v1419, 0.70710677
        %v2345 = vmul.f32 %v1421, 0.70710677
        %v2346 = vmul.f32 %v1772, 0.70710677
        %v2347 = vmul.f32 %v1774, 0.70710677
        %v2348 = vmul.f32 %v1423, 0.70710677
        %v2349 = vmul.f32 %v1425, 0.70710677
        %v2350 = vmul.f32 %v1776, 0.70710677
        %v2351 = vmul.f32 %v1778, 0.70710677
        %v2352 = vmul.f32 %v1429, 0.70710677
        %v2353 = vmul.f32 %v1431, 0.70710677
        %v2354 = vmul.f32 %v1782, 0.70710677
        %v2355 = vmul.f32 %v1784, 0.70710677
        %v2356 = vmul.f32 %v1433, 0.70710677
        %v2357 = vmul.f32 %v1435, 0.70710677
        %v2358 = vmul.f32 %v1786, 0.70710677
        %v2359 = vmul.f32 %v1788, 0.70710677
        %v2360 = vmul.f32 %v1439, 0.70710677
        %v2361 = vmul.f32 %v1441, 0.70710677
        %v2362 = vmul.f32 %v1792, 0.70710677
        %v2363 = vmul.f32 %v1794, 0.70710677
        %v2364 = vmul.f32 %v1443, 0.70710677
        %v2365 = vmul.f32 %v1445, 0.70710677
        %v2366 = vmul.f32 %v1796, 0.70710677
        %v2367 = vmul.f32 %v1798, 0.70710677
        %v2368 = vmul.f32 %v1449, 0.70710677
        %v2369 = vmul.f32 %v1451, 0.70710677
        %v2370 = vmul.f32 %v1802, 0.70710677
        %v2371 = vmul.f32 %v1804, 0.70710677
        %v2372 = vmul.f32 %v1453, 0.70710677
        %v2373 = vmul.f32 %v1455, 0.70710677
        %v2374 = vmul.f32 %v1806, 0.70710677
        %v2375 = vmul.f32 %v1808, 0.70710677
        %v2376 = vmul.f32 %v1459, 0.70710677
        %v2377 = vmul.f32 %v1461, 0.70710677
        %v2378 = vmul.f32 %v1812, 0.70710677
        %v2379 = vmul.f32 %v1814, 0.70710677
        %v2380 = vmul.f32 %v1463, 0.70710677
        %v2381 = vmul.f32 %v1465, 0.70710677
        %v2382 = vmul.f32 %v1816, 0.70710677
        %v2383 = vmul.f32 %v1818, 0.70710677
        %v2384 = vmul.f32 %v1469, 0.70710677
        %v2385 = vmul.f32 %v1471, 0.70710677
        %v2386 = vmul.f32 %v1822, 0.70710677
        %v2387 = vmul.f32 %v1824, 0.70710677
        %v2388 = vmul.f32 %v1473, 0.70710677
        %v2389 = vmul.f32 %v1475, 0.70710677
        %v2390 = vmul.f32 %v1826, 0.70710677
        %v2391 = vmul.f32 %v1828, 0.70710677
        %v2392 = vmul.f32 %v1479, 0.70710677
        %v2393 = vmul.f32 %v1481, 0.70710677
        %v2394 = vmul.f32 %v1832, 0.70710677
        %v2395 = vmul.f32 %v1834, 0.70710677
        %v2396 = vmul.f32 %v1483, 0.70710677
        %v2397 = vmul.f32 %v1485, 0.70710677
        %v2398 = vmul.f32 %v1836, 0.70710677
        %v2399 = vmul.f32 %v1838, 0.70710677
        %v2400 = vmul.f32 %v1489, 0.70710677
        %v2401 = vmul.f32 %v1491, 0.70710677
        %v2402 = vmul.f32 %v1842, 0.70710677
        %v2403 = vmul.f32 %v1844, 0.70710677
        %v2404 = vmul.f32 %v1493, 0.70710677
        %v2405 = vmul.f32 %v1495, 0.70710677
        %v2406 = vmul.f32 %v1846, 0.70710677
        %v2407 = vmul.f32 %v1848, 0.70710677
        %v2408 = vmul.f32 %v1499, 0.70710677
        %v2409 = vmul.f32 %v1501, 0.70710677
        %v2410 = vmul.f32 %v1852, 0.70710677
        %v2411 = vmul.f32 %v1854, 0.70710677
        %v2412 = vmul.f32 %v1503, 0.70710677
        %v2413 = vmul.f32 %v1505, 0.70710677
        %v2414 = vmul.f32 %v1856, 0.70710677
        %v2415 = vmul.f32 %v1858, 0.70710677
        %v2416 = vmul.f32 %v1509, 0.70710677
        %v2417 = vmul.f32 %v1511, 0.70710677
        %v2418 = vmul.f32 %v1862, 0.70710677
        %v2419 = vmul.f32 %v1864, 0.70710677
        %v2420 = vmul.f32 %v1513, 0.70710677
        %v2421 = vmul.f32 %v1515, 0.70710677
        %v2422 = vmul.f32 %v1866, 0.70710677
        %v2423 = vmul.f32 %v1868, 0.70710677
        %v2424 = vmul.f32 %v1519, 0.70710677
        %v2425 = vmul.f32 %v1521, 0.70710677
        %v2426 = vmul.f32 %v1872, 0.70710677
        %v2427 = vmul.f32 %v1874, 0.70710677
        %v2428 = vmul.f32 %v1523, 0.70710677
        %v2429 = vmul.f32 %v1525, 0.70710677
        %v2430 = vmul.f32 %v1876, 0.70710677
        %v2431 = vmul.f32 %v1878, 0.70710677
        %v2432 = vmul.f32 %v1529, 0.70710677
        %v2433 = vmul.f32 %v1531, 0.70710677
        %v2434 = vmul.f32 %v1882, 0.70710677
        %v2435 = vmul.f32 %v1884, 0.70710677
        %v2436 = vmul.f32 %v1533, 0.70710677
        %v2437 = vmul.f32 %v1535, 0.70710677
        %v2438 = vmul.f32 %v1886, 0.70710677
        %v2439 = vmul.f32 %v1888, 0.70710677
        %v2440 = vmul.f32 %v1539, 0.70710677
        %v2441 = vmul.f32 %v1541, 0.70710677
        %v2442 = vmul.f32 %v1892, 0.70710677
        %v2443 = vmul.f32 %v1894, 0.70710677
        %v2444 = vmul.f32 %v1543, 0.70710677
        %v2445 = vmul.f32 %v1545, 0.70710677
        %v2446 = vmul.f32 %v1896, 0.70710677
        %v2447 = vmul.f32 %v1898, 0.70710677
        %v2448 = vmul.f32 %v1549, 0.70710677
        %v2449 = vmul.f32 %v1551, 0.70710677
        %v2450 = vmul.f32 %v1902, 0.70710677
        %v2451 = vmul.f32 %v1904, 0.70710677
        %v2452 = vmul.f32 %v1553, 0.70710677
        %v2453 = vmul.f32 %v1555, 0.70710677
        %v2454 = vmul.f32 %v1906, 0.70710677
        %v2455 = vmul.f32 %v1908, 0.70710677
        %v2456 = vmul.f32 %v1559, 0.70710677
        %v2457 = vmul.f32 %v1561, 0.70710677
        %v2458 = vmul.f32 %v1912, 0.70710677
        %v2459 = vmul.f32 %v1914, 0.70710677
        %v2460 = vmul.f32 %v1563, 0.70710677
        %v2461 = vmul.f32 %v1565, 0.70710677
        %v2462 = vmul.f32 %v1916, 0.70710677
        %v2463 = vmul.f32 %v1918, 0.70710677
        %v2464 = vmul.f32 %v1569, 0.70710677
        %v2465 = vmul.f32 %v1571, 0.70710677
        %v2466 = vmul.f32 %v1922, 0.70710677
        %v2467 = vmul.f32 %v1924, 0.70710677
        %v2468 = vmul.f32 %v1573, 0.70710677
        %v2469 = vmul.f32 %v1575, 0.70710677
        %v2470 = vmul.f32 %v1926, 0.70710677
        %v2471 = vmul.f32 %v1928, 0.70710677
        %v2472 = vmul.f32 %v1579, 0.70710677
        %v2473 = vmul.f32 %v1581, 0.70710677
        %v2474 = vmul.f32 %v1932, 0.70710677
        %v2475 = vmul.f32 %v1934, 0.70710677
        %v2476 = vmul.f32 %v1583, 0.70710677
        %v2477 = vmul.f32 %v1585, 0.70710677
        %v2478 = vmul.f32 %v1936, 0.70710677
        %v2479 = vmul.f32 %v1938, 0.70710677
        %v2480 = vmul.f32 %v1589, 0.70710677
        %v2481 = vmul.f32 %v1591, 0.70710677
        %v2482 = vmul.f32 %v1942, 0.70710677
        %v2483 = vmul.f32 %v1944, 0.70710677
        %v2484 = vmul.f32 %v1593, 0.70710677
        %v2485 = vmul.f32 %v1595, 0.70710677
        %v2486 = vmul.f32 %v1946, 0.70710677
        %v2487 = vmul.f32 %v1948, 0.70710677
        %v2488 = vmul.f32 %v1599, 0.70710677
        %v2489 = vmul.f32 %v1601, 0.70710677
        %v2490 = vmul.f32 %v1952, 0.70710677
        %v2491 = vmul.f32 %v1954, 0.70710677
        %v2492 = vmul.f32 %v1603, 0.70710677
        %v2493 = vmul.f32 %v1605, 0.70710677
        %v2494 = vmul.f32 %v1956, 0.70710677
        %v2495 = vmul.f32 %v1958, 0.70710677
        %v2496 = vmul.f32 %v1609, 0.70710677
        %v2497 = vmul.f32 %v1611, 0.70710677
        %v2498 = vmul.f32 %v1962, 0.70710677
        %v2499 = vmul.f32 %v1964, 0.70710677
        %v2500 = vmul.f32 %v1613, 0.70710677
        %v2501 = vmul.f32 %v1615, 0.70710677
        %v2502 = vmul.f32 %v1966, 0.70710677
        %v2503 = vmul.f32 %v1968, 0.70710677
        %v2504 = vmul.f32 %v1619, 0.70710677
        %v2505 = vmul.f32 %v1621, 0.70710677
        %v2506 = vmul.f32 %v1972, 0.70710677
        %v2507 = vmul.f32 %v1974, 0.70710677
        %v2508 = vmul.f32 %v1623, 0.70710677
        %v2509 = vmul.f32 %v1625, 0.70710677
        %v2510 = vmul.f32 %v1976, 0.70710677
        %v2511 = vmul.f32 %v1978, 0.70710677
        %v2512 = vmul.f32 %v1629, 0.70710677
        %v2513 = vmul.f32 %v1631, 0.70710677
        %v2514 = vmul.f32 %v1982, 0.70710677
        %v2515 = vmul.f32 %v1984, 0.70710677
        %v2516 = vmul.f32 %v1633, 0.70710677
        %v2517 = vmul.f32 %v1635, 0.70710677
        %v2518 = vmul.f32 %v1986, 0.70710677
        %v2519 = vmul.f32 %v1988, 0.70710677
        %v2520 = vmul.f32 %v1639, 0.70710677
        %v2521 = vmul.f32 %v1641, 0.70710677
        %v2522 = vmul.f32 %v1992, 0.70710677
        %v2523 = vmul.f32 %v1994, 0.70710677
        %v2524 = vmul.f32 %v1643, 0.70710677
        %v2525 = vmul.f32 %v1645, 0.70710677
        %v2526 = vmul.f32 %v1996, 0.70710677
        %v2527 = vmul.f32 %v1998, 0.70710677
        %v2528 = vmul.f32 %v1649, 0.70710677
        %v2529 = vmul.f32 %v1651, 0.70710677
        %v2530 = vmul.f32 %v2002, 0.70710677
        %v2531 = vmul.f32 %v2004, 0.70710677
        %v2532 = vmul.f32 %v1653, 0.70710677
        %v2533 = vmul.f32 %v1655, 0.70710677
        %v2534 = vmul.f32 %v2006, 0.70710677
        %v2535 = vmul.f32 %v2008, 0.70710677
        %v2536 = vmul.f32 %v1659, 0.70710677
        %v2537 = vmul.f32 %v1661, 0.70710677
        %v2538 = vmul.f32 %v2012, 0.70710677
        %v2539 = vmul.f32 %v2014, 0.70710677
        %v2540 = vmul.f32 %v1663, 0.70710677
        %v2541 = vmul.f32 %v1665, 0.70710677
        %v2542 = vmul.f32 %v2016, 0.70710677
        %v2543 = vmul.f32 %v2018, 0.70710677
        %v2544 = vmul.f32 %v1669, 0.70710677
        %v2545 = vmul.f32 %v1671, 0.70710677
        %v2546 = vmul.f32 %v2022, 0.70710677
        %v2547 = vmul.f32 %v2024, 0.70710677
        %v2548 = vmul.f32 %v1673, 0.70710677
        %v2549 = vmul.f32 %v1675, 0.70710677
        %v2550 = vmul.f32 %v2026, 0.70710677
        %v2551 = vmul.f32 %v2028, 0.70710677
        %v2552 = vmul.f32 %v1679, 0.70710677
        %v2553 = vmul.f32 %v1681, 0.70710677
        %v2554 = vmul.f32 %v2032, 0.70710677
        %v2555 = vmul.f32 %v2034, 0.70710677
        %v2556 = vmul.f32 %v1683, 0.70710677
        %v2557 = vmul.f32 %v1685, 0.70710677
        %v2558 = vmul.f32 %v2036, 0.70710677
        %v2559 = vmul.f32 %v2038, 0.70710677
        %v2560 = vmul.f32 %v1689, 0.70710677
        %v2561 = vmul.f32 %v1691, 0.70710677
        %v2562 = vmul.f32 %v2042, 0.70710677
        %v2563 = vmul.f32 %v2044, 0.70710677
        %v2564 = vmul.f32 %v1693, 0.70710677
        %v2565 = vmul.f32 %v1695, 0.70710677
        %v2566 = vmul.f32 %v2046, 0.70710677
        %v2567 = vmul.f32 %v2048, 0.70710677
        %v2568 = vmul.f32 %v1699, 0.70710677
        %v2569 = vmul.f32 %v1701, 0.70710677
        %v2570 = vmul.f32 %v2052, 0.70710677
        %v2571 = vmul.f32 %v2054, 0.70710677
        %v2572 = vmul.f32 %v1703, 0.70710677
        %v2573 = vmul.f32 %v1705, 0.70710677
        %v2574 = vmul.f32 %v2056, 0.70710677
        %v2575 = vmul.f32 %v2058, 0.70710677
        %v2576 = vmul.f32 %v1709, 0.70710677
        %v2577 = vmul.f32 %v1711, 0.70710677
        %v2578 = vmul.f32 %v2062, 0.70710677
        %v2579 = vmul.f32 %v2064, 0.70710677
        %v2580 = vmul.f32 %v1713, 0.70710677
        %v2581 = vmul.f32 %v1715, 0.70710677
        %v2582 = vmul.f32 %v2066, 0.70710677
        %v2583 = vmul.f32 %v2068, 0.70710677
        %v2584 = vmul.f32 %v1719, 0.70710677
        %v2585 = vmul.f32 %v1721, 0.70710677
        %v2586 = vmul.f32 %v2072, 0.70710677
        %v2587 = vmul.f32 %v2074, 0.70710677
        %v2588 = vmul.f32 %v1723, 0.70710677
        %v2589 = vmul.f32 %v1725, 0.70710677
        %v2590 = vmul.f32 %v2076, 0.70710677
        %v2591 = vmul.f32 %v2078, 0.70710677
        %v2592 = verf.f32.pop %v2336
        %v2593 = verf.f32.pop %v2337
        %v2594 = verf.f32.pop %v2338
        %v2595 = verf.f32.pop %v2339
        %v2596 = verf.f32.pop %v2340
        %v2597 = verf.f32.pop %v2341
        %v2598 = verf.f32.pop %v2342
        %v2599 = verf.f32.pop %v2343
        %v2600 = verf.f32.pop %v2344
        %v2601 = verf.f32.pop %v2345
        %v2602 = verf.f32.pop %v2346
        %v2603 = verf.f32.pop %v2347
        %v2604 = verf.f32.pop %v2348
        %v2605 = verf.f32.pop %v2349
        %v2606 = verf.f32.pop %v2350
        %v2607 = verf.f32.pop %v2351
        %v2608 = verf.f32.pop %v2352
        %v2609 = verf.f32.pop %v2353
        %v2610 = verf.f32.pop %v2354
        %v2611 = verf.f32.pop %v2355
        %v2612 = verf.f32.pop %v2356
        %v2613 = verf.f32.pop %v2357
        %v2614 = verf.f32.pop %v2358
        %v2615 = verf.f32.pop %v2359
        %v2616 = verf.f32.pop %v2360
        %v2617 = verf.f32.pop %v2361
        %v2618 = verf.f32.pop %v2362
        %v2619 = verf.f32.pop %v2363
        %v2620 = verf.f32.pop %v2364
        %v2621 = verf.f32.pop %v2365
        %v2622 = verf.f32.pop %v2366
        %v2623 = verf.f32.pop %v2367
        %v2624 = verf.f32.pop %v2368
        %v2625 = verf.f32.pop %v2369
        %v2626 = verf.f32.pop %v2370
        %v2627 = verf.f32.pop %v2371
        %v2628 = verf.f32.pop %v2372
        %v2629 = verf.f32.pop %v2373
        %v2630 = verf.f32.pop %v2374
        %v2631 = verf.f32.pop %v2375
        %v2632 = verf.f32.pop %v2376
        %v2633 = verf.f32.pop %v2377
        %v2634 = verf.f32.pop %v2378
        %v2635 = verf.f32.pop %v2379
        %v2636 = verf.f32.pop %v2380
        %v2637 = verf.f32.pop %v2381
        %v2638 = verf.f32.pop %v2382
        %v2639 = verf.f32.pop %v2383
        %v2640 = verf.f32.pop %v2384
        %v2641 = verf.f32.pop %v2385
        %v2642 = verf.f32.pop %v2386
        %v2643 = verf.f32.pop %v2387
        %v2644 = verf.f32.pop %v2388
        %v2645 = verf.f32.pop %v2389
        %v2646 = verf.f32.pop %v2390
        %v2647 = verf.f32.pop %v2391
        %v2648 = verf.f32.pop %v2392
        %v2649 = verf.f32.pop %v2393
        %v2650 = verf.f32.pop %v2394
        %v2651 = verf.f32.pop %v2395
        %v2652 = verf.f32.pop %v2396
        %v2653 = verf.f32.pop %v2397
        %v2654 = verf.f32.pop %v2398
        %v2655 = verf.f32.pop %v2399
        %v2656 = verf.f32.pop %v2400
        %v2657 = verf.f32.pop %v2401
        %v2658 = verf.f32.pop %v2402
        %v2659 = verf.f32.pop %v2403
        %v2660 = verf.f32.pop %v2404
        %v2661 = verf.f32.pop %v2405
        %v2662 = verf.f32.pop %v2406
        %v2663 = verf.f32.pop %v2407
        %v2664 = verf.f32.pop %v2408
        %v2665 = verf.f32.pop %v2409
        %v2666 = verf.f32.pop %v2410
        %v2667 = verf.f32.pop %v2411
        %v2668 = verf.f32.pop %v2412
        %v2669 = verf.f32.pop %v2413
        %v2670 = verf.f32.pop %v2414
        %v2671 = verf.f32.pop %v2415
        %v2672 = verf.f32.pop %v2416
        %v2673 = verf.f32.pop %v2417
        %v2674 = verf.f32.pop %v2418
        %v2675 = verf.f32.pop %v2419
        %v2676 = verf.f32.pop %v2420
        %v2677 = verf.f32.pop %v2421
        %v2678 = verf.f32.pop %v2422
        %v2679 = verf.f32.pop %v2423
        %v2680 = verf.f32.pop %v2424
        %v2681 = verf.f32.pop %v2425
        %v2682 = verf.f32.pop %v2426
        %v2683 = verf.f32.pop %v2427
        %v2684 = verf.f32.pop %v2428
        %v2685 = verf.f32.pop %v2429
        %v2686 = verf.f32.pop %v2430
        %v2687 = verf.f32.pop %v2431
        %v2688 = verf.f32.pop %v2432
        %v2689 = verf.f32.pop %v2433
        %v2690 = verf.f32.pop %v2434
        %v2691 = verf.f32.pop %v2435
        %v2692 = verf.f32.pop %v2436
        %v2693 = verf.f32.pop %v2437
        %v2694 = verf.f32.pop %v2438
        %v2695 = verf.f32.pop %v2439
        %v2696 = verf.f32.pop %v2440
        %v2697 = verf.f32.pop %v2441
        %v2698 = verf.f32.pop %v2442
        %v2699 = verf.f32.pop %v2443
        %v2700 = verf.f32.pop %v2444
        %v2701 = verf.f32.pop %v2445
        %v2702 = verf.f32.pop %v2446
        %v2703 = verf.f32.pop %v2447
        %v2704 = verf.f32.pop %v2448
        %v2705 = verf.f32.pop %v2449
        %v2706 = verf.f32.pop %v2450
        %v2707 = verf.f32.pop %v2451
        %v2708 = verf.f32.pop %v2452
        %v2709 = verf.f32.pop %v2453
        %v2710 = verf.f32.pop %v2454
        %v2711 = verf.f32.pop %v2455
        %v2712 = verf.f32.pop %v2456
        %v2713 = verf.f32.pop %v2457
        %v2714 = verf.f32.pop %v2458
        %v2715 = verf.f32.pop %v2459
        %v2716 = verf.f32.pop %v2460
        %v2717 = verf.f32.pop %v2461
        %v2718 = verf.f32.pop %v2462
        %v2719 = verf.f32.pop %v2463
        %v2720 = verf.f32.pop %v2464
        %v2721 = verf.f32.pop %v2465
        %v2722 = verf.f32.pop %v2466
        %v2723 = verf.f32.pop %v2467
        %v2724 = verf.f32.pop %v2468
        %v2725 = verf.f32.pop %v2469
        %v2726 = verf.f32.pop %v2470
        %v2727 = verf.f32.pop %v2471
        %v2728 = verf.f32.pop %v2472
        %v2729 = verf.f32.pop %v2473
        %v2730 = verf.f32.pop %v2474
        %v2731 = verf.f32.pop %v2475
        %v2732 = verf.f32.pop %v2476
        %v2733 = verf.f32.pop %v2477
        %v2734 = verf.f32.pop %v2478
        %v2735 = verf.f32.pop %v2479
        %v2736 = verf.f32.pop %v2480
        %v2737 = verf.f32.pop %v2481
        %v2738 = verf.f32.pop %v2482
        %v2739 = verf.f32.pop %v2483
        %v2740 = verf.f32.pop %v2484
        %v2741 = verf.f32.pop %v2485
        %v2742 = verf.f32.pop %v2486
        %v2743 = verf.f32.pop %v2487
        %v2744 = verf.f32.pop %v2488
        %v2745 = verf.f32.pop %v2489
        %v2746 = verf.f32.pop %v2490
        %v2747 = verf.f32.pop %v2491
        %v2748 = verf.f32.pop %v2492
        %v2749 = verf.f32.pop %v2493
        %v2750 = verf.f32.pop %v2494
        %v2751 = verf.f32.pop %v2495
        %v2752 = verf.f32.pop %v2496
        %v2753 = verf.f32.pop %v2497
        %v2754 = verf.f32.pop %v2498
        %v2755 = verf.f32.pop %v2499
        %v2756 = verf.f32.pop %v2500
        %v2757 = verf.f32.pop %v2501
        %v2758 = verf.f32.pop %v2502
        %v2759 = verf.f32.pop %v2503
        %v2760 = verf.f32.pop %v2504
        %v2761 = verf.f32.pop %v2505
        %v2762 = verf.f32.pop %v2506
        %v2763 = verf.f32.pop %v2507
        %v2764 = verf.f32.pop %v2508
        %v2765 = verf.f32.pop %v2509
        %v2766 = verf.f32.pop %v2510
        %v2767 = verf.f32.pop %v2511
        %v2768 = verf.f32.pop %v2512
        %v2769 = verf.f32.pop %v2513
        %v2770 = verf.f32.pop %v2514
        %v2771 = verf.f32.pop %v2515
        %v2772 = verf.f32.pop %v2516
        %v2773 = verf.f32.pop %v2517
        %v2774 = verf.f32.pop %v2518
        %v2775 = verf.f32.pop %v2519
        %v2776 = verf.f32.pop %v2520
        %v2777 = verf.f32.pop %v2521
        %v2778 = verf.f32.pop %v2522
        %v2779 = verf.f32.pop %v2523
        %v2780 = verf.f32.pop %v2524
        %v2781 = verf.f32.pop %v2525
        %v2782 = verf.f32.pop %v2526
        %v2783 = verf.f32.pop %v2527
        %v2784 = verf.f32.pop %v2528
        %v2785 = verf.f32.pop %v2529
        %v2786 = verf.f32.pop %v2530
        %v2787 = verf.f32.pop %v2531
        %v2788 = verf.f32.pop %v2532
        %v2789 = verf.f32.pop %v2533
        %v2790 = verf.f32.pop %v2534
        %v2791 = verf.f32.pop %v2535
        %v2792 = verf.f32.pop %v2536
        %v2793 = verf.f32.pop %v2537
        %v2794 = verf.f32.pop %v2538
        %v2795 = verf.f32.pop %v2539
        %v2796 = verf.f32.pop %v2540
        %v2797 = verf.f32.pop %v2541
        %v2798 = verf.f32.pop %v2542
        %v2799 = verf.f32.pop %v2543
        %v2800 = verf.f32.pop %v2544
        %v2801 = verf.f32.pop %v2545
        %v2802 = verf.f32.pop %v2546
        %v2803 = verf.f32.pop %v2547
        %v2804 = verf.f32.pop %v2548
        %v2805 = verf.f32.pop %v2549
        %v2806 = verf.f32.pop %v2550
        %v2807 = verf.f32.pop %v2551
        %v2808 = verf.f32.pop %v2552
        %v2809 = verf.f32.pop %v2553
        %v2810 = verf.f32.pop %v2554
        %v2811 = verf.f32.pop %v2555
        %v2812 = verf.f32.pop %v2556
        %v2813 = verf.f32.pop %v2557
        %v2814 = verf.f32.pop %v2558
        %v2815 = verf.f32.pop %v2559
        %v2816 = verf.f32.pop %v2560
        %v2817 = verf.f32.pop %v2561
        %v2818 = verf.f32.pop %v2562
        %v2819 = verf.f32.pop %v2563
        %v2820 = verf.f32.pop %v2564
        %v2821 = verf.f32.pop %v2565
        %v2822 = verf.f32.pop %v2566
        %v2823 = verf.f32.pop %v2567
        %v2824 = verf.f32.pop %v2568
        %v2825 = verf.f32.pop %v2569
        %v2826 = verf.f32.pop %v2570
        %v2827 = verf.f32.pop %v2571
        %v2828 = verf.f32.pop %v2572
        %v2829 = verf.f32.pop %v2573
        %v2830 = verf.f32.pop %v2574
        %v2831 = verf.f32.pop %v2575
        %v2832 = verf.f32.pop %v2576
        %v2833 = verf.f32.pop %v2577
        %v2834 = verf.f32.pop %v2578
        %v2835 = verf.f32.pop %v2579
        %v2836 = verf.f32.pop %v2580
        %v2837 = verf.f32.pop %v2581
        %v2838 = verf.f32.pop %v2582
        %v2839 = verf.f32.pop %v2583
        %v2840 = verf.f32.pop %v2584
        %v2841 = verf.f32.pop %v2585
        %v2842 = verf.f32.pop %v2586
        %v2843 = verf.f32.pop %v2587
        %v2844 = verf.f32.pop %v2588
        %v2845 = verf.f32.pop %v2589
        %v2846 = verf.f32.pop %v2590
        %v2847 = verf.f32.pop %v2591
        %v2848 = vadd.f32 %v2592, 1.0
        %v2849 = vadd.f32 %v2593, 1.0
        %v2850 = vadd.f32 %v2594, 1.0
        %v2851 = vadd.f32 %v2595, 1.0
        %v2852 = vadd.f32 %v2596, 1.0
        %v2853 = vadd.f32 %v2597, 1.0
        %v2854 = vadd.f32 %v2598, 1.0
        %v2855 = vadd.f32 %v2599, 1.0
        %v2856 = vadd.f32 %v2600, 1.0
        %v2857 = vadd.f32 %v2601, 1.0
        %v2858 = vadd.f32 %v2602, 1.0
        %v2859 = vadd.f32 %v2603, 1.0
        %v2860 = vadd.f32 %v2604, 1.0
        %v2861 = vadd.f32 %v2605, 1.0
        %v2862 = vadd.f32 %v2606, 1.0
        %v2863 = vadd.f32 %v2607, 1.0
        %v2864 = vadd.f32 %v2608, 1.0
        %v2865 = vadd.f32 %v2609, 1.0
        %v2866 = vadd.f32 %v2610, 1.0
        %v2867 = vadd.f32 %v2611, 1.0
        %v2868 = vadd.f32 %v2612, 1.0
        %v2869 = vadd.f32 %v2613, 1.0
        %v2870 = vadd.f32 %v2614, 1.0
        %v2871 = vadd.f32 %v2615, 1.0
        %v2872 = vadd.f32 %v2616, 1.0
        %v2873 = vadd.f32 %v2617, 1.0
        %v2874 = vadd.f32 %v2618, 1.0
        %v2875 = vadd.f32 %v2619, 1.0
        %v2876 = vadd.f32 %v2620, 1.0
        %v2877 = vadd.f32 %v2621, 1.0
        %v2878 = vadd.f32 %v2622, 1.0
        %v2879 = vadd.f32 %v2623, 1.0
        %v2880 = vadd.f32 %v2624, 1.0
        %v2881 = vadd.f32 %v2625, 1.0
        %v2882 = vadd.f32 %v2626, 1.0
        %v2883 = vadd.f32 %v2627, 1.0
        %v2884 = vadd.f32 %v2628, 1.0
        %v2885 = vadd.f32 %v2629, 1.0
        %v2886 = vadd.f32 %v2630, 1.0
        %v2887 = vadd.f32 %v2631, 1.0
        %v2888 = vadd.f32 %v2632, 1.0
        %v2889 = vadd.f32 %v2633, 1.0
        %v2890 = vadd.f32 %v2634, 1.0
        %v2891 = vadd.f32 %v2635, 1.0
        %v2892 = vadd.f32 %v2636, 1.0
        %v2893 = vadd.f32 %v2637, 1.0
        %v2894 = vadd.f32 %v2638, 1.0
        %v2895 = vadd.f32 %v2639, 1.0
        %v2896 = vadd.f32 %v2640, 1.0
        %v2897 = vadd.f32 %v2641, 1.0
        %v2898 = vadd.f32 %v2642, 1.0
        %v2899 = vadd.f32 %v2643, 1.0
        %v2900 = vadd.f32 %v2644, 1.0
        %v2901 = vadd.f32 %v2645, 1.0
        %v2902 = vadd.f32 %v2646, 1.0
        %v2903 = vadd.f32 %v2647, 1.0
        %v2904 = vadd.f32 %v2648, 1.0
        %v2905 = vadd.f32 %v2649, 1.0
        %v2906 = vadd.f32 %v2650, 1.0
        %v2907 = vadd.f32 %v2651, 1.0
        %v2908 = vadd.f32 %v2652, 1.0
        %v2909 = vadd.f32 %v2653, 1.0
        %v2910 = vadd.f32 %v2654, 1.0
        %v2911 = vadd.f32 %v2655, 1.0
        %v2912 = vadd.f32 %v2656, 1.0
        %v2913 = vadd.f32 %v2657, 1.0
        %v2914 = vadd.f32 %v2658, 1.0
        %v2915 = vadd.f32 %v2659, 1.0
        %v2916 = vadd.f32 %v2660, 1.0
        %v2917 = vadd.f32 %v2661, 1.0
        %v2918 = vadd.f32 %v2662, 1.0
        %v2919 = vadd.f32 %v2663, 1.0
        %v2920 = vadd.f32 %v2664, 1.0
        %v2921 = vadd.f32 %v2665, 1.0
        %v2922 = vadd.f32 %v2666, 1.0
        %v2923 = vadd.f32 %v2667, 1.0
        %v2924 = vadd.f32 %v2668, 1.0
        %v2925 = vadd.f32 %v2669, 1.0
        %v2926 = vadd.f32 %v2670, 1.0
        %v2927 = vadd.f32 %v2671, 1.0
        %v2928 = vadd.f32 %v2672, 1.0
        %v2929 = vadd.f32 %v2673, 1.0
        %v2930 = vadd.f32 %v2674, 1.0
        %v2931 = vadd.f32 %v2675, 1.0
        %v2932 = vadd.f32 %v2676, 1.0
        %v2933 = vadd.f32 %v2677, 1.0
        %v2934 = vadd.f32 %v2678, 1.0
        %v2935 = vadd.f32 %v2679, 1.0
        %v2936 = vadd.f32 %v2680, 1.0
        %v2937 = vadd.f32 %v2681, 1.0
        %v2938 = vadd.f32 %v2682, 1.0
        %v2939 = vadd.f32 %v2683, 1.0
        %v2940 = vadd.f32 %v2684, 1.0
        %v2941 = vadd.f32 %v2685, 1.0
        %v2942 = vadd.f32 %v2686, 1.0
        %v2943 = vadd.f32 %v2687, 1.0
        %v2944 = vadd.f32 %v2688, 1.0
        %v2945 = vadd.f32 %v2689, 1.0
        %v2946 = vadd.f32 %v2690, 1.0
        %v2947 = vadd.f32 %v2691, 1.0
        %v2948 = vadd.f32 %v2692, 1.0
        %v2949 = vadd.f32 %v2693, 1.0
        %v2950 = vadd.f32 %v2694, 1.0
        %v2951 = vadd.f32 %v2695, 1.0
        %v2952 = vadd.f32 %v2696, 1.0
        %v2953 = vadd.f32 %v2697, 1.0
        %v2954 = vadd.f32 %v2698, 1.0
        %v2955 = vadd.f32 %v2699, 1.0
        %v2956 = vadd.f32 %v2700, 1.0
        %v2957 = vadd.f32 %v2701, 1.0
        %v2958 = vadd.f32 %v2702, 1.0
        %v2959 = vadd.f32 %v2703, 1.0
        %v2960 = vadd.f32 %v2704, 1.0
        %v2961 = vadd.f32 %v2705, 1.0
        %v2962 = vadd.f32 %v2706, 1.0
        %v2963 = vadd.f32 %v2707, 1.0
        %v2964 = vadd.f32 %v2708, 1.0
        %v2965 = vadd.f32 %v2709, 1.0
        %v2966 = vadd.f32 %v2710, 1.0
        %v2967 = vadd.f32 %v2711, 1.0
        %v2968 = vadd.f32 %v2712, 1.0
        %v2969 = vadd.f32 %v2713, 1.0
        %v2970 = vadd.f32 %v2714, 1.0
        %v2971 = vadd.f32 %v2715, 1.0
        %v2972 = vadd.f32 %v2716, 1.0
        %v2973 = vadd.f32 %v2717, 1.0
        %v2974 = vadd.f32 %v2718, 1.0
        %v2975 = vadd.f32 %v2719, 1.0
        %v2976 = vadd.f32 %v2720, 1.0
        %v2977 = vadd.f32 %v2721, 1.0
        %v2978 = vadd.f32 %v2722, 1.0
        %v2979 = vadd.f32 %v2723, 1.0
        %v2980 = vadd.f32 %v2724, 1.0
        %v2981 = vadd.f32 %v2725, 1.0
        %v2982 = vadd.f32 %v2726, 1.0
        %v2983 = vadd.f32 %v2727, 1.0
        %v2984 = vadd.f32 %v2728, 1.0
        %v2985 = vadd.f32 %v2729, 1.0
        %v2986 = vadd.f32 %v2730, 1.0
        %v2987 = vadd.f32 %v2731, 1.0
        %v2988 = vadd.f32 %v2732, 1.0
        %v2989 = vadd.f32 %v2733, 1.0
        %v2990 = vadd.f32 %v2734, 1.0
        %v2991 = vadd.f32 %v2735, 1.0
        %v2992 = vadd.f32 %v2736, 1.0
        %v2993 = vadd.f32 %v2737, 1.0
        %v2994 = vadd.f32 %v2738, 1.0
        %v2995 = vadd.f32 %v2739, 1.0
        %v2996 = vadd.f32 %v2740, 1.0
        %v2997 = vadd.f32 %v2741, 1.0
        %v2998 = vadd.f32 %v2742, 1.0
        %v2999 = vadd.f32 %v2743, 1.0
        %v3000 = vadd.f32 %v2744, 1.0
        %v3001 = vadd.f32 %v2745, 1.0
        %v3002 = vadd.f32 %v2746, 1.0
        %v3003 = vadd.f32 %v2747, 1.0
        %v3004 = vadd.f32 %v2748, 1.0
        %v3005 = vadd.f32 %v2749, 1.0
        %v3006 = vadd.f32 %v2750, 1.0
        %v3007 = vadd.f32 %v2751, 1.0
        %v3008 = vadd.f32 %v2752, 1.0
        %v3009 = vadd.f32 %v2753, 1.0
        %v3010 = vadd.f32 %v2754, 1.0
        %v3011 = vadd.f32 %v2755, 1.0
        %v3012 = vadd.f32 %v2756, 1.0
        %v3013 = vadd.f32 %v2757, 1.0
        %v3014 = vadd.f32 %v2758, 1.0
        %v3015 = vadd.f32 %v2759, 1.0
        %v3016 = vadd.f32 %v2760, 1.0
        %v3017 = vadd.f32 %v2761, 1.0
        %v3018 = vadd.f32 %v2762, 1.0
        %v3019 = vadd.f32 %v2763, 1.0
        %v3020 = vadd.f32 %v2764, 1.0
        %v3021 = vadd.f32 %v2765, 1.0
        %v3022 = vadd.f32 %v2766, 1.0
        %v3023 = vadd.f32 %v2767, 1.0
        %v3024 = vadd.f32 %v2768, 1.0
        %v3025 = vadd.f32 %v2769, 1.0
        %v3026 = vadd.f32 %v2770, 1.0
        %v3027 = vadd.f32 %v2771, 1.0
        %v3028 = vadd.f32 %v2772, 1.0
        %v3029 = vadd.f32 %v2773, 1.0
        %v3030 = vadd.f32 %v2774, 1.0
        %v3031 = vadd.f32 %v2775, 1.0
        %v3032 = vadd.f32 %v2776, 1.0
        %v3033 = vadd.f32 %v2777, 1.0
        %v3034 = vadd.f32 %v2778, 1.0
        %v3035 = vadd.f32 %v2779, 1.0
        %v3036 = vadd.f32 %v2780, 1.0
        %v3037 = vadd.f32 %v2781, 1.0
        %v3038 = vadd.f32 %v2782, 1.0
        %v3039 = vadd.f32 %v2783, 1.0
        %v3040 = vadd.f32 %v2784, 1.0
        %v3041 = vadd.f32 %v2785, 1.0
        %v3042 = vadd.f32 %v2786, 1.0
        %v3043 = vadd.f32 %v2787, 1.0
        %v3044 = vadd.f32 %v2788, 1.0
        %v3045 = vadd.f32 %v2789, 1.0
        %v3046 = vadd.f32 %v2790, 1.0
        %v3047 = vadd.f32 %v2791, 1.0
        %v3048 = vadd.f32 %v2792, 1.0
        %v3049 = vadd.f32 %v2793, 1.0
        %v3050 = vadd.f32 %v2794, 1.0
        %v3051 = vadd.f32 %v2795, 1.0
        %v3052 = vadd.f32 %v2796, 1.0
        %v3053 = vadd.f32 %v2797, 1.0
        %v3054 = vadd.f32 %v2798, 1.0
        %v3055 = vadd.f32 %v2799, 1.0
        %v3056 = vadd.f32 %v2800, 1.0
        %v3057 = vadd.f32 %v2801, 1.0
        %v3058 = vadd.f32 %v2802, 1.0
        %v3059 = vadd.f32 %v2803, 1.0
        %v3060 = vadd.f32 %v2804, 1.0
        %v3061 = vadd.f32 %v2805, 1.0
        %v3062 = vadd.f32 %v2806, 1.0
        %v3063 = vadd.f32 %v2807, 1.0
        %v3064 = vadd.f32 %v2808, 1.0
        %v3065 = vadd.f32 %v2809, 1.0
        %v3066 = vadd.f32 %v2810, 1.0
        %v3067 = vadd.f32 %v2811, 1.0
        %v3068 = vadd.f32 %v2812, 1.0
        %v3069 = vadd.f32 %v2813, 1.0
        %v3070 = vadd.f32 %v2814, 1.0
        %v3071 = vadd.f32 %v2815, 1.0
        %v3072 = vadd.f32 %v2816, 1.0
        %v3073 = vadd.f32 %v2817, 1.0
        %v3074 = vadd.f32 %v2818, 1.0
        %v3075 = vadd.f32 %v2819, 1.0
        %v3076 = vadd.f32 %v2820, 1.0
        %v3077 = vadd.f32 %v2821, 1.0
        %v3078 = vadd.f32 %v2822, 1.0
        %v3079 = vadd.f32 %v2823, 1.0
        %v3080 = vadd.f32 %v2824, 1.0
        %v3081 = vadd.f32 %v2825, 1.0
        %v3082 = vadd.f32 %v2826, 1.0
        %v3083 = vadd.f32 %v2827, 1.0
        %v3084 = vadd.f32 %v2828, 1.0
        %v3085 = vadd.f32 %v2829, 1.0
        %v3086 = vadd.f32 %v2830, 1.0
        %v3087 = vadd.f32 %v2831, 1.0
        %v3088 = vadd.f32 %v2832, 1.0
        %v3089 = vadd.f32 %v2833, 1.0
        %v3090 = vadd.f32 %v2834, 1.0
        %v3091 = vadd.f32 %v2835, 1.0
        %v3092 = vadd.f32 %v2836, 1.0
        %v3093 = vadd.f32 %v2837, 1.0
        %v3094 = vadd.f32 %v2838, 1.0
        %v3095 = vadd.f32 %v2839, 1.0
        %v3096 = vadd.f32 %v2840, 1.0
        %v3097 = vadd.f32 %v2841, 1.0
        %v3098 = vadd.f32 %v2842, 1.0
        %v3099 = vadd.f32 %v2843, 1.0
        %v3100 = vadd.f32 %v2844, 1.0
        %v3101 = vadd.f32 %v2845, 1.0
        %v3102 = vadd.f32 %v2846, 1.0
        %v3103 = vadd.f32 %v2847, 1.0
        %v3104 = vmul.f32 %v2080, %v2848
        %v3105 = vmul.f32 %v2081, %v2849
        %v3106 = vmul.f32 %v2082, %v2850
        %v3107 = vmul.f32 %v2083, %v2851
        %v3108 = vmul.f32 %v2084, %v2852
        %v3109 = vmul.f32 %v2085, %v2853
        %v3110 = vmul.f32 %v2086, %v2854
        %v3111 = vmul.f32 %v2087, %v2855
        %v3112 = vmul.f32 %v2088, %v2856
        %v3113 = vmul.f32 %v2089, %v2857
        %v3114 = vmul.f32 %v2090, %v2858
        %v3115 = vmul.f32 %v2091, %v2859
        %v3116 = vmul.f32 %v2092, %v2860
        %v3117 = vmul.f32 %v2093, %v2861
        %v3118 = vmul.f32 %v2094, %v2862
        %v3119 = vmul.f32 %v2095, %v2863
        %v3120 = vmul.f32 %v2096, %v2864
        %v3121 = vmul.f32 %v2097, %v2865
        %v3122 = vmul.f32 %v2098, %v2866
        %v3123 = vmul.f32 %v2099, %v2867
        %v3124 = vmul.f32 %v2100, %v2868
        %v3125 = vmul.f32 %v2101, %v2869
        %v3126 = vmul.f32 %v2102, %v2870
        %v3127 = vmul.f32 %v2103, %v2871
        %v3128 = vmul.f32 %v2104, %v2872
        %v3129 = vmul.f32 %v2105, %v2873
        %v3130 = vmul.f32 %v2106, %v2874
        %v3131 = vmul.f32 %v2107, %v2875
        %v3132 = vmul.f32 %v2108, %v2876
        %v3133 = vmul.f32 %v2109, %v2877
        %v3134 = vmul.f32 %v2110, %v2878
        %v3135 = vmul.f32 %v2111, %v2879
        %v3136 = vmul.f32 %v2112, %v2880
        %v3137 = vmul.f32 %v2113, %v2881
        %v3138 = vmul.f32 %v2114, %v2882
        %v3139 = vmul.f32 %v2115, %v2883
        %v3140 = vmul.f32 %v2116, %v2884
        %v3141 = vmul.f32 %v2117, %v2885
        %v3142 = vmul.f32 %v2118, %v2886
        %v3143 = vmul.f32 %v2119, %v2887
        %v3144 = vmul.f32 %v2120, %v2888
        %v3145 = vmul.f32 %v2121, %v2889
        %v3146 = vmul.f32 %v2122, %v2890
        %v3147 = vmul.f32 %v2123, %v2891
        %v3148 = vmul.f32 %v2124, %v2892
        %v3149 = vmul.f32 %v2125, %v2893
        %v3150 = vmul.f32 %v2126, %v2894
        %v3151 = vmul.f32 %v2127, %v2895
        %v3152 = vmul.f32 %v2128, %v2896
        %v3153 = vmul.f32 %v2129, %v2897
        %v3154 = vmul.f32 %v2130, %v2898
        %v3155 = vmul.f32 %v2131, %v2899
        %v3156 = vmul.f32 %v2132, %v2900
        %v3157 = vmul.f32 %v2133, %v2901
        %v3158 = vmul.f32 %v2134, %v2902
        %v3159 = vmul.f32 %v2135, %v2903
        %v3160 = vmul.f32 %v2136, %v2904
        %v3161 = vmul.f32 %v2137, %v2905
        %v3162 = vmul.f32 %v2138, %v2906
        %v3163 = vmul.f32 %v2139, %v2907
        %v3164 = vmul.f32 %v2140, %v2908
        %v3165 = vmul.f32 %v2141, %v2909
        %v3166 = vmul.f32 %v2142, %v2910
        %v3167 = vmul.f32 %v2143, %v2911
        %v3168 = vmul.f32 %v2144, %v2912
        %v3169 = vmul.f32 %v2145, %v2913
        %v3170 = vmul.f32 %v2146, %v2914
        %v3171 = vmul.f32 %v2147, %v2915
        %v3172 = vmul.f32 %v2148, %v2916
        %v3173 = vmul.f32 %v2149, %v2917
        %v3174 = vmul.f32 %v2150, %v2918
        %v3175 = vmul.f32 %v2151, %v2919
        %v3176 = vmul.f32 %v2152, %v2920
        %v3177 = vmul.f32 %v2153, %v2921
        %v3178 = vmul.f32 %v2154, %v2922
        %v3179 = vmul.f32 %v2155, %v2923
        %v3180 = vmul.f32 %v2156, %v2924
        %v3181 = vmul.f32 %v2157, %v2925
        %v3182 = vmul.f32 %v2158, %v2926
        %v3183 = vmul.f32 %v2159, %v2927
        %v3184 = vmul.f32 %v2160, %v2928
        %v3185 = vmul.f32 %v2161, %v2929
        %v3186 = vmul.f32 %v2162, %v2930
        %v3187 = vmul.f32 %v2163, %v2931
        %v3188 = vmul.f32 %v2164, %v2932
        %v3189 = vmul.f32 %v2165, %v2933
        %v3190 = vmul.f32 %v2166, %v2934
        %v3191 = vmul.f32 %v2167, %v2935
        %v3192 = vmul.f32 %v2168, %v2936
        %v3193 = vmul.f32 %v2169, %v2937
        %v3194 = vmul.f32 %v2170, %v2938
        %v3195 = vmul.f32 %v2171, %v2939
        %v3196 = vmul.f32 %v2172, %v2940
        %v3197 = vmul.f32 %v2173, %v2941
        %v3198 = vmul.f32 %v2174, %v2942
        %v3199 = vmul.f32 %v2175, %v2943
        %v3200 = vmul.f32 %v2176, %v2944
        %v3201 = vmul.f32 %v2177, %v2945
        %v3202 = vmul.f32 %v2178, %v2946
        %v3203 = vmul.f32 %v2179, %v2947
        %v3204 = vmul.f32 %v2180, %v2948
        %v3205 = vmul.f32 %v2181, %v2949
        %v3206 = vmul.f32 %v2182, %v2950
        %v3207 = vmul.f32 %v2183, %v2951
        %v3208 = vmul.f32 %v2184, %v2952
        %v3209 = vmul.f32 %v2185, %v2953
        %v3210 = vmul.f32 %v2186, %v2954
        %v3211 = vmul.f32 %v2187, %v2955
        %v3212 = vmul.f32 %v2188, %v2956
        %v3213 = vmul.f32 %v2189, %v2957
        %v3214 = vmul.f32 %v2190, %v2958
        %v3215 = vmul.f32 %v2191, %v2959
        %v3216 = vmul.f32 %v2192, %v2960
        %v3217 = vmul.f32 %v2193, %v2961
        %v3218 = vmul.f32 %v2194, %v2962
        %v3219 = vmul.f32 %v2195, %v2963
        %v3220 = vmul.f32 %v2196, %v2964
        %v3221 = vmul.f32 %v2197, %v2965
        %v3222 = vmul.f32 %v2198, %v2966
        %v3223 = vmul.f32 %v2199, %v2967
        %v3224 = vmul.f32 %v2200, %v2968
        %v3225 = vmul.f32 %v2201, %v2969
        %v3226 = vmul.f32 %v2202, %v2970
        %v3227 = vmul.f32 %v2203, %v2971
        %v3228 = vmul.f32 %v2204, %v2972
        %v3229 = vmul.f32 %v2205, %v2973
        %v3230 = vmul.f32 %v2206, %v2974
        %v3231 = vmul.f32 %v2207, %v2975
        %v3232 = vmul.f32 %v2208, %v2976
        %v3233 = vmul.f32 %v2209, %v2977
        %v3234 = vmul.f32 %v2210, %v2978
        %v3235 = vmul.f32 %v2211, %v2979
        %v3236 = vmul.f32 %v2212, %v2980
        %v3237 = vmul.f32 %v2213, %v2981
        %v3238 = vmul.f32 %v2214, %v2982
        %v3239 = vmul.f32 %v2215, %v2983
        %v3240 = vmul.f32 %v2216, %v2984
        %v3241 = vmul.f32 %v2217, %v2985
        %v3242 = vmul.f32 %v2218, %v2986
        %v3243 = vmul.f32 %v2219, %v2987
        %v3244 = vmul.f32 %v2220, %v2988
        %v3245 = vmul.f32 %v2221, %v2989
        %v3246 = vmul.f32 %v2222, %v2990
        %v3247 = vmul.f32 %v2223, %v2991
        %v3248 = vmul.f32 %v2224, %v2992
        %v3249 = vmul.f32 %v2225, %v2993
        %v3250 = vmul.f32 %v2226, %v2994
        %v3251 = vmul.f32 %v2227, %v2995
        %v3252 = vmul.f32 %v2228, %v2996
        %v3253 = vmul.f32 %v2229, %v2997
        %v3254 = vmul.f32 %v2230, %v2998
        %v3255 = vmul.f32 %v2231, %v2999
        %v3256 = vmul.f32 %v2232, %v3000
        %v3257 = vmul.f32 %v2233, %v3001
        %v3258 = vmul.f32 %v2234, %v3002
        %v3259 = vmul.f32 %v2235, %v3003
        %v3260 = vmul.f32 %v2236, %v3004
        %v3261 = vmul.f32 %v2237, %v3005
        %v3262 = vmul.f32 %v2238, %v3006
        %v3263 = vmul.f32 %v2239, %v3007
        %v3264 = vmul.f32 %v2240, %v3008
        %v3265 = vmul.f32 %v2241, %v3009
        %v3266 = vmul.f32 %v2242, %v3010
        %v3267 = vmul.f32 %v2243, %v3011
        %v3268 = vmul.f32 %v2244, %v3012
        %v3269 = vmul.f32 %v2245, %v3013
        %v3270 = vmul.f32 %v2246, %v3014
        %v3271 = vmul.f32 %v2247, %v3015
        %v3272 = vmul.f32 %v2248, %v3016
        %v3273 = vmul.f32 %v2249, %v3017
        %v3274 = vmul.f32 %v2250, %v3018
        %v3275 = vmul.f32 %v2251, %v3019
        %v3276 = vmul.f32 %v2252, %v3020
        %v3277 = vmul.f32 %v2253, %v3021
        %v3278 = vmul.f32 %v2254, %v3022
        %v3279 = vmul.f32 %v2255, %v3023
        %v3280 = vmul.f32 %v2256, %v3024
        %v3281 = vmul.f32 %v2257, %v3025
        %v3282 = vmul.f32 %v2258, %v3026
        %v3283 = vmul.f32 %v2259, %v3027
        %v3284 = vmul.f32 %v2260, %v3028
        %v3285 = vmul.f32 %v2261, %v3029
        %v3286 = vmul.f32 %v2262, %v3030
        %v3287 = vmul.f32 %v2263, %v3031
        %v3288 = vmul.f32 %v2264, %v3032
        %v3289 = vmul.f32 %v2265, %v3033
        %v3290 = vmul.f32 %v2266, %v3034
        %v3291 = vmul.f32 %v2267, %v3035
        %v3292 = vmul.f32 %v2268, %v3036
        %v3293 = vmul.f32 %v2269, %v3037
        %v3294 = vmul.f32 %v2270, %v3038
        %v3295 = vmul.f32 %v2271, %v3039
        %v3296 = vmul.f32 %v2272, %v3040
        %v3297 = vmul.f32 %v2273, %v3041
        %v3298 = vmul.f32 %v2274, %v3042
        %v3299 = vmul.f32 %v2275, %v3043
        %v3300 = vmul.f32 %v2276, %v3044
        %v3301 = vmul.f32 %v2277, %v3045
        %v3302 = vmul.f32 %v2278, %v3046
        %v3303 = vmul.f32 %v2279, %v3047
        %v3304 = vmul.f32 %v2280, %v3048
        %v3305 = vmul.f32 %v2281, %v3049
        %v3306 = vmul.f32 %v2282, %v3050
        %v3307 = vmul.f32 %v2283, %v3051
        %v3308 = vmul.f32 %v2284, %v3052
        %v3309 = vmul.f32 %v2285, %v3053
        %v3310 = vmul.f32 %v2286, %v3054
        %v3311 = vmul.f32 %v2287, %v3055
        %v3312 = vmul.f32 %v2288, %v3056
        %v3313 = vmul.f32 %v2289, %v3057
        %v3314 = vmul.f32 %v2290, %v3058
        %v3315 = vmul.f32 %v2291, %v3059
        %v3316 = vmul.f32 %v2292, %v3060
        %v3317 = vmul.f32 %v2293, %v3061
        %v3318 = vmul.f32 %v2294, %v3062
        %v3319 = vmul.f32 %v2295, %v3063
        %v3320 = vmul.f32 %v2296, %v3064
        %v3321 = vmul.f32 %v2297, %v3065
        %v3322 = vmul.f32 %v2298, %v3066
        %v3323 = vmul.f32 %v2299, %v3067
        %v3324 = vmul.f32 %v2300, %v3068
        %v3325 = vmul.f32 %v2301, %v3069
        %v3326 = vmul.f32 %v2302, %v3070
        %v3327 = vmul.f32 %v2303, %v3071
        %v3328 = vmul.f32 %v2304, %v3072
        %v3329 = vmul.f32 %v2305, %v3073
        %v3330 = vmul.f32 %v2306, %v3074
        %v3331 = vmul.f32 %v2307, %v3075
        %v3332 = vmul.f32 %v2308, %v3076
        %v3333 = vmul.f32 %v2309, %v3077
        %v3334 = vmul.f32 %v2310, %v3078
        %v3335 = vmul.f32 %v2311, %v3079
        %v3336 = vmul.f32 %v2312, %v3080
        %v3337 = vmul.f32 %v2313, %v3081
        %v3338 = vmul.f32 %v2314, %v3082
        %v3339 = vmul.f32 %v2315, %v3083
        %v3340 = vmul.f32 %v2316, %v3084
        %v3341 = vmul.f32 %v2317, %v3085
        %v3342 = vmul.f32 %v2318, %v3086
        %v3343 = vmul.f32 %v2319, %v3087
        %v3344 = vmul.f32 %v2320, %v3088
        %v3345 = vmul.f32 %v2321, %v3089
        %v3346 = vmul.f32 %v2322, %v3090
        %v3347 = vmul.f32 %v2323, %v3091
        %v3348 = vmul.f32 %v2324, %v3092
        %v3349 = vmul.f32 %v2325, %v3093
        %v3350 = vmul.f32 %v2326, %v3094
        %v3351 = vmul.f32 %v2327, %v3095
        %v3352 = vmul.f32 %v2328, %v3096
        %v3353 = vmul.f32 %v2329, %v3097
        %v3354 = vmul.f32 %v2330, %v3098
        %v3355 = vmul.f32 %v2331, %v3099
        %v3356 = vmul.f32 %v2332, %v3100
        %v3357 = vmul.f32 %v2333, %v3101
        %v3358 = vmul.f32 %v2334, %v3102
        %v3359 = vmul.f32 %v2335, %v3103
        %v3360 = vld [vmem:[#allocation2] sm:$0xff]
        %v3361 = vld [vmem:[#allocation2 + $0x8] sm:$0xff]
        %v3362 = vld [vmem:[#allocation2 + $0x10] sm:$0xff]
        %v3363 = vld [vmem:[#allocation2 + $0x18] sm:$0xff]
        %v3364 = vld [vmem:[#allocation2 + $0x20] sm:$0xff]
        %v3365 = vld [vmem:[#allocation2 + $0x28] sm:$0xff]
        %v3366 = vld [vmem:[#allocation2 + $0x30] sm:$0xff]
        %v3367 = vld [vmem:[#allocation2 + $0x38] sm:$0xff]
        %v3368 = vld [vmem:[#allocation2 + $0x40] sm:$0xff]
        %v3369 = vld [vmem:[#allocation2 + $0x48] sm:$0xff]
        %v3370 = vld [vmem:[#allocation2 + $0x50] sm:$0xff]
        %v3371 = vld [vmem:[#allocation2 + $0x58] sm:$0xff]
        %v3372 = vld [vmem:[#allocation2 + $0x60] sm:$0xff]
        %v3373 = vld [vmem:[#allocation2 + $0x68] sm:$0xff]
        %v3374 = vld [vmem:[#allocation2 + $0x70] sm:$0xff]
        %v3375 = vld [vmem:[#allocation2 + $0x78] sm:$0xff]
        %v3376 = vld [vmem:[#allocation2 + $0x80] sm:$0xff]
        %v3377 = vld [vmem:[#allocation2 + $0x88] sm:$0xff]
        %v3378 = vld [vmem:[#allocation2 + $0x90] sm:$0xff]
        %v3379 = vld [vmem:[#allocation2 + $0x98] sm:$0xff]
        %v3380 = vld [vmem:[#allocation2 + $0xa0] sm:$0xff]
        %v3381 = vld [vmem:[#allocation2 + $0xa8] sm:$0xff]
        %v3382 = vld [vmem:[#allocation2 + $0xb0] sm:$0xff]
        %v3383 = vld [vmem:[#allocation2 + $0xb8] sm:$0xff]
        %v3384 = vld [vmem:[#allocation2 + $0xc0] sm:$0xff]
        %v3385 = vld [vmem:[#allocation2 + $0xc8] sm:$0xff]
        %v3386 = vld [vmem:[#allocation2 + $0xd0] sm:$0xff]
        %v3387 = vld [vmem:[#allocation2 + $0xd8] sm:$0xff]
        %v3388 = vld [vmem:[#allocation2 + $0xe0] sm:$0xff]
        %v3389 = vld [vmem:[#allocation2 + $0xe8] sm:$0xff]
        %v3390 = vld [vmem:[#allocation2 + $0xf0] sm:$0xff]
        %v3391 = vld [vmem:[#allocation2 + $0xf8] sm:$0xff]
        %v3392 = vld [vmem:[#allocation2 + $0x100] sm:$0xff]
        %v3393 = vld [vmem:[#allocation2 + $0x108] sm:$0xff]
        %v3394 = vld [vmem:[#allocation2 + $0x110] sm:$0xff]
        %v3395 = vld [vmem:[#allocation2 + $0x118] sm:$0xff]
        %v3396 = vld [vmem:[#allocation2 + $0x120] sm:$0xff]
        %v3397 = vld [vmem:[#allocation2 + $0x128] sm:$0xff]
        %v3398 = vld [vmem:[#allocation2 + $0x130] sm:$0xff]
        %v3399 = vld [vmem:[#allocation2 + $0x138] sm:$0xff]
        %v3400 = vld [vmem:[#allocation2 + $0x140] sm:$0xff]
        %v3401 = vld [vmem:[#allocation2 + $0x148] sm:$0xff]
        %v3402 = vld [vmem:[#allocation2 + $0x150] sm:$0xff]
        %v3403 = vld [vmem:[#allocation2 + $0x158] sm:$0xff]
        %v3404 = vld [vmem:[#allocation2 + $0x160] sm:$0xff]
        %v3405 = vld [vmem:[#allocation2 + $0x168] sm:$0xff]
        %v3406 = vld [vmem:[#allocation2 + $0x170] sm:$0xff]
        %v3407 = vld [vmem:[#allocation2 + $0x178] sm:$0xff]
        %v3408 = vld [vmem:[#allocation2 + $0x180] sm:$0xff]
        %v3409 = vld [vmem:[#allocation2 + $0x188] sm:$0xff]
        %v3410 = vld [vmem:[#allocation2 + $0x190] sm:$0xff]
        %v3411 = vld [vmem:[#allocation2 + $0x198] sm:$0xff]
        %v3412 = vld [vmem:[#allocation2 + $0x1a0] sm:$0xff]
        %v3413 = vld [vmem:[#allocation2 + $0x1a8] sm:$0xff]
        %v3414 = vld [vmem:[#allocation2 + $0x1b0] sm:$0xff]
        %v3415 = vld [vmem:[#allocation2 + $0x1b8] sm:$0xff]
        %v3416 = vld [vmem:[#allocation2 + $0x1c0] sm:$0xff]
        %v3417 = vld [vmem:[#allocation2 + $0x1c8] sm:$0xff]
        %v3418 = vld [vmem:[#allocation2 + $0x1d0] sm:$0xff]
        %v3419 = vld [vmem:[#allocation2 + $0x1d8] sm:$0xff]
        %v3420 = vld [vmem:[#allocation2 + $0x1e0] sm:$0xff]
        %v3421 = vld [vmem:[#allocation2 + $0x1e8] sm:$0xff]
        %v3422 = vld [vmem:[#allocation2 + $0x1f0] sm:$0xff]
        %v3423 = vld [vmem:[#allocation2 + $0x1f8] sm:$0xff]
        %v3424 = vld [vmem:[#allocation2 + $0x200] sm:$0xff]
        %v3425 = vld [vmem:[#allocation2 + $0x208] sm:$0xff]
        %v3426 = vld [vmem:[#allocation2 + $0x210] sm:$0xff]
        %v3427 = vld [vmem:[#allocation2 + $0x218] sm:$0xff]
        %v3428 = vld [vmem:[#allocation2 + $0x220] sm:$0xff]
        %v3429 = vld [vmem:[#allocation2 + $0x228] sm:$0xff]
        %v3430 = vld [vmem:[#allocation2 + $0x230] sm:$0xff]
        %v3431 = vld [vmem:[#allocation2 + $0x238] sm:$0xff]
        %v3432 = vld [vmem:[#allocation2 + $0x240] sm:$0xff]
        %v3433 = vld [vmem:[#allocation2 + $0x248] sm:$0xff]
        %v3434 = vld [vmem:[#allocation2 + $0x250] sm:$0xff]
        %v3435 = vld [vmem:[#allocation2 + $0x258] sm:$0xff]
        %v3436 = vld [vmem:[#allocation2 + $0x260] sm:$0xff]
        %v3437 = vld [vmem:[#allocation2 + $0x268] sm:$0xff]
        %v3438 = vld [vmem:[#allocation2 + $0x270] sm:$0xff]
        %v3439 = vld [vmem:[#allocation2 + $0x278] sm:$0xff]
        %v3440 = vld [vmem:[#allocation2 + $0x280] sm:$0xff]
        %v3441 = vld [vmem:[#allocation2 + $0x288] sm:$0xff]
        %v3442 = vld [vmem:[#allocation2 + $0x290] sm:$0xff]
        %v3443 = vld [vmem:[#allocation2 + $0x298] sm:$0xff]
        %v3444 = vld [vmem:[#allocation2 + $0x2a0] sm:$0xff]
        %v3445 = vld [vmem:[#allocation2 + $0x2a8] sm:$0xff]
        %v3446 = vld [vmem:[#allocation2 + $0x2b0] sm:$0xff]
        %v3447 = vld [vmem:[#allocation2 + $0x2b8] sm:$0xff]
        %v3448 = vld [vmem:[#allocation2 + $0x2c0] sm:$0xff]
        %v3449 = vld [vmem:[#allocation2 + $0x2c8] sm:$0xff]
        %v3450 = vld [vmem:[#allocation2 + $0x2d0] sm:$0xff]
        %v3451 = vld [vmem:[#allocation2 + $0x2d8] sm:$0xff]
        %v3452 = vld [vmem:[#allocation2 + $0x2e0] sm:$0xff]
        %v3453 = vld [vmem:[#allocation2 + $0x2e8] sm:$0xff]
        %v3454 = vld [vmem:[#allocation2 + $0x2f0] sm:$0xff]
        %v3455 = vld [vmem:[#allocation2 + $0x2f8] sm:$0xff]
        %v3456 = vld [vmem:[#allocation2 + $0x300] sm:$0xff]
        %v3457 = vld [vmem:[#allocation2 + $0x308] sm:$0xff]
        %v3458 = vld [vmem:[#allocation2 + $0x310] sm:$0xff]
        %v3459 = vld [vmem:[#allocation2 + $0x318] sm:$0xff]
        %v3460 = vld [vmem:[#allocation2 + $0x320] sm:$0xff]
        %v3461 = vld [vmem:[#allocation2 + $0x328] sm:$0xff]
        %v3462 = vld [vmem:[#allocation2 + $0x330] sm:$0xff]
        %v3463 = vld [vmem:[#allocation2 + $0x338] sm:$0xff]
        %v3464 = vld [vmem:[#allocation2 + $0x340] sm:$0xff]
        %v3465 = vld [vmem:[#allocation2 + $0x348] sm:$0xff]
        %v3466 = vld [vmem:[#allocation2 + $0x350] sm:$0xff]
        %v3467 = vld [vmem:[#allocation2 + $0x358] sm:$0xff]
        %v3468 = vld [vmem:[#allocation2 + $0x360] sm:$0xff]
        %v3469 = vld [vmem:[#allocation2 + $0x368] sm:$0xff]
        %v3470 = vld [vmem:[#allocation2 + $0x370] sm:$0xff]
        %v3471 = vld [vmem:[#allocation2 + $0x378] sm:$0xff]
        %v3472 = vld [vmem:[#allocation2 + $0x380] sm:$0xff]
        %v3473 = vld [vmem:[#allocation2 + $0x388] sm:$0xff]
        %v3474 = vld [vmem:[#allocation2 + $0x390] sm:$0xff]
        %v3475 = vld [vmem:[#allocation2 + $0x398] sm:$0xff]
        %v3476 = vld [vmem:[#allocation2 + $0x3a0] sm:$0xff]
        %v3477 = vld [vmem:[#allocation2 + $0x3a8] sm:$0xff]
        %v3478 = vld [vmem:[#allocation2 + $0x3b0] sm:$0xff]
        %v3479 = vld [vmem:[#allocation2 + $0x3b8] sm:$0xff]
        %v3480 = vld [vmem:[#allocation2 + $0x3c0] sm:$0xff]
        %v3481 = vld [vmem:[#allocation2 + $0x3c8] sm:$0xff]
        %v3482 = vld [vmem:[#allocation2 + $0x3d0] sm:$0xff]
        %v3483 = vld [vmem:[#allocation2 + $0x3d8] sm:$0xff]
        %v3484 = vld [vmem:[#allocation2 + $0x3e0] sm:$0xff]
        %v3485 = vld [vmem:[#allocation2 + $0x3e8] sm:$0xff]
        %v3486 = vld [vmem:[#allocation2 + $0x3f0] sm:$0xff]
        %v3487 = vld [vmem:[#allocation2 + $0x3f8] sm:$0xff]
        %v3488 = vpack.c.bf16 %v3108, %v3104
        %v3489 = vpack.c.bf16 %v3109, %v3105
        %v3490 = vpack.c.bf16 %v3110, %v3106
        %v3491 = vpack.c.bf16 %v3111, %v3107
        %v3492 = vpack.c.bf16 %v3116, %v3112
        %v3493 = vpack.c.bf16 %v3117, %v3113
        %v3494 = vpack.c.bf16 %v3118, %v3114
        %v3495 = vpack.c.bf16 %v3119, %v3115
        %v3496 = vpack.c.bf16 %v3124, %v3120
        %v3497 = vpack.c.bf16 %v3125, %v3121
        %v3498 = vpack.c.bf16 %v3126, %v3122
        %v3499 = vpack.c.bf16 %v3127, %v3123
        %v3500 = vpack.c.bf16 %v3132, %v3128
        %v3501 = vpack.c.bf16 %v3133, %v3129
        %v3502 = vpack.c.bf16 %v3134, %v3130
        %v3503 = vpack.c.bf16 %v3135, %v3131
        %v3504 = vpack.c.bf16 %v3140, %v3136
        %v3505 = vpack.c.bf16 %v3141, %v3137
        %v3506 = vpack.c.bf16 %v3142, %v3138
        %v3507 = vpack.c.bf16 %v3143, %v3139
        %v3508 = vpack.c.bf16 %v3148, %v3144
        %v3509 = vpack.c.bf16 %v3149, %v3145
        %v3510 = vpack.c.bf16 %v3150, %v3146
        %v3511 = vpack.c.bf16 %v3151, %v3147
        %v3512 = vpack.c.bf16 %v3156, %v3152
        %v3513 = vpack.c.bf16 %v3157, %v3153
        %v3514 = vpack.c.bf16 %v3158, %v3154
        %v3515 = vpack.c.bf16 %v3159, %v3155
        %v3516 = vpack.c.bf16 %v3164, %v3160
        %v3517 = vpack.c.bf16 %v3165, %v3161
        %v3518 = vpack.c.bf16 %v3166, %v3162
        %v3519 = vpack.c.bf16 %v3167, %v3163
        %v3520 = vpack.c.bf16 %v3172, %v3168
        %v3521 = vpack.c.bf16 %v3173, %v3169
        %v3522 = vpack.c.bf16 %v3174, %v3170
        %v3523 = vpack.c.bf16 %v3175, %v3171
        %v3524 = vpack.c.bf16 %v3180, %v3176
        %v3525 = vpack.c.bf16 %v3181, %v3177
        %v3526 = vpack.c.bf16 %v3182, %v3178
        %v3527 = vpack.c.bf16 %v3183, %v3179
        %v3528 = vpack.c.bf16 %v3188, %v3184
        %v3529 = vpack.c.bf16 %v3189, %v3185
        %v3530 = vpack.c.bf16 %v3190, %v3186
        %v3531 = vpack.c.bf16 %v3191, %v3187
        %v3532 = vpack.c.bf16 %v3196, %v3192
        %v3533 = vpack.c.bf16 %v3197, %v3193
        %v3534 = vpack.c.bf16 %v3198, %v3194
        %v3535 = vpack.c.bf16 %v3199, %v3195
        %v3536 = vpack.c.bf16 %v3204, %v3200
        %v3537 = vpack.c.bf16 %v3205, %v3201
        %v3538 = vpack.c.bf16 %v3206, %v3202
        %v3539 = vpack.c.bf16 %v3207, %v3203
        %v3540 = vpack.c.bf16 %v3212, %v3208
        %v3541 = vpack.c.bf16 %v3213, %v3209
        %v3542 = vpack.c.bf16 %v3214, %v3210
        %v3543 = vpack.c.bf16 %v3215, %v3211
        %v3544 = vpack.c.bf16 %v3220, %v3216
        %v3545 = vpack.c.bf16 %v3221, %v3217
        %v3546 = vpack.c.bf16 %v3222, %v3218
        %v3547 = vpack.c.bf16 %v3223, %v3219
        %v3548 = vpack.c.bf16 %v3228, %v3224
        %v3549 = vpack.c.bf16 %v3229, %v3225
        %v3550 = vpack.c.bf16 %v3230, %v3226
        %v3551 = vpack.c.bf16 %v3231, %v3227
        %v3552 = vpack.c.bf16 %v3236, %v3232
        %v3553 = vpack.c.bf16 %v3237, %v3233
        %v3554 = vpack.c.bf16 %v3238, %v3234
        %v3555 = vpack.c.bf16 %v3239, %v3235
        %v3556 = vpack.c.bf16 %v3244, %v3240
        %v3557 = vpack.c.bf16 %v3245, %v3241
        %v3558 = vpack.c.bf16 %v3246, %v3242
        %v3559 = vpack.c.bf16 %v3247, %v3243
        %v3560 = vpack.c.bf16 %v3252, %v3248
        %v3561 = vpack.c.bf16 %v3253, %v3249
        %v3562 = vpack.c.bf16 %v3254, %v3250
        %v3563 = vpack.c.bf16 %v3255, %v3251
        %v3564 = vpack.c.bf16 %v3260, %v3256
        %v3565 = vpack.c.bf16 %v3261, %v3257
        %v3566 = vpack.c.bf16 %v3262, %v3258
        %v3567 = vpack.c.bf16 %v3263, %v3259
        %v3568 = vpack.c.bf16 %v3268, %v3264
        %v3569 = vpack.c.bf16 %v3269, %v3265
        %v3570 = vpack.c.bf16 %v3270, %v3266
        %v3571 = vpack.c.bf16 %v3271, %v3267
        %v3572 = vpack.c.bf16 %v3276, %v3272
        %v3573 = vpack.c.bf16 %v3277, %v3273
        %v3574 = vpack.c.bf16 %v3278, %v3274
        %v3575 = vpack.c.bf16 %v3279, %v3275
        %v3576 = vpack.c.bf16 %v3284, %v3280
        %v3577 = vpack.c.bf16 %v3285, %v3281
        %v3578 = vpack.c.bf16 %v3286, %v3282
        %v3579 = vpack.c.bf16 %v3287, %v3283
        %v3580 = vpack.c.bf16 %v3292, %v3288
        %v3581 = vpack.c.bf16 %v3293, %v3289
        %v3582 = vpack.c.bf16 %v3294, %v3290
        %v3583 = vpack.c.bf16 %v3295, %v3291
        %v3584 = vpack.c.bf16 %v3300, %v3296
        %v3585 = vpack.c.bf16 %v3301, %v3297
        %v3586 = vpack.c.bf16 %v3302, %v3298
        %v3587 = vpack.c.bf16 %v3303, %v3299
        %v3588 = vpack.c.bf16 %v3308, %v3304
        %v3589 = vpack.c.bf16 %v3309, %v3305
        %v3590 = vpack.c.bf16 %v3310, %v3306
        %v3591 = vpack.c.bf16 %v3311, %v3307
        %v3592 = vpack.c.bf16 %v3316, %v3312
        %v3593 = vpack.c.bf16 %v3317, %v3313
        %v3594 = vpack.c.bf16 %v3318, %v3314
        %v3595 = vpack.c.bf16 %v3319, %v3315
        %v3596 = vpack.c.bf16 %v3324, %v3320
        %v3597 = vpack.c.bf16 %v3325, %v3321
        %v3598 = vpack.c.bf16 %v3326, %v3322
        %v3599 = vpack.c.bf16 %v3327, %v3323
        %v3600 = vpack.c.bf16 %v3332, %v3328
        %v3601 = vpack.c.bf16 %v3333, %v3329
        %v3602 = vpack.c.bf16 %v3334, %v3330
        %v3603 = vpack.c.bf16 %v3335, %v3331
        %v3604 = vpack.c.bf16 %v3340, %v3336
        %v3605 = vpack.c.bf16 %v3341, %v3337
        %v3606 = vpack.c.bf16 %v3342, %v3338
        %v3607 = vpack.c.bf16 %v3343, %v3339
        %v3608 = vpack.c.bf16 %v3348, %v3344
        %v3609 = vpack.c.bf16 %v3349, %v3345
        %v3610 = vpack.c.bf16 %v3350, %v3346
        %v3611 = vpack.c.bf16 %v3351, %v3347
        %v3612 = vpack.c.bf16 %v3356, %v3352
        %v3613 = vpack.c.bf16 %v3357, %v3353
        %v3614 = vpack.c.bf16 %v3358, %v3354
        %v3615 = vpack.c.bf16 %v3359, %v3355
        %v3616 = vld [vmem:[%s449] sm:$0xff]
        %v3617 = vld [vmem:[%s449 + $0x8] sm:$0xff]
        %v3618 = vld [vmem:[%s449 + $0x10] sm:$0xff]
        %v3619 = vld [vmem:[%s449 + $0x18] sm:$0xff]
        %v3620 = vld [vmem:[%s449 + $0x20] sm:$0xff]
        %v3621 = vld [vmem:[%s449 + $0x28] sm:$0xff]
        %v3622 = vld [vmem:[%s449 + $0x30] sm:$0xff]
        %v3623 = vld [vmem:[%s449 + $0x38] sm:$0xff]
        %v3624 = vld [vmem:[%s449 + $0x40] sm:$0xff]
        %v3625 = vld [vmem:[%s449 + $0x48] sm:$0xff]
        %v3626 = vld [vmem:[%s449 + $0x50] sm:$0xff]
        %v3627 = vld [vmem:[%s449 + $0x58] sm:$0xff]
        %v3628 = vld [vmem:[%s449 + $0x60] sm:$0xff]
        %v3629 = vld [vmem:[%s449 + $0x68] sm:$0xff]
        %v3630 = vld [vmem:[%s449 + $0x70] sm:$0xff]
        %v3631 = vld [vmem:[%s449 + $0x78] sm:$0xff]
        %v3632 = vld [vmem:[%s449 + $0x80] sm:$0xff]
        %v3633 = vld [vmem:[%s449 + $0x88] sm:$0xff]
        %v3634 = vld [vmem:[%s449 + $0x90] sm:$0xff]
        %v3635 = vld [vmem:[%s449 + $0x98] sm:$0xff]
        %v3636 = vld [vmem:[%s449 + $0xa0] sm:$0xff]
        %v3637 = vld [vmem:[%s449 + $0xa8] sm:$0xff]
        %v3638 = vld [vmem:[%s449 + $0xb0] sm:$0xff]
        %v3639 = vld [vmem:[%s449 + $0xb8] sm:$0xff]
        %v3640 = vld [vmem:[%s449 + $0xc0] sm:$0xff]
        %v3641 = vld [vmem:[%s449 + $0xc8] sm:$0xff]
        %v3642 = vld [vmem:[%s449 + $0xd0] sm:$0xff]
        %v3643 = vld [vmem:[%s449 + $0xd8] sm:$0xff]
        %v3644 = vld [vmem:[%s449 + $0xe0] sm:$0xff]
        %v3645 = vld [vmem:[%s449 + $0xe8] sm:$0xff]
        %v3646 = vld [vmem:[%s449 + $0xf0] sm:$0xff]
        %v3647 = vld [vmem:[%s449 + $0xf8] sm:$0xff]
        %v3648 = vld [vmem:[%s449 + $0x100] sm:$0xff]
        %v3649 = vld [vmem:[%s449 + $0x108] sm:$0xff]
        %v3650 = vld [vmem:[%s449 + $0x110] sm:$0xff]
        %v3651 = vld [vmem:[%s449 + $0x118] sm:$0xff]
        %v3652 = vld [vmem:[%s449 + $0x120] sm:$0xff]
        %v3653 = vld [vmem:[%s449 + $0x128] sm:$0xff]
        %v3654 = vld [vmem:[%s449 + $0x130] sm:$0xff]
        %v3655 = vld [vmem:[%s449 + $0x138] sm:$0xff]
        %v3656 = vld [vmem:[%s449 + $0x140] sm:$0xff]
        %v3657 = vld [vmem:[%s449 + $0x148] sm:$0xff]
        %v3658 = vld [vmem:[%s449 + $0x150] sm:$0xff]
        %v3659 = vld [vmem:[%s449 + $0x158] sm:$0xff]
        %v3660 = vld [vmem:[%s449 + $0x160] sm:$0xff]
        %v3661 = vld [vmem:[%s449 + $0x168] sm:$0xff]
        %v3662 = vld [vmem:[%s449 + $0x170] sm:$0xff]
        %v3663 = vld [vmem:[%s449 + $0x178] sm:$0xff]
        %v3664 = vld [vmem:[%s449 + $0x180] sm:$0xff]
        %v3665 = vld [vmem:[%s449 + $0x188] sm:$0xff]
        %v3666 = vld [vmem:[%s449 + $0x190] sm:$0xff]
        %v3667 = vld [vmem:[%s449 + $0x198] sm:$0xff]
        %v3668 = vld [vmem:[%s449 + $0x1a0] sm:$0xff]
        %v3669 = vld [vmem:[%s449 + $0x1a8] sm:$0xff]
        %v3670 = vld [vmem:[%s449 + $0x1b0] sm:$0xff]
        %v3671 = vld [vmem:[%s449 + $0x1b8] sm:$0xff]
        %v3672 = vld [vmem:[%s449 + $0x1c0] sm:$0xff]
        %v3673 = vld [vmem:[%s449 + $0x1c8] sm:$0xff]
        %v3674 = vld [vmem:[%s449 + $0x1d0] sm:$0xff]
        %v3675 = vld [vmem:[%s449 + $0x1d8] sm:$0xff]
        %v3676 = vld [vmem:[%s449 + $0x1e0] sm:$0xff]
        %v3677 = vld [vmem:[%s449 + $0x1e8] sm:$0xff]
        %v3678 = vld [vmem:[%s449 + $0x1f0] sm:$0xff]
        %v3679 = vld [vmem:[%s449 + $0x1f8] sm:$0xff]
        %v3744 = vunpack.c.l.b16 %v3616
        %v3745 = vunpack.c.h.b16 %v3616
        %v3746 = vunpack.c.l.b16 %v3617
        %v3747 = vunpack.c.h.b16 %v3617
        %v3748 = vunpack.c.l.b16 %v3618
        %v3749 = vunpack.c.h.b16 %v3618
        %v3750 = vunpack.c.l.b16 %v3619
        %v3751 = vunpack.c.h.b16 %v3619
        %v3752 = vunpack.c.l.b16 %v3620
        %v3753 = vunpack.c.h.b16 %v3620
        %v3754 = vunpack.c.l.b16 %v3621
        %v3755 = vunpack.c.h.b16 %v3621
        %v3756 = vunpack.c.l.b16 %v3622
        %v3757 = vunpack.c.h.b16 %v3622
        %v3758 = vunpack.c.l.b16 %v3623
        %v3759 = vunpack.c.h.b16 %v3623
        %v3760 = vunpack.c.l.b16 %v3624
        %v3761 = vunpack.c.h.b16 %v3624
        %v3762 = vunpack.c.l.b16 %v3625
        %v3763 = vunpack.c.h.b16 %v3625
        %v3764 = vunpack.c.l.b16 %v3626
        %v3765 = vunpack.c.h.b16 %v3626
        %v3766 = vunpack.c.l.b16 %v3627
        %v3767 = vunpack.c.h.b16 %v3627
        %v3768 = vunpack.c.l.b16 %v3628
        %v3769 = vunpack.c.h.b16 %v3628
        %v3770 = vunpack.c.l.b16 %v3629
        %v3771 = vunpack.c.h.b16 %v3629
        %v3772 = vunpack.c.l.b16 %v3630
        %v3773 = vunpack.c.h.b16 %v3630
        %v3774 = vunpack.c.l.b16 %v3631
        %v3775 = vunpack.c.h.b16 %v3631
        %v3776 = vunpack.c.l.b16 %v3632
        %v3777 = vunpack.c.h.b16 %v3632
        %v3778 = vunpack.c.l.b16 %v3633
        %v3779 = vunpack.c.h.b16 %v3633
        %v3780 = vunpack.c.l.b16 %v3634
        %v3781 = vunpack.c.h.b16 %v3634
        %v3782 = vunpack.c.l.b16 %v3635
        %v3783 = vunpack.c.h.b16 %v3635
        %v3784 = vunpack.c.l.b16 %v3636
        %v3785 = vunpack.c.h.b16 %v3636
        %v3786 = vunpack.c.l.b16 %v3637
        %v3787 = vunpack.c.h.b16 %v3637
        %v3788 = vunpack.c.l.b16 %v3638
        %v3789 = vunpack.c.h.b16 %v3638
        %v3790 = vunpack.c.l.b16 %v3639
        %v3791 = vunpack.c.h.b16 %v3639
        %v3792 = vunpack.c.l.b16 %v3640
        %v3793 = vunpack.c.h.b16 %v3640
        %v3794 = vunpack.c.l.b16 %v3641
        %v3795 = vunpack.c.h.b16 %v3641
        %v3796 = vunpack.c.l.b16 %v3642
        %v3797 = vunpack.c.h.b16 %v3642
        %v3798 = vunpack.c.l.b16 %v3643
        %v3799 = vunpack.c.h.b16 %v3643
        %v3800 = vunpack.c.l.b16 %v3644
        %v3801 = vunpack.c.h.b16 %v3644
        %v3802 = vunpack.c.l.b16 %v3645
        %v3803 = vunpack.c.h.b16 %v3645
        %v3804 = vunpack.c.l.b16 %v3646
        %v3805 = vunpack.c.h.b16 %v3646
        %v3806 = vunpack.c.l.b16 %v3647
        %v3807 = vunpack.c.h.b16 %v3647
        %v3808 = vunpack.c.l.b16 %v3648
        %v3809 = vunpack.c.h.b16 %v3648
        %v3810 = vunpack.c.l.b16 %v3649
        %v3811 = vunpack.c.h.b16 %v3649
        %v3812 = vunpack.c.l.b16 %v3650
        %v3813 = vunpack.c.h.b16 %v3650
        %v3814 = vunpack.c.l.b16 %v3651
        %v3815 = vunpack.c.h.b16 %v3651
        %v3816 = vunpack.c.l.b16 %v3652
        %v3817 = vunpack.c.h.b16 %v3652
        %v3818 = vunpack.c.l.b16 %v3653
        %v3819 = vunpack.c.h.b16 %v3653
        %v3820 = vunpack.c.l.b16 %v3654
        %v3821 = vunpack.c.h.b16 %v3654
        %v3822 = vunpack.c.l.b16 %v3655
        %v3823 = vunpack.c.h.b16 %v3655
        %v3824 = vunpack.c.l.b16 %v3656
        %v3825 = vunpack.c.h.b16 %v3656
        %v3826 = vunpack.c.l.b16 %v3657
        %v3827 = vunpack.c.h.b16 %v3657
        %v3828 = vunpack.c.l.b16 %v3658
        %v3829 = vunpack.c.h.b16 %v3658
        %v3830 = vunpack.c.l.b16 %v3659
        %v3831 = vunpack.c.h.b16 %v3659
        %v3832 = vunpack.c.l.b16 %v3660
        %v3833 = vunpack.c.h.b16 %v3660
        %v3834 = vunpack.c.l.b16 %v3661
        %v3835 = vunpack.c.h.b16 %v3661
        %v3836 = vunpack.c.l.b16 %v3662
        %v3837 = vunpack.c.h.b16 %v3662
        %v3838 = vunpack.c.l.b16 %v3663
        %v3839 = vunpack.c.h.b16 %v3663
        %v3840 = vunpack.c.l.b16 %v3664
        %v3841 = vunpack.c.h.b16 %v3664
        %v3842 = vunpack.c.l.b16 %v3665
        %v3843 = vunpack.c.h.b16 %v3665
        %v3844 = vunpack.c.l.b16 %v3666
        %v3845 = vunpack.c.h.b16 %v3666
        %v3846 = vunpack.c.l.b16 %v3667
        %v3847 = vunpack.c.h.b16 %v3667
        %v3848 = vunpack.c.l.b16 %v3668
        %v3849 = vunpack.c.h.b16 %v3668
        %v3850 = vunpack.c.l.b16 %v3669
        %v3851 = vunpack.c.h.b16 %v3669
        %v3852 = vunpack.c.l.b16 %v3670
        %v3853 = vunpack.c.h.b16 %v3670
        %v3854 = vunpack.c.l.b16 %v3671
        %v3855 = vunpack.c.h.b16 %v3671
        %v3856 = vunpack.c.l.b16 %v3672
        %v3857 = vunpack.c.h.b16 %v3672
        %v3858 = vunpack.c.l.b16 %v3673
        %v3859 = vunpack.c.h.b16 %v3673
        %v3860 = vunpack.c.l.b16 %v3674
        %v3861 = vunpack.c.h.b16 %v3674
        %v3862 = vunpack.c.l.b16 %v3675
        %v3863 = vunpack.c.h.b16 %v3675
        %v3864 = vunpack.c.l.b16 %v3676
        %v3865 = vunpack.c.h.b16 %v3676
        %v3866 = vunpack.c.l.b16 %v3677
        %v3867 = vunpack.c.h.b16 %v3677
        %v3868 = vunpack.c.l.b16 %v3678
        %v3869 = vunpack.c.h.b16 %v3678
        %v3870 = vunpack.c.l.b16 %v3679
        %v3871 = vunpack.c.h.b16 %v3679
        %v3872 = vpack.c.b16 %v3746, %v3744
        %v3873 = vpack.c.b16 %v3747, %v3745
        %v3874 = vpack.c.b16 %v3750, %v3748
        %v3875 = vpack.c.b16 %v3751, %v3749
        %v3876 = vpack.c.b16 %v3754, %v3752
        %v3877 = vpack.c.b16 %v3755, %v3753
        %v3878 = vpack.c.b16 %v3758, %v3756
        %v3879 = vpack.c.b16 %v3759, %v3757
        %v3880 = vpack.c.b16 %v3762, %v3760
        %v3881 = vpack.c.b16 %v3763, %v3761
        %v3882 = vpack.c.b16 %v3766, %v3764
        %v3883 = vpack.c.b16 %v3767, %v3765
        %v3884 = vpack.c.b16 %v3770, %v3768
        %v3885 = vpack.c.b16 %v3771, %v3769
        %v3886 = vpack.c.b16 %v3774, %v3772
        %v3887 = vpack.c.b16 %v3775, %v3773
        %v3888 = vpack.c.b16 %v3778, %v3776
        %v3889 = vpack.c.b16 %v3779, %v3777
        %v3890 = vpack.c.b16 %v3782, %v3780
        %v3891 = vpack.c.b16 %v3783, %v3781
        %v3892 = vpack.c.b16 %v3786, %v3784
        %v3893 = vpack.c.b16 %v3787, %v3785
        %v3894 = vpack.c.b16 %v3790, %v3788
        %v3895 = vpack.c.b16 %v3791, %v3789
        %v3896 = vpack.c.b16 %v3794, %v3792
        %v3897 = vpack.c.b16 %v3795, %v3793
        %v3898 = vpack.c.b16 %v3798, %v3796
        %v3899 = vpack.c.b16 %v3799, %v3797
        %v3900 = vpack.c.b16 %v3802, %v3800
        %v3901 = vpack.c.b16 %v3803, %v3801
        %v3902 = vpack.c.b16 %v3806, %v3804
        %v3903 = vpack.c.b16 %v3807, %v3805
        %v3904 = vpack.c.b16 %v3810, %v3808
        %v3905 = vpack.c.b16 %v3811, %v3809
        %v3906 = vpack.c.b16 %v3814, %v3812
        %v3907 = vpack.c.b16 %v3815, %v3813
        %v3908 = vpack.c.b16 %v3818, %v3816
        %v3909 = vpack.c.b16 %v3819, %v3817
        %v3910 = vpack.c.b16 %v3822, %v3820
        %v3911 = vpack.c.b16 %v3823, %v3821
        %v3912 = vpack.c.b16 %v3826, %v3824
        %v3913 = vpack.c.b16 %v3827, %v3825
        %v3914 = vpack.c.b16 %v3830, %v3828
        %v3915 = vpack.c.b16 %v3831, %v3829
        %v3916 = vpack.c.b16 %v3834, %v3832
        %v3917 = vpack.c.b16 %v3835, %v3833
        %v3918 = vpack.c.b16 %v3838, %v3836
        %v3919 = vpack.c.b16 %v3839, %v3837
        %v3920 = vpack.c.b16 %v3842, %v3840
        %v3921 = vpack.c.b16 %v3843, %v3841
        %v3922 = vpack.c.b16 %v3846, %v3844
        %v3923 = vpack.c.b16 %v3847, %v3845
        %v3924 = vpack.c.b16 %v3850, %v3848
        %v3925 = vpack.c.b16 %v3851, %v3849
        %v3926 = vpack.c.b16 %v3854, %v3852
        %v3927 = vpack.c.b16 %v3855, %v3853
        %v3928 = vpack.c.b16 %v3858, %v3856
        %v3929 = vpack.c.b16 %v3859, %v3857
        %v3930 = vpack.c.b16 %v3862, %v3860
        %v3931 = vpack.c.b16 %v3863, %v3861
        %v3932 = vpack.c.b16 %v3866, %v3864
        %v3933 = vpack.c.b16 %v3867, %v3865
        %v3934 = vpack.c.b16 %v3870, %v3868
        %v3935 = vpack.c.b16 %v3871, %v3869
        %4000 = vmatprep.subr.bf16.mxu0 %v3873
        %4001 = vmatpush1.bf16.msra.mxu0 %v3872
        %4002 = vmatprep.subr.bf16.mxu0 %v3875
        %4003 = vmatpush1.bf16.msra.mxu0 %v3874
        %4004 = vmatprep.subr.bf16.mxu0 %v3877
        %4005 = vmatpush1.bf16.msra.mxu0 %v3876
        %4006 = vmatprep.subr.bf16.mxu0 %v3879
        %4007 = vmatpush1.bf16.msra.mxu0 %v3878
        %4008 = vmatprep.subr.bf16.mxu0 %v3881
        %4009 = vmatpush1.bf16.msra.mxu0 %v3880
        %4010 = vmatprep.subr.bf16.mxu0 %v3883
        %4011 = vmatpush1.bf16.msra.mxu0 %v3882
        %4012 = vmatprep.subr.bf16.mxu0 %v3885
        %4013 = vmatpush1.bf16.msra.mxu0 %v3884
        %4014 = vmatprep.subr.bf16.mxu0 %v3887
        %4015 = vmatpush1.bf16.msra.mxu0 %v3886
        %4016 = vmatprep.subr.bf16.mxu0 %v3889
        %4017 = vmatpush1.bf16.msra.mxu0 %v3888
        %4018 = vmatprep.subr.bf16.mxu0 %v3891
        %4019 = vmatpush1.bf16.msra.mxu0 %v3890
        %4020 = vmatprep.subr.bf16.mxu0 %v3893
        %4021 = vmatpush1.bf16.msra.mxu0 %v3892
        %4022 = vmatprep.subr.bf16.mxu0 %v3895
        %4023 = vmatpush1.bf16.msra.mxu0 %v3894
        %4024 = vmatprep.subr.bf16.mxu0 %v3897
        %4025 = vmatpush1.bf16.msra.mxu0 %v3896
        %4026 = vmatprep.subr.bf16.mxu0 %v3899
        %4027 = vmatpush1.bf16.msra.mxu0 %v3898
        %4028 = vmatprep.subr.bf16.mxu0 %v3901
        %4029 = vmatpush1.bf16.msra.mxu0 %v3900
        %4030 = vmatprep.subr.bf16.mxu0 %v3903
        %4031 = vmatpush1.bf16.msra.mxu0 %v3902
        %4032 = vmatprep.mubr.bf16.mxu0 %v3489
        %4033 = vmatmul.mubr.bf16.gmra.mrb[0].mxu0 %v3488
        %v4034 = vpop.f32.mrb[0].mxu0
        %v4035 = vadd.f32 0.0, %v4034
        %v4036 = vpop.f32.mrb[0].mxu0
        %v4037 = vadd.f32 0.0, %v4036
        %v4038 = vpop.f32.mrb[0].mxu0
        %v4039 = vadd.f32 0.0, %v4038
        %v4040 = vpop.f32.mrb[0].mxu0
        %v4041 = vadd.f32 0.0, %v4040
        %4042 = vmatprep.mubr.bf16.mxu0 %v3493
        %4043 = vmatmul.mubr.bf16.gmra.mrb[0].mxu0 %v3492
        %v4044 = vpop.f32.mrb[0].mxu0
        %v4045 = vadd.f32 0.0, %v4044
        %v4046 = vpop.f32.mrb[0].mxu0
        %v4047 = vadd.f32 0.0, %v4046
        %v4048 = vpop.f32.mrb[0].mxu0
        %v4049 = vadd.f32 0.0, %v4048
        %v4050 = vpop.f32.mrb[0].mxu0
        %v4051 = vadd.f32 0.0, %v4050
        %4052 = vmatprep.mubr.bf16.mxu0 %v3497
        %4053 = vmatmul.mubr.bf16.gmra.mrb[0].mxu0 %v3496
        %v4054 = vpop.f32.mrb[0].mxu0
        %v4055 = vadd.f32 0.0, %v4054
        %v4056 = vpop.f32.mrb[0].mxu0
        %v4057 = vadd.f32 0.0, %v4056
        %v4058 = vpop.f32.mrb[0].mxu0
        %v4059 = vadd.f32 0.0, %v4058
        %v4060 = vpop.f32.mrb[0].mxu0
        %v4061 = vadd.f32 0.0, %v4060
        %4062 = vmatprep.mubr.bf16.mxu0 %v3501
        %4063 = vmatmul.mubr.bf16.gmra.mrb[0].mxu0 %v3500
        %v4064 = vpop.f32.mrb[0].mxu0
        %v4065 = vadd.f32 0.0, %v4064
        %v4066 = vpop.f32.mrb[0].mxu0
        %v4067 = vadd.f32 0.0, %v4066
        %v4068 = vpop.f32.mrb[0].mxu0
        %v4069 = vadd.f32 0.0, %v4068
        %v4070 = vpop.f32.mrb[0].mxu0
        %v4071 = vadd.f32 0.0, %v4070
        %4072 = vmatprep.mubr.bf16.mxu0 %v3505
        %4073 = vmatmul.mubr.bf16.gmra.mrb[0].mxu0 %v3504
        %v4074 = vpop.f32.mrb[0].mxu0
        %v4075 = vadd.f32 0.0, %v4074
        %v4076 = vpop.f32.mrb[0].mxu0
        %v4077 = vadd.f32 0.0, %v4076
        %v4078 = vpop.f32.mrb[0].mxu0
        %v4079 = vadd.f32 0.0, %v4078
        %v4080 = vpop.f32.mrb[0].mxu0
        %v4081 = vadd.f32 0.0, %v4080
        %4082 = vmatprep.mubr.bf16.mxu0 %v3509
        %4083 = vmatmul.mubr.bf16.gmra.mrb[0].mxu0 %v3508
        %v4084 = vpop.f32.mrb[0].mxu0
        %v4085 = vadd.f32 0.0, %v4084
        %v4086 = vpop.f32.mrb[0].mxu0
        %v4087 = vadd.f32 0.0, %v4086
        %v4088 = vpop.f32.mrb[0].mxu0
        %v4089 = vadd.f32 0.0, %v4088
        %v4090 = vpop.f32.mrb[0].mxu0
        %v4091 = vadd.f32 0.0, %v4090
        %4092 = vmatprep.mubr.bf16.mxu0 %v3513
        %4093 = vmatmul.mubr.bf16.gmra.mrb[0].mxu0 %v3512
        %v4094 = vpop.f32.mrb[0].mxu0
        %v4095 = vadd.f32 0.0, %v4094
        %v4096 = vpop.f32.mrb[0].mxu0
        %v4097 = vadd.f32 0.0, %v4096
        %v4098 = vpop.f32.mrb[0].mxu0
        %v4099 = vadd.f32 0.0, %v4098
        %v4100 = vpop.f32.mrb[0].mxu0
        %v4101 = vadd.f32 0.0, %v4100
        %4102 = vmatprep.mubr.bf16.mxu0 %v3517
        %4103 = vmatmul.mubr.bf16.gmra.mrb[0].mxu0 %v3516
        %v4104 = vpop.f32.mrb[0].mxu0
        %v4105 = vadd.f32 0.0, %v4104
        %v4106 = vpop.f32.mrb[0].mxu0
        %v4107 = vadd.f32 0.0, %v4106
        %v4108 = vpop.f32.mrb[0].mxu0
        %v4109 = vadd.f32 0.0, %v4108
        %v4110 = vpop.f32.mrb[0].mxu0
        %v4111 = vadd.f32 0.0, %v4110
        %4112 = vmatprep.mubr.bf16.mxu0 %v3521
        %4113 = vmatmul.mubr.bf16.gmra.mrb[0].mxu0 %v3520
        %v4114 = vpop.f32.mrb[0].mxu0
        %v4115 = vadd.f32 0.0, %v4114
        %v4116 = vpop.f32.mrb[0].mxu0
        %v4117 = vadd.f32 0.0, %v4116
        %v4118 = vpop.f32.mrb[0].mxu0
        %v4119 = vadd.f32 0.0, %v4118
        %v4120 = vpop.f32.mrb[0].mxu0
        %v4121 = vadd.f32 0.0, %v4120
        %4122 = vmatprep.mubr.bf16.mxu0 %v3525
        %4123 = vmatmul.mubr.bf16.gmra.mrb[0].mxu0 %v3524
        %v4124 = vpop.f32.mrb[0].mxu0
        %v4125 = vadd.f32 0.0, %v4124
        %v4126 = vpop.f32.mrb[0].mxu0
        %v4127 = vadd.f32 0.0, %v4126
        %v4128 = vpop.f32.mrb[0].mxu0
        %v4129 = vadd.f32 0.0, %v4128
        %v4130 = vpop.f32.mrb[0].mxu0
        %v4131 = vadd.f32 0.0, %v4130
        %4132 = vmatprep.mubr.bf16.mxu0 %v3529
        %4133 = vmatmul.mubr.bf16.gmra.mrb[0].mxu0 %v3528
        %v4134 = vpop.f32.mrb[0].mxu0
        %v4135 = vadd.f32 0.0, %v4134
        %v4136 = vpop.f32.mrb[0].mxu0
        %v4137 = vadd.f32 0.0, %v4136
        %v4138 = vpop.f32.mrb[0].mxu0
        %v4139 = vadd.f32 0.0, %v4138
        %v4140 = vpop.f32.mrb[0].mxu0
        %v4141 = vadd.f32 0.0, %v4140
        %4142 = vmatprep.mubr.bf16.mxu0 %v3533
        %4143 = vmatmul.mubr.bf16.gmra.mrb[0].mxu0 %v3532
        %v4144 = vpop.f32.mrb[0].mxu0
        %v4145 = vadd.f32 0.0, %v4144
        %v4146 = vpop.f32.mrb[0].mxu0
        %v4147 = vadd.f32 0.0, %v4146
        %v4148 = vpop.f32.mrb[0].mxu0
        %v4149 = vadd.f32 0.0, %v4148
        %v4150 = vpop.f32.mrb[0].mxu0
        %v4151 = vadd.f32 0.0, %v4150
        %4152 = vmatprep.mubr.bf16.mxu0 %v3537
        %4153 = vmatmul.mubr.bf16.gmra.mrb[0].mxu0 %v3536
        %v4154 = vpop.f32.mrb[0].mxu0
        %v4155 = vadd.f32 0.0, %v4154
        %v4156 = vpop.f32.mrb[0].mxu0
        %v4157 = vadd.f32 0.0, %v4156
        %v4158 = vpop.f32.mrb[0].mxu0
        %v4159 = vadd.f32 0.0, %v4158
        %v4160 = vpop.f32.mrb[0].mxu0
        %v4161 = vadd.f32 0.0, %v4160
        %4162 = vmatprep.mubr.bf16.mxu0 %v3541
        %4163 = vmatmul.mubr.bf16.gmra.mrb[0].mxu0 %v3540
        %v4164 = vpop.f32.mrb[0].mxu0
        %v4165 = vadd.f32 0.0, %v4164
        %v4166 = vpop.f32.mrb[0].mxu0
        %v4167 = vadd.f32 0.0, %v4166
        %v4168 = vpop.f32.mrb[0].mxu0
        %v4169 = vadd.f32 0.0, %v4168
        %v4170 = vpop.f32.mrb[0].mxu0
        %v4171 = vadd.f32 0.0, %v4170
        %4172 = vmatprep.mubr.bf16.mxu0 %v3545
        %4173 = vmatmul.mubr.bf16.gmra.mrb[0].mxu0 %v3544
        %v4174 = vpop.f32.mrb[0].mxu0
        %v4175 = vadd.f32 0.0, %v4174
        %v4176 = vpop.f32.mrb[0].mxu0
        %v4177 = vadd.f32 0.0, %v4176
        %v4178 = vpop.f32.mrb[0].mxu0
        %v4179 = vadd.f32 0.0, %v4178
        %v4180 = vpop.f32.mrb[0].mxu0
        %v4181 = vadd.f32 0.0, %v4180
        %4182 = vmatprep.mubr.bf16.mxu0 %v3549
        %4183 = vmatmul.mubr.bf16.gmra.mrb[0].mxu0 %v3548
        %v4184 = vpop.f32.mrb[0].mxu0
        %v4185 = vadd.f32 0.0, %v4184
        %v4186 = vpop.f32.mrb[0].mxu0
        %v4187 = vadd.f32 0.0, %v4186
        %v4188 = vpop.f32.mrb[0].mxu0
        %v4189 = vadd.f32 0.0, %v4188
        %v4190 = vpop.f32.mrb[0].mxu0
        %v4191 = vadd.f32 0.0, %v4190
        %4192 = vmatprep.mubr.bf16.mxu0 %v3553
        %4193 = vmatmul.mubr.bf16.gmra.mrb[0].mxu0 %v3552
        %v4194 = vpop.f32.mrb[0].mxu0
        %v4195 = vadd.f32 0.0, %v4194
        %v4196 = vpop.f32.mrb[0].mxu0
        %v4197 = vadd.f32 0.0, %v4196
        %v4198 = vpop.f32.mrb[0].mxu0
        %v4199 = vadd.f32 0.0, %v4198
        %v4200 = vpop.f32.mrb[0].mxu0
        %v4201 = vadd.f32 0.0, %v4200
        %4202 = vmatprep.mubr.bf16.mxu0 %v3557
        %4203 = vmatmul.mubr.bf16.gmra.mrb[0].mxu0 %v3556
        %v4204 = vpop.f32.mrb[0].mxu0
        %v4205 = vadd.f32 0.0, %v4204
        %v4206 = vpop.f32.mrb[0].mxu0
        %v4207 = vadd.f32 0.0, %v4206
        %v4208 = vpop.f32.mrb[0].mxu0
        %v4209 = vadd.f32 0.0, %v4208
        %v4210 = vpop.f32.mrb[0].mxu0
        %v4211 = vadd.f32 0.0, %v4210
        %4212 = vmatprep.mubr.bf16.mxu0 %v3561
        %4213 = vmatmul.mubr.bf16.gmra.mrb[0].mxu0 %v3560
        %v4214 = vpop.f32.mrb[0].mxu0
        %v4215 = vadd.f32 0.0, %v4214
        %v4216 = vpop.f32.mrb[0].mxu0
        %v4217 = vadd.f32 0.0, %v4216
        %v4218 = vpop.f32.mrb[0].mxu0
        %v4219 = vadd.f32 0.0, %v4218
        %v4220 = vpop.f32.mrb[0].mxu0
        %v4221 = vadd.f32 0.0, %v4220
        %4222 = vmatprep.mubr.bf16.mxu0 %v3565
        %4223 = vmatmul.mubr.bf16.gmra.mrb[0].mxu0 %v3564
        %v4224 = vpop.f32.mrb[0].mxu0
        %v4225 = vadd.f32 0.0, %v4224
        %v4226 = vpop.f32.mrb[0].mxu0
        %v4227 = vadd.f32 0.0, %v4226
        %v4228 = vpop.f32.mrb[0].mxu0
        %v4229 = vadd.f32 0.0, %v4228
        %v4230 = vpop.f32.mrb[0].mxu0
        %v4231 = vadd.f32 0.0, %v4230
        %4232 = vmatprep.mubr.bf16.mxu0 %v3569
        %4233 = vmatmul.mubr.bf16.gmra.mrb[0].mxu0 %v3568
        %v4234 = vpop.f32.mrb[0].mxu0
        %v4235 = vadd.f32 0.0, %v4234
        %v4236 = vpop.f32.mrb[0].mxu0
        %v4237 = vadd.f32 0.0, %v4236
        %v4238 = vpop.f32.mrb[0].mxu0
        %v4239 = vadd.f32 0.0, %v4238
        %v4240 = vpop.f32.mrb[0].mxu0
        %v4241 = vadd.f32 0.0, %v4240
        %4242 = vmatprep.mubr.bf16.mxu0 %v3573
        %4243 = vmatmul.mubr.bf16.gmra.mrb[0].mxu0 %v3572
        %v4244 = vpop.f32.mrb[0].mxu0
        %v4245 = vadd.f32 0.0, %v4244
        %v4246 = vpop.f32.mrb[0].mxu0
        %v4247 = vadd.f32 0.0, %v4246
        %v4248 = vpop.f32.mrb[0].mxu0
        %v4249 = vadd.f32 0.0, %v4248
        %v4250 = vpop.f32.mrb[0].mxu0
        %v4251 = vadd.f32 0.0, %v4250
        %4252 = vmatprep.mubr.bf16.mxu0 %v3577
        %4253 = vmatmul.mubr.bf16.gmra.mrb[0].mxu0 %v3576
        %v4254 = vpop.f32.mrb[0].mxu0
        %v4255 = vadd.f32 0.0, %v4254
        %v4256 = vpop.f32.mrb[0].mxu0
        %v4257 = vadd.f32 0.0, %v4256
        %v4258 = vpop.f32.mrb[0].mxu0
        %v4259 = vadd.f32 0.0, %v4258
        %v4260 = vpop.f32.mrb[0].mxu0
        %v4261 = vadd.f32 0.0, %v4260
        %4262 = vmatprep.mubr.bf16.mxu0 %v3581
        %4263 = vmatmul.mubr.bf16.gmra.mrb[0].mxu0 %v3580
        %v4264 = vpop.f32.mrb[0].mxu0
        %v4265 = vadd.f32 0.0, %v4264
        %v4266 = vpop.f32.mrb[0].mxu0
        %v4267 = vadd.f32 0.0, %v4266
        %v4268 = vpop.f32.mrb[0].mxu0
        %v4269 = vadd.f32 0.0, %v4268
        %v4270 = vpop.f32.mrb[0].mxu0
        %v4271 = vadd.f32 0.0, %v4270
        %4272 = vmatprep.mubr.bf16.mxu0 %v3585
        %4273 = vmatmul.mubr.bf16.gmra.mrb[0].mxu0 %v3584
        %v4274 = vpop.f32.mrb[0].mxu0
        %v4275 = vadd.f32 0.0, %v4274
        %v4276 = vpop.f32.mrb[0].mxu0
        %v4277 = vadd.f32 0.0, %v4276
        %v4278 = vpop.f32.mrb[0].mxu0
        %v4279 = vadd.f32 0.0, %v4278
        %v4280 = vpop.f32.mrb[0].mxu0
        %v4281 = vadd.f32 0.0, %v4280
        %4282 = vmatprep.mubr.bf16.mxu0 %v3589
        %4283 = vmatmul.mubr.bf16.gmra.mrb[0].mxu0 %v3588
        %v4284 = vpop.f32.mrb[0].mxu0
        %v4285 = vadd.f32 0.0, %v4284
        %v4286 = vpop.f32.mrb[0].mxu0
        %v4287 = vadd.f32 0.0, %v4286
        %v4288 = vpop.f32.mrb[0].mxu0
        %v4289 = vadd.f32 0.0, %v4288
        %v4290 = vpop.f32.mrb[0].mxu0
        %v4291 = vadd.f32 0.0, %v4290
        %4292 = vmatprep.mubr.bf16.mxu0 %v3593
        %4293 = vmatmul.mubr.bf16.gmra.mrb[0].mxu0 %v3592
        %v4294 = vpop.f32.mrb[0].mxu0
        %v4295 = vadd.f32 0.0, %v4294
        %v4296 = vpop.f32.mrb[0].mxu0
        %v4297 = vadd.f32 0.0, %v4296
        %v4298 = vpop.f32.mrb[0].mxu0
        %v4299 = vadd.f32 0.0, %v4298
        %v4300 = vpop.f32.mrb[0].mxu0
        %v4301 = vadd.f32 0.0, %v4300
        %4302 = vmatprep.mubr.bf16.mxu0 %v3597
        %4303 = vmatmul.mubr.bf16.gmra.mrb[0].mxu0 %v3596
        %v4304 = vpop.f32.mrb[0].mxu0
        %v4305 = vadd.f32 0.0, %v4304
        %v4306 = vpop.f32.mrb[0].mxu0
        %v4307 = vadd.f32 0.0, %v4306
        %v4308 = vpop.f32.mrb[0].mxu0
        %v4309 = vadd.f32 0.0, %v4308
        %v4310 = vpop.f32.mrb[0].mxu0
        %v4311 = vadd.f32 0.0, %v4310
        %4312 = vmatprep.mubr.bf16.mxu0 %v3601
        %4313 = vmatmul.mubr.bf16.gmra.mrb[0].mxu0 %v3600
        %v4314 = vpop.f32.mrb[0].mxu0
        %v4315 = vadd.f32 0.0, %v4314
        %v4316 = vpop.f32.mrb[0].mxu0
        %v4317 = vadd.f32 0.0, %v4316
        %v4318 = vpop.f32.mrb[0].mxu0
        %v4319 = vadd.f32 0.0, %v4318
        %v4320 = vpop.f32.mrb[0].mxu0
        %v4321 = vadd.f32 0.0, %v4320
        %4322 = vmatprep.mubr.bf16.mxu0 %v3605
        %4323 = vmatmul.mubr.bf16.gmra.mrb[0].mxu0 %v3604
        %v4324 = vpop.f32.mrb[0].mxu0
        %v4325 = vadd.f32 0.0, %v4324
        %v4326 = vpop.f32.mrb[0].mxu0
        %v4327 = vadd.f32 0.0, %v4326
        %v4328 = vpop.f32.mrb[0].mxu0
        %v4329 = vadd.f32 0.0, %v4328
        %v4330 = vpop.f32.mrb[0].mxu0
        %v4331 = vadd.f32 0.0, %v4330
        %4332 = vmatprep.mubr.bf16.mxu0 %v3609
        %4333 = vmatmul.mubr.bf16.gmra.mrb[0].mxu0 %v3608
        %v4334 = vpop.f32.mrb[0].mxu0
        %v4335 = vadd.f32 0.0, %v4334
        %v4336 = vpop.f32.mrb[0].mxu0
        %v4337 = vadd.f32 0.0, %v4336
        %v4338 = vpop.f32.mrb[0].mxu0
        %v4339 = vadd.f32 0.0, %v4338
        %v4340 = vpop.f32.mrb[0].mxu0
        %v4341 = vadd.f32 0.0, %v4340
        %4342 = vmatprep.mubr.bf16.mxu0 %v3613
        %4343 = vmatmul.mubr.bf16.gmra.mrb[0].mxu0 %v3612
        %v4344 = vpop.f32.mrb[0].mxu0
        %v4345 = vadd.f32 0.0, %v4344
        %v4346 = vpop.f32.mrb[0].mxu0
        %v4347 = vadd.f32 0.0, %v4346
        %v4348 = vpop.f32.mrb[0].mxu0
        %v4349 = vadd.f32 0.0, %v4348
        %v4350 = vpop.f32.mrb[0].mxu0
        %v4351 = vadd.f32 0.0, %v4350
        %4352 = vdwg.mxu0
        %4353 = vmatprep.subr.bf16.mxu0 %v3905
        %4354 = vmatpush1.bf16.msra.mxu0 %v3904
        %4355 = vmatprep.subr.bf16.mxu0 %v3907
        %4356 = vmatpush1.bf16.msra.mxu0 %v3906
        %4357 = vmatprep.subr.bf16.mxu0 %v3909
        %4358 = vmatpush1.bf16.msra.mxu0 %v3908
        %4359 = vmatprep.subr.bf16.mxu0 %v3911
        %4360 = vmatpush1.bf16.msra.mxu0 %v3910
        %4361 = vmatprep.subr.bf16.mxu0 %v3913
        %4362 = vmatpush1.bf16.msra.mxu0 %v3912
        %4363 = vmatprep.subr.bf16.mxu0 %v3915
        %4364 = vmatpush1.bf16.msra.mxu0 %v3914
        %4365 = vmatprep.subr.bf16.mxu0 %v3917
        %4366 = vmatpush1.bf16.msra.mxu0 %v3916
        %4367 = vmatprep.subr.bf16.mxu0 %v3919
        %4368 = vmatpush1.bf16.msra.mxu0 %v3918
        %4369 = vmatprep.subr.bf16.mxu0 %v3921
        %4370 = vmatpush1.bf16.msra.mxu0 %v3920
        %4371 = vmatprep.subr.bf16.mxu0 %v3923
        %4372 = vmatpush1.bf16.msra.mxu0 %v3922
        %4373 = vmatprep.subr.bf16.mxu0 %v3925
        %4374 = vmatpush1.bf16.msra.mxu0 %v3924
        %4375 = vmatprep.subr.bf16.mxu0 %v3927
        %4376 = vmatpush1.bf16.msra.mxu0 %v3926
        %4377 = vmatprep.subr.bf16.mxu0 %v3929
        %4378 = vmatpush1.bf16.msra.mxu0 %v3928
        %4379 = vmatprep.subr.bf16.mxu0 %v3931
        %4380 = vmatpush1.bf16.msra.mxu0 %v3930
        %4381 = vmatprep.subr.bf16.mxu0 %v3933
        %4382 = vmatpush1.bf16.msra.mxu0 %v3932
        %4383 = vmatprep.subr.bf16.mxu0 %v3935
        %4384 = vmatpush1.bf16.msra.mxu0 %v3934
        %4385 = vmatprep.mubr.bf16.mxu0 %v3491
        %4386 = vmatmul.mubr.bf16.gmra.mrb[0].mxu0 %v3490
        %v4387 = vpop.f32.mrb[0].mxu0
        %v4388 = vadd.f32 %v4035, %v4387
        %v4389 = vpop.f32.mrb[0].mxu0
        %v4390 = vadd.f32 %v4037, %v4389
        %v4391 = vpop.f32.mrb[0].mxu0
        %v4392 = vadd.f32 %v4039, %v4391
        %v4393 = vpop.f32.mrb[0].mxu0
        %v4394 = vadd.f32 %v4041, %v4393
        %4395 = vmatprep.mubr.bf16.mxu0 %v3495
        %4396 = vmatmul.mubr.bf16.gmra.mrb[0].mxu0 %v3494
        %v4397 = vpop.f32.mrb[0].mxu0
        %v4398 = vadd.f32 %v4045, %v4397
        %v4399 = vpop.f32.mrb[0].mxu0
        %v4400 = vadd.f32 %v4047, %v4399
        %v4401 = vpop.f32.mrb[0].mxu0
        %v4402 = vadd.f32 %v4049, %v4401
        %v4403 = vpop.f32.mrb[0].mxu0
        %v4404 = vadd.f32 %v4051, %v4403
        %4405 = vmatprep.mubr.bf16.mxu0 %v3499
        %4406 = vmatmul.mubr.bf16.gmra.mrb[0].mxu0 %v3498
        %v4407 = vpop.f32.mrb[0].mxu0
        %v4408 = vadd.f32 %v4055, %v4407
        %v4409 = vpop.f32.mrb[0].mxu0
        %v4410 = vadd.f32 %v4057, %v4409
        %v4411 = vpop.f32.mrb[0].mxu0
        %v4412 = vadd.f32 %v4059, %v4411
        %v4413 = vpop.f32.mrb[0].mxu0
        %v4414 = vadd.f32 %v4061, %v4413
        %4415 = vmatprep.mubr.bf16.mxu0 %v3503
        %4416 = vmatmul.mubr.bf16.gmra.mrb[0].mxu0 %v3502
        %v4417 = vpop.f32.mrb[0].mxu0
        %v4418 = vadd.f32 %v4065, %v4417
        %v4419 = vpop.f32.mrb[0].mxu0
        %v4420 = vadd.f32 %v4067, %v4419
        %v4421 = vpop.f32.mrb[0].mxu0
        %v4422 = vadd.f32 %v4069, %v4421
        %v4423 = vpop.f32.mrb[0].mxu0
        %v4424 = vadd.f32 %v4071, %v4423
        %4425 = vmatprep.mubr.bf16.mxu0 %v3507
        %4426 = vmatmul.mubr.bf16.gmra.mrb[0].mxu0 %v3506
        %v4427 = vpop.f32.mrb[0].mxu0
        %v4428 = vadd.f32 %v4075, %v4427
        %v4429 = vpop.f32.mrb[0].mxu0
        %v4430 = vadd.f32 %v4077, %v4429
        %v4431 = vpop.f32.mrb[0].mxu0
        %v4432 = vadd.f32 %v4079, %v4431
        %v4433 = vpop.f32.mrb[0].mxu0
        %v4434 = vadd.f32 %v4081, %v4433
        %4435 = vmatprep.mubr.bf16.mxu0 %v3511
        %4436 = vmatmul.mubr.bf16.gmra.mrb[0].mxu0 %v3510
        %v4437 = vpop.f32.mrb[0].mxu0
        %v4438 = vadd.f32 %v4085, %v4437
        %v4439 = vpop.f32.mrb[0].mxu0
        %v4440 = vadd.f32 %v4087, %v4439
        %v4441 = vpop.f32.mrb[0].mxu0
        %v4442 = vadd.f32 %v4089, %v4441
        %v4443 = vpop.f32.mrb[0].mxu0
        %v4444 = vadd.f32 %v4091, %v4443
        %4445 = vmatprep.mubr.bf16.mxu0 %v3515
        %4446 = vmatmul.mubr.bf16.gmra.mrb[0].mxu0 %v3514
        %v4447 = vpop.f32.mrb[0].mxu0
        %v4448 = vadd.f32 %v4095, %v4447
        %v4449 = vpop.f32.mrb[0].mxu0
        %v4450 = vadd.f32 %v4097, %v4449
        %v4451 = vpop.f32.mrb[0].mxu0
        %v4452 = vadd.f32 %v4099, %v4451
        %v4453 = vpop.f32.mrb[0].mxu0
        %v4454 = vadd.f32 %v4101, %v4453
        %4455 = vmatprep.mubr.bf16.mxu0 %v3519
        %4456 = vmatmul.mubr.bf16.gmra.mrb[0].mxu0 %v3518
        %v4457 = vpop.f32.mrb[0].mxu0
        %v4458 = vadd.f32 %v4105, %v4457
        %v4459 = vpop.f32.mrb[0].mxu0
        %v4460 = vadd.f32 %v4107, %v4459
        %v4461 = vpop.f32.mrb[0].mxu0
        %v4462 = vadd.f32 %v4109, %v4461
        %v4463 = vpop.f32.mrb[0].mxu0
        %v4464 = vadd.f32 %v4111, %v4463
        %4465 = vmatprep.mubr.bf16.mxu0 %v3523
        %4466 = vmatmul.mubr.bf16.gmra.mrb[0].mxu0 %v3522
        %v4467 = vpop.f32.mrb[0].mxu0
        %v4468 = vadd.f32 %v4115, %v4467
        %v4469 = vpop.f32.mrb[0].mxu0
        %v4470 = vadd.f32 %v4117, %v4469
        %v4471 = vpop.f32.mrb[0].mxu0
        %v4472 = vadd.f32 %v4119, %v4471
        %v4473 = vpop.f32.mrb[0].mxu0
        %v4474 = vadd.f32 %v4121, %v4473
        %4475 = vmatprep.mubr.bf16.mxu0 %v3527
        %4476 = vmatmul.mubr.bf16.gmra.mrb[0].mxu0 %v3526
        %v4477 = vpop.f32.mrb[0].mxu0
        %v4478 = vadd.f32 %v4125, %v4477
        %v4479 = vpop.f32.mrb[0].mxu0
        %v4480 = vadd.f32 %v4127, %v4479
        %v4481 = vpop.f32.mrb[0].mxu0
        %v4482 = vadd.f32 %v4129, %v4481
        %v4483 = vpop.f32.mrb[0].mxu0
        %v4484 = vadd.f32 %v4131, %v4483
        %4485 = vmatprep.mubr.bf16.mxu0 %v3531
        %4486 = vmatmul.mubr.bf16.gmra.mrb[0].mxu0 %v3530
        %v4487 = vpop.f32.mrb[0].mxu0
        %v4488 = vadd.f32 %v4135, %v4487
        %v4489 = vpop.f32.mrb[0].mxu0
        %v4490 = vadd.f32 %v4137, %v4489
        %v4491 = vpop.f32.mrb[0].mxu0
        %v4492 = vadd.f32 %v4139, %v4491
        %v4493 = vpop.f32.mrb[0].mxu0
        %v4494 = vadd.f32 %v4141, %v4493
        %4495 = vmatprep.mubr.bf16.mxu0 %v3535
        %4496 = vmatmul.mubr.bf16.gmra.mrb[0].mxu0 %v3534
        %v4497 = vpop.f32.mrb[0].mxu0
        %v4498 = vadd.f32 %v4145, %v4497
        %v4499 = vpop.f32.mrb[0].mxu0
        %v4500 = vadd.f32 %v4147, %v4499
        %v4501 = vpop.f32.mrb[0].mxu0
        %v4502 = vadd.f32 %v4149, %v4501
        %v4503 = vpop.f32.mrb[0].mxu0
        %v4504 = vadd.f32 %v4151, %v4503
        %4505 = vmatprep.mubr.bf16.mxu0 %v3539
        %4506 = vmatmul.mubr.bf16.gmra.mrb[0].mxu0 %v3538
        %v4507 = vpop.f32.mrb[0].mxu0
        %v4508 = vadd.f32 %v4155, %v4507
        %v4509 = vpop.f32.mrb[0].mxu0
        %v4510 = vadd.f32 %v4157, %v4509
        %v4511 = vpop.f32.mrb[0].mxu0
        %v4512 = vadd.f32 %v4159, %v4511
        %v4513 = vpop.f32.mrb[0].mxu0
        %v4514 = vadd.f32 %v4161, %v4513
        %4515 = vmatprep.mubr.bf16.mxu0 %v3543
        %4516 = vmatmul.mubr.bf16.gmra.mrb[0].mxu0 %v3542
        %v4517 = vpop.f32.mrb[0].mxu0
        %v4518 = vadd.f32 %v4165, %v4517
        %v4519 = vpop.f32.mrb[0].mxu0
        %v4520 = vadd.f32 %v4167, %v4519
        %v4521 = vpop.f32.mrb[0].mxu0
        %v4522 = vadd.f32 %v4169, %v4521
        %v4523 = vpop.f32.mrb[0].mxu0
        %v4524 = vadd.f32 %v4171, %v4523
        %4525 = vmatprep.mubr.bf16.mxu0 %v3547
        %4526 = vmatmul.mubr.bf16.gmra.mrb[0].mxu0 %v3546
        %v4527 = vpop.f32.mrb[0].mxu0
        %v4528 = vadd.f32 %v4175, %v4527
        %v4529 = vpop.f32.mrb[0].mxu0
        %v4530 = vadd.f32 %v4177, %v4529
        %v4531 = vpop.f32.mrb[0].mxu0
        %v4532 = vadd.f32 %v4179, %v4531
        %v4533 = vpop.f32.mrb[0].mxu0
        %v4534 = vadd.f32 %v4181, %v4533
        %4535 = vmatprep.mubr.bf16.mxu0 %v3551
        %4536 = vmatmul.mubr.bf16.gmra.mrb[0].mxu0 %v3550
        %v4537 = vpop.f32.mrb[0].mxu0
        %v4538 = vadd.f32 %v4185, %v4537
        %v4539 = vpop.f32.mrb[0].mxu0
        %v4540 = vadd.f32 %v4187, %v4539
        %v4541 = vpop.f32.mrb[0].mxu0
        %v4542 = vadd.f32 %v4189, %v4541
        %v4543 = vpop.f32.mrb[0].mxu0
        %v4544 = vadd.f32 %v4191, %v4543
        %4545 = vmatprep.mubr.bf16.mxu0 %v3555
        %4546 = vmatmul.mubr.bf16.gmra.mrb[0].mxu0 %v3554
        %v4547 = vpop.f32.mrb[0].mxu0
        %v4548 = vadd.f32 %v4195, %v4547
        %v4549 = vpop.f32.mrb[0].mxu0
        %v4550 = vadd.f32 %v4197, %v4549
        %v4551 = vpop.f32.mrb[0].mxu0
        %v4552 = vadd.f32 %v4199, %v4551
        %v4553 = vpop.f32.mrb[0].mxu0
        %v4554 = vadd.f32 %v4201, %v4553
        %4555 = vmatprep.mubr.bf16.mxu0 %v3559
        %4556 = vmatmul.mubr.bf16.gmra.mrb[0].mxu0 %v3558
        %v4557 = vpop.f32.mrb[0].mxu0
        %v4558 = vadd.f32 %v4205, %v4557
        %v4559 = vpop.f32.mrb[0].mxu0
        %v4560 = vadd.f32 %v4207, %v4559
        %v4561 = vpop.f32.mrb[0].mxu0
        %v4562 = vadd.f32 %v4209, %v4561
        %v4563 = vpop.f32.mrb[0].mxu0
        %v4564 = vadd.f32 %v4211, %v4563
        %4565 = vmatprep.mubr.bf16.mxu0 %v3563
        %4566 = vmatmul.mubr.bf16.gmra.mrb[0].mxu0 %v3562
        %v4567 = vpop.f32.mrb[0].mxu0
        %v4568 = vadd.f32 %v4215, %v4567
        %v4569 = vpop.f32.mrb[0].mxu0
        %v4570 = vadd.f32 %v4217, %v4569
        %v4571 = vpop.f32.mrb[0].mxu0
        %v4572 = vadd.f32 %v4219, %v4571
        %v4573 = vpop.f32.mrb[0].mxu0
        %v4574 = vadd.f32 %v4221, %v4573
        %4575 = vmatprep.mubr.bf16.mxu0 %v3567
        %4576 = vmatmul.mubr.bf16.gmra.mrb[0].mxu0 %v3566
        %v4577 = vpop.f32.mrb[0].mxu0
        %v4578 = vadd.f32 %v4225, %v4577
        %v4579 = vpop.f32.mrb[0].mxu0
        %v4580 = vadd.f32 %v4227, %v4579
        %v4581 = vpop.f32.mrb[0].mxu0
        %v4582 = vadd.f32 %v4229, %v4581
        %v4583 = vpop.f32.mrb[0].mxu0
        %v4584 = vadd.f32 %v4231, %v4583
        %4585 = vmatprep.mubr.bf16.mxu0 %v3571
        %4586 = vmatmul.mubr.bf16.gmra.mrb[0].mxu0 %v3570
        %v4587 = vpop.f32.mrb[0].mxu0
        %v4588 = vadd.f32 %v4235, %v4587
        %v4589 = vpop.f32.mrb[0].mxu0
        %v4590 = vadd.f32 %v4237, %v4589
        %v4591 = vpop.f32.mrb[0].mxu0
        %v4592 = vadd.f32 %v4239, %v4591
        %v4593 = vpop.f32.mrb[0].mxu0
        %v4594 = vadd.f32 %v4241, %v4593
        %4595 = vmatprep.mubr.bf16.mxu0 %v3575
        %4596 = vmatmul.mubr.bf16.gmra.mrb[0].mxu0 %v3574
        %v4597 = vpop.f32.mrb[0].mxu0
        %v4598 = vadd.f32 %v4245, %v4597
        %v4599 = vpop.f32.mrb[0].mxu0
        %v4600 = vadd.f32 %v4247, %v4599
        %v4601 = vpop.f32.mrb[0].mxu0
        %v4602 = vadd.f32 %v4249, %v4601
        %v4603 = vpop.f32.mrb[0].mxu0
        %v4604 = vadd.f32 %v4251, %v4603
        %4605 = vmatprep.mubr.bf16.mxu0 %v3579
        %4606 = vmatmul.mubr.bf16.gmra.mrb[0].mxu0 %v3578
        %v4607 = vpop.f32.mrb[0].mxu0
        %v4608 = vadd.f32 %v4255, %v4607
        %v4609 = vpop.f32.mrb[0].mxu0
        %v4610 = vadd.f32 %v4257, %v4609
        %v4611 = vpop.f32.mrb[0].mxu0
        %v4612 = vadd.f32 %v4259, %v4611
        %v4613 = vpop.f32.mrb[0].mxu0
        %v4614 = vadd.f32 %v4261, %v4613
        %4615 = vmatprep.mubr.bf16.mxu0 %v3583
        %4616 = vmatmul.mubr.bf16.gmra.mrb[0].mxu0 %v3582
        %v4617 = vpop.f32.mrb[0].mxu0
        %v4618 = vadd.f32 %v4265, %v4617
        %v4619 = vpop.f32.mrb[0].mxu0
        %v4620 = vadd.f32 %v4267, %v4619
        %v4621 = vpop.f32.mrb[0].mxu0
        %v4622 = vadd.f32 %v4269, %v4621
        %v4623 = vpop.f32.mrb[0].mxu0
        %v4624 = vadd.f32 %v4271, %v4623
        %4625 = vmatprep.mubr.bf16.mxu0 %v3587
        %4626 = vmatmul.mubr.bf16.gmra.mrb[0].mxu0 %v3586
        %v4627 = vpop.f32.mrb[0].mxu0
        %v4628 = vadd.f32 %v4275, %v4627
        %v4629 = vpop.f32.mrb[0].mxu0
        %v4630 = vadd.f32 %v4277, %v4629
        %v4631 = vpop.f32.mrb[0].mxu0
        %v4632 = vadd.f32 %v4279, %v4631
        %v4633 = vpop.f32.mrb[0].mxu0
        %v4634 = vadd.f32 %v4281, %v4633
        %4635 = vmatprep.mubr.bf16.mxu0 %v3591
        %4636 = vmatmul.mubr.bf16.gmra.mrb[0].mxu0 %v3590
        %v4637 = vpop.f32.mrb[0].mxu0
        %v4638 = vadd.f32 %v4285, %v4637
        %v4639 = vpop.f32.mrb[0].mxu0
        %v4640 = vadd.f32 %v4287, %v4639
        %v4641 = vpop.f32.mrb[0].mxu0
        %v4642 = vadd.f32 %v4289, %v4641
        %v4643 = vpop.f32.mrb[0].mxu0
        %v4644 = vadd.f32 %v4291, %v4643
        %4645 = vmatprep.mubr.bf16.mxu0 %v3595
        %4646 = vmatmul.mubr.bf16.gmra.mrb[0].mxu0 %v3594
        %v4647 = vpop.f32.mrb[0].mxu0
        %v4648 = vadd.f32 %v4295, %v4647
        %v4649 = vpop.f32.mrb[0].mxu0
        %v4650 = vadd.f32 %v4297, %v4649
        %v4651 = vpop.f32.mrb[0].mxu0
        %v4652 = vadd.f32 %v4299, %v4651
        %v4653 = vpop.f32.mrb[0].mxu0
        %v4654 = vadd.f32 %v4301, %v4653
        %4655 = vmatprep.mubr.bf16.mxu0 %v3599
        %4656 = vmatmul.mubr.bf16.gmra.mrb[0].mxu0 %v3598
        %v4657 = vpop.f32.mrb[0].mxu0
        %v4658 = vadd.f32 %v4305, %v4657
        %v4659 = vpop.f32.mrb[0].mxu0
        %v4660 = vadd.f32 %v4307, %v4659
        %v4661 = vpop.f32.mrb[0].mxu0
        %v4662 = vadd.f32 %v4309, %v4661
        %v4663 = vpop.f32.mrb[0].mxu0
        %v4664 = vadd.f32 %v4311, %v4663
        %4665 = vmatprep.mubr.bf16.mxu0 %v3603
        %4666 = vmatmul.mubr.bf16.gmra.mrb[0].mxu0 %v3602
        %v4667 = vpop.f32.mrb[0].mxu0
        %v4668 = vadd.f32 %v4315, %v4667
        %v4669 = vpop.f32.mrb[0].mxu0
        %v4670 = vadd.f32 %v4317, %v4669
        %v4671 = vpop.f32.mrb[0].mxu0
        %v4672 = vadd.f32 %v4319, %v4671
        %v4673 = vpop.f32.mrb[0].mxu0
        %v4674 = vadd.f32 %v4321, %v4673
        %4675 = vmatprep.mubr.bf16.mxu0 %v3607
        %4676 = vmatmul.mubr.bf16.gmra.mrb[0].mxu0 %v3606
        %v4677 = vpop.f32.mrb[0].mxu0
        %v4678 = vadd.f32 %v4325, %v4677
        %v4679 = vpop.f32.mrb[0].mxu0
        %v4680 = vadd.f32 %v4327, %v4679
        %v4681 = vpop.f32.mrb[0].mxu0
        %v4682 = vadd.f32 %v4329, %v4681
        %v4683 = vpop.f32.mrb[0].mxu0
        %v4684 = vadd.f32 %v4331, %v4683
        %4685 = vmatprep.mubr.bf16.mxu0 %v3611
        %4686 = vmatmul.mubr.bf16.gmra.mrb[0].mxu0 %v3610
        %v4687 = vpop.f32.mrb[0].mxu0
        %v4688 = vadd.f32 %v4335, %v4687
        %v4689 = vpop.f32.mrb[0].mxu0
        %v4690 = vadd.f32 %v4337, %v4689
        %v4691 = vpop.f32.mrb[0].mxu0
        %v4692 = vadd.f32 %v4339, %v4691
        %v4693 = vpop.f32.mrb[0].mxu0
        %v4694 = vadd.f32 %v4341, %v4693
        %4695 = vmatprep.mubr.bf16.mxu0 %v3615
        %4696 = vmatmul.mubr.bf16.gmra.mrb[0].mxu0 %v3614
        %v4697 = vpop.f32.mrb[0].mxu0
        %v4698 = vadd.f32 %v4345, %v4697
        %v4699 = vpop.f32.mrb[0].mxu0
        %v4700 = vadd.f32 %v4347, %v4699
        %v4701 = vpop.f32.mrb[0].mxu0
        %v4702 = vadd.f32 %v4349, %v4701
        %v4703 = vpop.f32.mrb[0].mxu0
        %v4704 = vadd.f32 %v4351, %v4703
        %4705 = vdwg.mxu0
        %v4706 = vadd.f32 %v3360, %v4388
        %v4707 = vadd.f32 %v3361, %v4390
        %v4708 = vadd.f32 %v3362, %v4392
        %v4709 = vadd.f32 %v3363, %v4394
        %v4710 = vadd.f32 %v3364, %v4398
        %v4711 = vadd.f32 %v3365, %v4400
        %v4712 = vadd.f32 %v3366, %v4402
        %v4713 = vadd.f32 %v3367, %v4404
        %v4714 = vadd.f32 %v3368, %v4408
        %v4715 = vadd.f32 %v3369, %v4410
        %v4716 = vadd.f32 %v3370, %v4412
        %v4717 = vadd.f32 %v3371, %v4414
        %v4718 = vadd.f32 %v3372, %v4418
        %v4719 = vadd.f32 %v3373, %v4420
        %v4720 = vadd.f32 %v3374, %v4422
        %v4721 = vadd.f32 %v3375, %v4424
        %v4722 = vadd.f32 %v3376, %v4428
        %v4723 = vadd.f32 %v3377, %v4430
        %v4724 = vadd.f32 %v3378, %v4432
        %v4725 = vadd.f32 %v3379, %v4434
        %v4726 = vadd.f32 %v3380, %v4438
        %v4727 = vadd.f32 %v3381, %v4440
        %v4728 = vadd.f32 %v3382, %v4442
        %v4729 = vadd.f32 %v3383, %v4444
        %v4730 = vadd.f32 %v3384, %v4448
        %v4731 = vadd.f32 %v3385, %v4450
        %v4732 = vadd.f32 %v3386, %v4452
        %v4733 = vadd.f32 %v3387, %v4454
        %v4734 = vadd.f32 %v3388, %v4458
        %v4735 = vadd.f32 %v3389, %v4460
        %v4736 = vadd.f32 %v3390, %v4462
        %v4737 = vadd.f32 %v3391, %v4464
        %v4738 = vadd.f32 %v3392, %v4468
        %v4739 = vadd.f32 %v3393, %v4470
        %v4740 = vadd.f32 %v3394, %v4472
        %v4741 = vadd.f32 %v3395, %v4474
        %v4742 = vadd.f32 %v3396, %v4478
        %v4743 = vadd.f32 %v3397, %v4480
        %v4744 = vadd.f32 %v3398, %v4482
        %v4745 = vadd.f32 %v3399, %v4484
        %v4746 = vadd.f32 %v3400, %v4488
        %v4747 = vadd.f32 %v3401, %v4490
        %v4748 = vadd.f32 %v3402, %v4492
        %v4749 = vadd.f32 %v3403, %v4494
        %v4750 = vadd.f32 %v3404, %v4498
        %v4751 = vadd.f32 %v3405, %v4500
        %v4752 = vadd.f32 %v3406, %v4502
        %v4753 = vadd.f32 %v3407, %v4504
        %v4754 = vadd.f32 %v3408, %v4508
        %v4755 = vadd.f32 %v3409, %v4510
        %v4756 = vadd.f32 %v3410, %v4512
        %v4757 = vadd.f32 %v3411, %v4514
        %v4758 = vadd.f32 %v3412, %v4518
        %v4759 = vadd.f32 %v3413, %v4520
        %v4760 = vadd.f32 %v3414, %v4522
        %v4761 = vadd.f32 %v3415, %v4524
        %v4762 = vadd.f32 %v3416, %v4528
        %v4763 = vadd.f32 %v3417, %v4530
        %v4764 = vadd.f32 %v3418, %v4532
        %v4765 = vadd.f32 %v3419, %v4534
        %v4766 = vadd.f32 %v3420, %v4538
        %v4767 = vadd.f32 %v3421, %v4540
        %v4768 = vadd.f32 %v3422, %v4542
        %v4769 = vadd.f32 %v3423, %v4544
        %v4770 = vadd.f32 %v3424, %v4548
        %v4771 = vadd.f32 %v3425, %v4550
        %v4772 = vadd.f32 %v3426, %v4552
        %v4773 = vadd.f32 %v3427, %v4554
        %v4774 = vadd.f32 %v3428, %v4558
        %v4775 = vadd.f32 %v3429, %v4560
        %v4776 = vadd.f32 %v3430, %v4562
        %v4777 = vadd.f32 %v3431, %v4564
        %v4778 = vadd.f32 %v3432, %v4568
        %v4779 = vadd.f32 %v3433, %v4570
        %v4780 = vadd.f32 %v3434, %v4572
        %v4781 = vadd.f32 %v3435, %v4574
        %v4782 = vadd.f32 %v3436, %v4578
        %v4783 = vadd.f32 %v3437, %v4580
        %v4784 = vadd.f32 %v3438, %v4582
        %v4785 = vadd.f32 %v3439, %v4584
        %v4786 = vadd.f32 %v3440, %v4588
        %v4787 = vadd.f32 %v3441, %v4590
        %v4788 = vadd.f32 %v3442, %v4592
        %v4789 = vadd.f32 %v3443, %v4594
        %v4790 = vadd.f32 %v3444, %v4598
        %v4791 = vadd.f32 %v3445, %v4600
        %v4792 = vadd.f32 %v3446, %v4602
        %v4793 = vadd.f32 %v3447, %v4604
        %v4794 = vadd.f32 %v3448, %v4608
        %v4795 = vadd.f32 %v3449, %v4610
        %v4796 = vadd.f32 %v3450, %v4612
        %v4797 = vadd.f32 %v3451, %v4614
        %v4798 = vadd.f32 %v3452, %v4618
        %v4799 = vadd.f32 %v3453, %v4620
        %v4800 = vadd.f32 %v3454, %v4622
        %v4801 = vadd.f32 %v3455, %v4624
        %v4802 = vadd.f32 %v3456, %v4628
        %v4803 = vadd.f32 %v3457, %v4630
        %v4804 = vadd.f32 %v3458, %v4632
        %v4805 = vadd.f32 %v3459, %v4634
        %v4806 = vadd.f32 %v3460, %v4638
        %v4807 = vadd.f32 %v3461, %v4640
        %v4808 = vadd.f32 %v3462, %v4642
        %v4809 = vadd.f32 %v3463, %v4644
        %v4810 = vadd.f32 %v3464, %v4648
        %v4811 = vadd.f32 %v3465, %v4650
        %v4812 = vadd.f32 %v3466, %v4652
        %v4813 = vadd.f32 %v3467, %v4654
        %v4814 = vadd.f32 %v3468, %v4658
        %v4815 = vadd.f32 %v3469, %v4660
        %v4816 = vadd.f32 %v3470, %v4662
        %v4817 = vadd.f32 %v3471, %v4664
        %v4818 = vadd.f32 %v3472, %v4668
        %v4819 = vadd.f32 %v3473, %v4670
        %v4820 = vadd.f32 %v3474, %v4672
        %v4821 = vadd.f32 %v3475, %v4674
        %v4822 = vadd.f32 %v3476, %v4678
        %v4823 = vadd.f32 %v3477, %v4680
        %v4824 = vadd.f32 %v3478, %v4682
        %v4825 = vadd.f32 %v3479, %v4684
        %v4826 = vadd.f32 %v3480, %v4688
        %v4827 = vadd.f32 %v3481, %v4690
        %v4828 = vadd.f32 %v3482, %v4692
        %v4829 = vadd.f32 %v3483, %v4694
        %v4830 = vadd.f32 %v3484, %v4698
        %v4831 = vadd.f32 %v3485, %v4700
        %v4832 = vadd.f32 %v3486, %v4702
        %v4833 = vadd.f32 %v3487, %v4704
        %4834 = vst [vmem:[#allocation2] sm:$0xff] %v4706
        %4835 = vst [vmem:[#allocation2 + $0x8] sm:$0xff] %v4707
        %4836 = vst [vmem:[#allocation2 + $0x10] sm:$0xff] %v4708
        %4837 = vst [vmem:[#allocation2 + $0x18] sm:$0xff] %v4709
        %4838 = vst [vmem:[#allocation2 + $0x20] sm:$0xff] %v4710
        %4839 = vst [vmem:[#allocation2 + $0x28] sm:$0xff] %v4711
        %4840 = vst [vmem:[#allocation2 + $0x30] sm:$0xff] %v4712
        %4841 = vst [vmem:[#allocation2 + $0x38] sm:$0xff] %v4713
        %4842 = vst [vmem:[#allocation2 + $0x40] sm:$0xff] %v4714
        %4843 = vst [vmem:[#allocation2 + $0x48] sm:$0xff] %v4715
        %4844 = vst [vmem:[#allocation2 + $0x50] sm:$0xff] %v4716
        %4845 = vst [vmem:[#allocation2 + $0x58] sm:$0xff] %v4717
        %4846 = vst [vmem:[#allocation2 + $0x60] sm:$0xff] %v4718
        %4847 = vst [vmem:[#allocation2 + $0x68] sm:$0xff] %v4719
        %4848 = vst [vmem:[#allocation2 + $0x70] sm:$0xff] %v4720
        %4849 = vst [vmem:[#allocation2 + $0x78] sm:$0xff] %v4721
        %4850 = vst [vmem:[#allocation2 + $0x80] sm:$0xff] %v4722
        %4851 = vst [vmem:[#allocation2 + $0x88] sm:$0xff] %v4723
        %4852 = vst [vmem:[#allocation2 + $0x90] sm:$0xff] %v4724
        %4853 = vst [vmem:[#allocation2 + $0x98] sm:$0xff] %v4725
        %4854 = vst [vmem:[#allocation2 + $0xa0] sm:$0xff] %v4726
        %4855 = vst [vmem:[#allocation2 + $0xa8] sm:$0xff] %v4727
        %4856 = vst [vmem:[#allocation2 + $0xb0] sm:$0xff] %v4728
        %4857 = vst [vmem:[#allocation2 + $0xb8] sm:$0xff] %v4729
        %4858 = vst [vmem:[#allocation2 + $0xc0] sm:$0xff] %v4730
        %4859 = vst [vmem:[#allocation2 + $0xc8] sm:$0xff] %v4731
        %4860 = vst [vmem:[#allocation2 + $0xd0] sm:$0xff] %v4732
        %4861 = vst [vmem:[#allocation2 + $0xd8] sm:$0xff] %v4733
        %4862 = vst [vmem:[#allocation2 + $0xe0] sm:$0xff] %v4734
        %4863 = vst [vmem:[#allocation2 + $0xe8] sm:$0xff] %v4735
        %4864 = vst [vmem:[#allocation2 + $0xf0] sm:$0xff] %v4736
        %4865 = vst [vmem:[#allocation2 + $0xf8] sm:$0xff] %v4737
        %4866 = vst [vmem:[#allocation2 + $0x100] sm:$0xff] %v4738
        %4867 = vst [vmem:[#allocation2 + $0x108] sm:$0xff] %v4739
        %4868 = vst [vmem:[#allocation2 + $0x110] sm:$0xff] %v4740
        %4869 = vst [vmem:[#allocation2 + $0x118] sm:$0xff] %v4741
        %4870 = vst [vmem:[#allocation2 + $0x120] sm:$0xff] %v4742
        %4871 = vst [vmem:[#allocation2 + $0x128] sm:$0xff] %v4743
        %4872 = vst [vmem:[#allocation2 + $0x130] sm:$0xff] %v4744
        %4873 = vst [vmem:[#allocation2 + $0x138] sm:$0xff] %v4745
        %4874 = vst [vmem:[#allocation2 + $0x140] sm:$0xff] %v4746
        %4875 = vst [vmem:[#allocation2 + $0x148] sm:$0xff] %v4747
        %4876 = vst [vmem:[#allocation2 + $0x150] sm:$0xff] %v4748
        %4877 = vst [vmem:[#allocation2 + $0x158] sm:$0xff] %v4749
        %4878 = vst [vmem:[#allocation2 + $0x160] sm:$0xff] %v4750
        %4879 = vst [vmem:[#allocation2 + $0x168] sm:$0xff] %v4751
        %4880 = vst [vmem:[#allocation2 + $0x170] sm:$0xff] %v4752
        %4881 = vst [vmem:[#allocation2 + $0x178] sm:$0xff] %v4753
        %4882 = vst [vmem:[#allocation2 + $0x180] sm:$0xff] %v4754
        %4883 = vst [vmem:[#allocation2 + $0x188] sm:$0xff] %v4755
        %4884 = vst [vmem:[#allocation2 + $0x190] sm:$0xff] %v4756
        %4885 = vst [vmem:[#allocation2 + $0x198] sm:$0xff] %v4757
        %4886 = vst [vmem:[#allocation2 + $0x1a0] sm:$0xff] %v4758
        %4887 = vst [vmem:[#allocation2 + $0x1a8] sm:$0xff] %v4759
        %4888 = vst [vmem:[#allocation2 + $0x1b0] sm:$0xff] %v4760
        %4889 = vst [vmem:[#allocation2 + $0x1b8] sm:$0xff] %v4761
        %4890 = vst [vmem:[#allocation2 + $0x1c0] sm:$0xff] %v4762
        %4891 = vst [vmem:[#allocation2 + $0x1c8] sm:$0xff] %v4763
        %4892 = vst [vmem:[#allocation2 + $0x1d0] sm:$0xff] %v4764
        %4893 = vst [vmem:[#allocation2 + $0x1d8] sm:$0xff] %v4765
        %4894 = vst [vmem:[#allocation2 + $0x1e0] sm:$0xff] %v4766
        %4895 = vst [vmem:[#allocation2 + $0x1e8] sm:$0xff] %v4767
        %4896 = vst [vmem:[#allocation2 + $0x1f0] sm:$0xff] %v4768
        %4897 = vst [vmem:[#allocation2 + $0x1f8] sm:$0xff] %v4769
        %4898 = vst [vmem:[#allocation2 + $0x200] sm:$0xff] %v4770
        %4899 = vst [vmem:[#allocation2 + $0x208] sm:$0xff] %v4771
        %4900 = vst [vmem:[#allocation2 + $0x210] sm:$0xff] %v4772
        %4901 = vst [vmem:[#allocation2 + $0x218] sm:$0xff] %v4773
        %4902 = vst [vmem:[#allocation2 + $0x220] sm:$0xff] %v4774
        %4903 = vst [vmem:[#allocation2 + $0x228] sm:$0xff] %v4775
        %4904 = vst [vmem:[#allocation2 + $0x230] sm:$0xff] %v4776
        %4905 = vst [vmem:[#allocation2 + $0x238] sm:$0xff] %v4777
        %4906 = vst [vmem:[#allocation2 + $0x240] sm:$0xff] %v4778
        %4907 = vst [vmem:[#allocation2 + $0x248] sm:$0xff] %v4779
        %4908 = vst [vmem:[#allocation2 + $0x250] sm:$0xff] %v4780
        %4909 = vst [vmem:[#allocation2 + $0x258] sm:$0xff] %v4781
        %4910 = vst [vmem:[#allocation2 + $0x260] sm:$0xff] %v4782
        %4911 = vst [vmem:[#allocation2 + $0x268] sm:$0xff] %v4783
        %4912 = vst [vmem:[#allocation2 + $0x270] sm:$0xff] %v4784
        %4913 = vst [vmem:[#allocation2 + $0x278] sm:$0xff] %v4785
        %4914 = vst [vmem:[#allocation2 + $0x280] sm:$0xff] %v4786
        %4915 = vst [vmem:[#allocation2 + $0x288] sm:$0xff] %v4787
        %4916 = vst [vmem:[#allocation2 + $0x290] sm:$0xff] %v4788
        %4917 = vst [vmem:[#allocation2 + $0x298] sm:$0xff] %v4789
        %4918 = vst [vmem:[#allocation2 + $0x2a0] sm:$0xff] %v4790
        %4919 = vst [vmem:[#allocation2 + $0x2a8] sm:$0xff] %v4791
        %4920 = vst [vmem:[#allocation2 + $0x2b0] sm:$0xff] %v4792
        %4921 = vst [vmem:[#allocation2 + $0x2b8] sm:$0xff] %v4793
        %4922 = vst [vmem:[#allocation2 + $0x2c0] sm:$0xff] %v4794
        %4923 = vst [vmem:[#allocation2 + $0x2c8] sm:$0xff] %v4795
        %4924 = vst [vmem:[#allocation2 + $0x2d0] sm:$0xff] %v4796
        %4925 = vst [vmem:[#allocation2 + $0x2d8] sm:$0xff] %v4797
        %4926 = vst [vmem:[#allocation2 + $0x2e0] sm:$0xff] %v4798
        %4927 = vst [vmem:[#allocation2 + $0x2e8] sm:$0xff] %v4799
        %4928 = vst [vmem:[#allocation2 + $0x2f0] sm:$0xff] %v4800
        %4929 = vst [vmem:[#allocation2 + $0x2f8] sm:$0xff] %v4801
        %4930 = vst [vmem:[#allocation2 + $0x300] sm:$0xff] %v4802
        %4931 = vst [vmem:[#allocation2 + $0x308] sm:$0xff] %v4803
        %4932 = vst [vmem:[#allocation2 + $0x310] sm:$0xff] %v4804
        %4933 = vst [vmem:[#allocation2 + $0x318] sm:$0xff] %v4805
        %4934 = vst [vmem:[#allocation2 + $0x320] sm:$0xff] %v4806
        %4935 = vst [vmem:[#allocation2 + $0x328] sm:$0xff] %v4807
        %4936 = vst [vmem:[#allocation2 + $0x330] sm:$0xff] %v4808
        %4937 = vst [vmem:[#allocation2 + $0x338] sm:$0xff] %v4809
        %4938 = vst [vmem:[#allocation2 + $0x340] sm:$0xff] %v4810
        %4939 = vst [vmem:[#allocation2 + $0x348] sm:$0xff] %v4811
        %4940 = vst [vmem:[#allocation2 + $0x350] sm:$0xff] %v4812
        %4941 = vst [vmem:[#allocation2 + $0x358] sm:$0xff] %v4813
        %4942 = vst [vmem:[#allocation2 + $0x360] sm:$0xff] %v4814
        %4943 = vst [vmem:[#allocation2 + $0x368] sm:$0xff] %v4815
        %4944 = vst [vmem:[#allocation2 + $0x370] sm:$0xff] %v4816
        %4945 = vst [vmem:[#allocation2 + $0x378] sm:$0xff] %v4817
        %4946 = vst [vmem:[#allocation2 + $0x380] sm:$0xff] %v4818
        %4947 = vst [vmem:[#allocation2 + $0x388] sm:$0xff] %v4819
        %4948 = vst [vmem:[#allocation2 + $0x390] sm:$0xff] %v4820
        %4949 = vst [vmem:[#allocation2 + $0x398] sm:$0xff] %v4821
        %4950 = vst [vmem:[#allocation2 + $0x3a0] sm:$0xff] %v4822
        %4951 = vst [vmem:[#allocation2 + $0x3a8] sm:$0xff] %v4823
        %4952 = vst [vmem:[#allocation2 + $0x3b0] sm:$0xff] %v4824
        %4953 = vst [vmem:[#allocation2 + $0x3b8] sm:$0xff] %v4825
        %4954 = vst [vmem:[#allocation2 + $0x3c0] sm:$0xff] %v4826
        %4955 = vst [vmem:[#allocation2 + $0x3c8] sm:$0xff] %v4827
        %4956 = vst [vmem:[#allocation2 + $0x3d0] sm:$0xff] %v4828
        %4957 = vst [vmem:[#allocation2 + $0x3d8] sm:$0xff] %v4829
        %4958 = vst [vmem:[#allocation2 + $0x3e0] sm:$0xff] %v4830
        %4959 = vst [vmem:[#allocation2 + $0x3e8] sm:$0xff] %v4831
        %4960 = vst [vmem:[#allocation2 + $0x3f0] sm:$0xff] %v4832
        %4961 = vst [vmem:[#allocation2 + $0x3f8] sm:$0xff] %v4833
        %p4962 = scmp.eq.s32.totalorder %s24, 1
        // Predicated region
        $region68: #{mlp_forward.1} parent=58 // pred_check
          %p4963 = pneg %p4962
        $region69: #{mlp_forward.1} parent=58 // pred_check_branch
          %4965 = sbr.rel (%p4963) target = $region71
        $region70: #{mlp_forward.1} parent=58 // pred_region
          %v4966 = vld [vmem:[#allocation2] sm:$0xff]
          %v4967 = vld [vmem:[#allocation2 + $0x8] sm:$0xff]
          %v4968 = vld [vmem:[#allocation2 + $0x10] sm:$0xff]
          %v4969 = vld [vmem:[#allocation2 + $0x18] sm:$0xff]
          %v4970 = vld [vmem:[#allocation2 + $0x20] sm:$0xff]
          %v4971 = vld [vmem:[#allocation2 + $0x28] sm:$0xff]
          %v4972 = vld [vmem:[#allocation2 + $0x30] sm:$0xff]
          %v4973 = vld [vmem:[#allocation2 + $0x38] sm:$0xff]
          %v4974 = vld [vmem:[#allocation2 + $0x40] sm:$0xff]
          %v4975 = vld [vmem:[#allocation2 + $0x48] sm:$0xff]
          %v4976 = vld [vmem:[#allocation2 + $0x50] sm:$0xff]
          %v4977 = vld [vmem:[#allocation2 + $0x58] sm:$0xff]
          %v4978 = vld [vmem:[#allocation2 + $0x60] sm:$0xff]
          %v4979 = vld [vmem:[#allocation2 + $0x68] sm:$0xff]
          %v4980 = vld [vmem:[#allocation2 + $0x70] sm:$0xff]
          %v4981 = vld [vmem:[#allocation2 + $0x78] sm:$0xff]
          %v4982 = vld [vmem:[#allocation2 + $0x80] sm:$0xff]
          %v4983 = vld [vmem:[#allocation2 + $0x88] sm:$0xff]
          %v4984 = vld [vmem:[#allocation2 + $0x90] sm:$0xff]
          %v4985 = vld [vmem:[#allocation2 + $0x98] sm:$0xff]
          %v4986 = vld [vmem:[#allocation2 + $0xa0] sm:$0xff]
          %v4987 = vld [vmem:[#allocation2 + $0xa8] sm:$0xff]
          %v4988 = vld [vmem:[#allocation2 + $0xb0] sm:$0xff]
          %v4989 = vld [vmem:[#allocation2 + $0xb8] sm:$0xff]
          %v4990 = vld [vmem:[#allocation2 + $0xc0] sm:$0xff]
          %v4991 = vld [vmem:[#allocation2 + $0xc8] sm:$0xff]
          %v4992 = vld [vmem:[#allocation2 + $0xd0] sm:$0xff]
          %v4993 = vld [vmem:[#allocation2 + $0xd8] sm:$0xff]
          %v4994 = vld [vmem:[#allocation2 + $0xe0] sm:$0xff]
          %v4995 = vld [vmem:[#allocation2 + $0xe8] sm:$0xff]
          %v4996 = vld [vmem:[#allocation2 + $0xf0] sm:$0xff]
          %v4997 = vld [vmem:[#allocation2 + $0xf8] sm:$0xff]
          %v4998 = vld [vmem:[#allocation2 + $0x100] sm:$0xff]
          %v4999 = vld [vmem:[#allocation2 + $0x108] sm:$0xff]
          %v5000 = vld [vmem:[#allocation2 + $0x110] sm:$0xff]
          %v5001 = vld [vmem:[#allocation2 + $0x118] sm:$0xff]
          %v5002 = vld [vmem:[#allocation2 + $0x120] sm:$0xff]
          %v5003 = vld [vmem:[#allocation2 + $0x128] sm:$0xff]
          %v5004 = vld [vmem:[#allocation2 + $0x130] sm:$0xff]
          %v5005 = vld [vmem:[#allocation2 + $0x138] sm:$0xff]
          %v5006 = vld [vmem:[#allocation2 + $0x140] sm:$0xff]
          %v5007 = vld [vmem:[#allocation2 + $0x148] sm:$0xff]
          %v5008 = vld [vmem:[#allocation2 + $0x150] sm:$0xff]
          %v5009 = vld [vmem:[#allocation2 + $0x158] sm:$0xff]
          %v5010 = vld [vmem:[#allocation2 + $0x160] sm:$0xff]
          %v5011 = vld [vmem:[#allocation2 + $0x168] sm:$0xff]
          %v5012 = vld [vmem:[#allocation2 + $0x170] sm:$0xff]
          %v5013 = vld [vmem:[#allocation2 + $0x178] sm:$0xff]
          %v5014 = vld [vmem:[#allocation2 + $0x180] sm:$0xff]
          %v5015 = vld [vmem:[#allocation2 + $0x188] sm:$0xff]
          %v5016 = vld [vmem:[#allocation2 + $0x190] sm:$0xff]
          %v5017 = vld [vmem:[#allocation2 + $0x198] sm:$0xff]
          %v5018 = vld [vmem:[#allocation2 + $0x1a0] sm:$0xff]
          %v5019 = vld [vmem:[#allocation2 + $0x1a8] sm:$0xff]
          %v5020 = vld [vmem:[#allocation2 + $0x1b0] sm:$0xff]
          %v5021 = vld [vmem:[#allocation2 + $0x1b8] sm:$0xff]
          %v5022 = vld [vmem:[#allocation2 + $0x1c0] sm:$0xff]
          %v5023 = vld [vmem:[#allocation2 + $0x1c8] sm:$0xff]
          %v5024 = vld [vmem:[#allocation2 + $0x1d0] sm:$0xff]
          %v5025 = vld [vmem:[#allocation2 + $0x1d8] sm:$0xff]
          %v5026 = vld [vmem:[#allocation2 + $0x1e0] sm:$0xff]
          %v5027 = vld [vmem:[#allocation2 + $0x1e8] sm:$0xff]
          %v5028 = vld [vmem:[#allocation2 + $0x1f0] sm:$0xff]
          %v5029 = vld [vmem:[#allocation2 + $0x1f8] sm:$0xff]
          %v5030 = vld [vmem:[#allocation2 + $0x200] sm:$0xff]
          %v5031 = vld [vmem:[#allocation2 + $0x208] sm:$0xff]
          %v5032 = vld [vmem:[#allocation2 + $0x210] sm:$0xff]
          %v5033 = vld [vmem:[#allocation2 + $0x218] sm:$0xff]
          %v5034 = vld [vmem:[#allocation2 + $0x220] sm:$0xff]
          %v5035 = vld [vmem:[#allocation2 + $0x228] sm:$0xff]
          %v5036 = vld [vmem:[#allocation2 + $0x230] sm:$0xff]
          %v5037 = vld [vmem:[#allocation2 + $0x238] sm:$0xff]
          %v5038 = vld [vmem:[#allocation2 + $0x240] sm:$0xff]
          %v5039 = vld [vmem:[#allocation2 + $0x248] sm:$0xff]
          %v5040 = vld [vmem:[#allocation2 + $0x250] sm:$0xff]
          %v5041 = vld [vmem:[#allocation2 + $0x258] sm:$0xff]
          %v5042 = vld [vmem:[#allocation2 + $0x260] sm:$0xff]
          %v5043 = vld [vmem:[#allocation2 + $0x268] sm:$0xff]
          %v5044 = vld [vmem:[#allocation2 + $0x270] sm:$0xff]
          %v5045 = vld [vmem:[#allocation2 + $0x278] sm:$0xff]
          %v5046 = vld [vmem:[#allocation2 + $0x280] sm:$0xff]
          %v5047 = vld [vmem:[#allocation2 + $0x288] sm:$0xff]
          %v5048 = vld [vmem:[#allocation2 + $0x290] sm:$0xff]
          %v5049 = vld [vmem:[#allocation2 + $0x298] sm:$0xff]
          %v5050 = vld [vmem:[#allocation2 + $0x2a0] sm:$0xff]
          %v5051 = vld [vmem:[#allocation2 + $0x2a8] sm:$0xff]
          %v5052 = vld [vmem:[#allocation2 + $0x2b0] sm:$0xff]
          %v5053 = vld [vmem:[#allocation2 + $0x2b8] sm:$0xff]
          %v5054 = vld [vmem:[#allocation2 + $0x2c0] sm:$0xff]
          %v5055 = vld [vmem:[#allocation2 + $0x2c8] sm:$0xff]
          %v5056 = vld [vmem:[#allocation2 + $0x2d0] sm:$0xff]
          %v5057 = vld [vmem:[#allocation2 + $0x2d8] sm:$0xff]
          %v5058 = vld [vmem:[#allocation2 + $0x2e0] sm:$0xff]
          %v5059 = vld [vmem:[#allocation2 + $0x2e8] sm:$0xff]
          %v5060 = vld [vmem:[#allocation2 + $0x2f0] sm:$0xff]
          %v5061 = vld [vmem:[#allocation2 + $0x2f8] sm:$0xff]
          %v5062 = vld [vmem:[#allocation2 + $0x300] sm:$0xff]
          %v5063 = vld [vmem:[#allocation2 + $0x308] sm:$0xff]
          %v5064 = vld [vmem:[#allocation2 + $0x310] sm:$0xff]
          %v5065 = vld [vmem:[#allocation2 + $0x318] sm:$0xff]
          %v5066 = vld [vmem:[#allocation2 + $0x320] sm:$0xff]
          %v5067 = vld [vmem:[#allocation2 + $0x328] sm:$0xff]
          %v5068 = vld [vmem:[#allocation2 + $0x330] sm:$0xff]
          %v5069 = vld [vmem:[#allocation2 + $0x338] sm:$0xff]
          %v5070 = vld [vmem:[#allocation2 + $0x340] sm:$0xff]
          %v5071 = vld [vmem:[#allocation2 + $0x348] sm:$0xff]
          %v5072 = vld [vmem:[#allocation2 + $0x350] sm:$0xff]
          %v5073 = vld [vmem:[#allocation2 + $0x358] sm:$0xff]
          %v5074 = vld [vmem:[#allocation2 + $0x360] sm:$0xff]
          %v5075 = vld [vmem:[#allocation2 + $0x368] sm:$0xff]
          %v5076 = vld [vmem:[#allocation2 + $0x370] sm:$0xff]
          %v5077 = vld [vmem:[#allocation2 + $0x378] sm:$0xff]
          %v5078 = vld [vmem:[#allocation2 + $0x380] sm:$0xff]
          %v5079 = vld [vmem:[#allocation2 + $0x388] sm:$0xff]
          %v5080 = vld [vmem:[#allocation2 + $0x390] sm:$0xff]
          %v5081 = vld [vmem:[#allocation2 + $0x398] sm:$0xff]
          %v5082 = vld [vmem:[#allocation2 + $0x3a0] sm:$0xff]
          %v5083 = vld [vmem:[#allocation2 + $0x3a8] sm:$0xff]
          %v5084 = vld [vmem:[#allocation2 + $0x3b0] sm:$0xff]
          %v5085 = vld [vmem:[#allocation2 + $0x3b8] sm:$0xff]
          %v5086 = vld [vmem:[#allocation2 + $0x3c0] sm:$0xff]
          %v5087 = vld [vmem:[#allocation2 + $0x3c8] sm:$0xff]
          %v5088 = vld [vmem:[#allocation2 + $0x3d0] sm:$0xff]
          %v5089 = vld [vmem:[#allocation2 + $0x3d8] sm:$0xff]
          %v5090 = vld [vmem:[#allocation2 + $0x3e0] sm:$0xff]
          %v5091 = vld [vmem:[#allocation2 + $0x3e8] sm:$0xff]
          %v5092 = vld [vmem:[#allocation2 + $0x3f0] sm:$0xff]
          %v5093 = vld [vmem:[#allocation2 + $0x3f8] sm:$0xff]
          %v5094 = vld [vmem:[%s4] sm:$0x3]
          %v5096 = vlaneseq
          %v5097 = vshrl.u32 %v5096, 7
          %v5098 = vsub.s32 0, %v5097
          %v5099 = vrot.slane %v5094, %v5098
          %v5100 = vlaneseq
          %v5101 = vshrl.u32 %v5100, 7
          %v5102 = vsub.s32 1, %v5101
          %v5103 = vrot.slane %v5094, %v5102
          %v5106 = vadd.f32 %v4966, %v5099
          %v5107 = vadd.f32 %v4967, %v5103
          %v5108 = vadd.f32 %v4968, %v5099
          %v5109 = vadd.f32 %v4969, %v5103
          %v5110 = vadd.f32 %v4970, %v5099
          %v5111 = vadd.f32 %v4971, %v5103
          %v5112 = vadd.f32 %v4972, %v5099
          %v5113 = vadd.f32 %v4973, %v5103
          %v5114 = vadd.f32 %v4974, %v5099
          %v5115 = vadd.f32 %v4975, %v5103
          %v5116 = vadd.f32 %v4976, %v5099
          %v5117 = vadd.f32 %v4977, %v5103
          %v5118 = vadd.f32 %v4978, %v5099
          %v5119 = vadd.f32 %v4979, %v5103
          %v5120 = vadd.f32 %v4980, %v5099
          %v5121 = vadd.f32 %v4981, %v5103
          %v5122 = vadd.f32 %v4982, %v5099
          %v5123 = vadd.f32 %v4983, %v5103
          %v5124 = vadd.f32 %v4984, %v5099
          %v5125 = vadd.f32 %v4985, %v5103
          %v5126 = vadd.f32 %v4986, %v5099
          %v5127 = vadd.f32 %v4987, %v5103
          %v5128 = vadd.f32 %v4988, %v5099
          %v5129 = vadd.f32 %v4989, %v5103
          %v5130 = vadd.f32 %v4990, %v5099
          %v5131 = vadd.f32 %v4991, %v5103
          %v5132 = vadd.f32 %v4992, %v5099
          %v5133 = vadd.f32 %v4993, %v5103
          %v5134 = vadd.f32 %v4994, %v5099
          %v5135 = vadd.f32 %v4995, %v5103
          %v5136 = vadd.f32 %v4996, %v5099
          %v5137 = vadd.f32 %v4997, %v5103
          %v5138 = vadd.f32 %v4998, %v5099
          %v5139 = vadd.f32 %v4999, %v5103
          %v5140 = vadd.f32 %v5000, %v5099
          %v5141 = vadd.f32 %v5001, %v5103
          %v5142 = vadd.f32 %v5002, %v5099
          %v5143 = vadd.f32 %v5003, %v5103
          %v5144 = vadd.f32 %v5004, %v5099
          %v5145 = vadd.f32 %v5005, %v5103
          %v5146 = vadd.f32 %v5006, %v5099
          %v5147 = vadd.f32 %v5007, %v5103
          %v5148 = vadd.f32 %v5008, %v5099
          %v5149 = vadd.f32 %v5009, %v5103
          %v5150 = vadd.f32 %v5010, %v5099
          %v5151 = vadd.f32 %v5011, %v5103
          %v5152 = vadd.f32 %v5012, %v5099
          %v5153 = vadd.f32 %v5013, %v5103
          %v5154 = vadd.f32 %v5014, %v5099
          %v5155 = vadd.f32 %v5015, %v5103
          %v5156 = vadd.f32 %v5016, %v5099
          %v5157 = vadd.f32 %v5017, %v5103
          %v5158 = vadd.f32 %v5018, %v5099
          %v5159 = vadd.f32 %v5019, %v5103
          %v5160 = vadd.f32 %v5020, %v5099
          %v5161 = vadd.f32 %v5021, %v5103
          %v5162 = vadd.f32 %v5022, %v5099
          %v5163 = vadd.f32 %v5023, %v5103
          %v5164 = vadd.f32 %v5024, %v5099
          %v5165 = vadd.f32 %v5025, %v5103
          %v5166 = vadd.f32 %v5026, %v5099
          %v5167 = vadd.f32 %v5027, %v5103
          %v5168 = vadd.f32 %v5028, %v5099
          %v5169 = vadd.f32 %v5029, %v5103
          %v5170 = vadd.f32 %v5030, %v5099
          %v5171 = vadd.f32 %v5031, %v5103
          %v5172 = vadd.f32 %v5032, %v5099
          %v5173 = vadd.f32 %v5033, %v5103
          %v5174 = vadd.f32 %v5034, %v5099
          %v5175 = vadd.f32 %v5035, %v5103
          %v5176 = vadd.f32 %v5036, %v5099
          %v5177 = vadd.f32 %v5037, %v5103
          %v5178 = vadd.f32 %v5038, %v5099
          %v5179 = vadd.f32 %v5039, %v5103
          %v5180 = vadd.f32 %v5040, %v5099
          %v5181 = vadd.f32 %v5041, %v5103
          %v5182 = vadd.f32 %v5042, %v5099
          %v5183 = vadd.f32 %v5043, %v5103
          %v5184 = vadd.f32 %v5044, %v5099
          %v5185 = vadd.f32 %v5045, %v5103
          %v5186 = vadd.f32 %v5046, %v5099
          %v5187 = vadd.f32 %v5047, %v5103
          %v5188 = vadd.f32 %v5048, %v5099
          %v5189 = vadd.f32 %v5049, %v5103
          %v5190 = vadd.f32 %v5050, %v5099
          %v5191 = vadd.f32 %v5051, %v5103
          %v5192 = vadd.f32 %v5052, %v5099
          %v5193 = vadd.f32 %v5053, %v5103
          %v5194 = vadd.f32 %v5054, %v5099
          %v5195 = vadd.f32 %v5055, %v5103
          %v5196 = vadd.f32 %v5056, %v5099
          %v5197 = vadd.f32 %v5057, %v5103
          %v5198 = vadd.f32 %v5058, %v5099
          %v5199 = vadd.f32 %v5059, %v5103
          %v5200 = vadd.f32 %v5060, %v5099
          %v5201 = vadd.f32 %v5061, %v5103
          %v5202 = vadd.f32 %v5062, %v5099
          %v5203 = vadd.f32 %v5063, %v5103
          %v5204 = vadd.f32 %v5064, %v5099
          %v5205 = vadd.f32 %v5065, %v5103
          %v5206 = vadd.f32 %v5066, %v5099
          %v5207 = vadd.f32 %v5067, %v5103
          %v5208 = vadd.f32 %v5068, %v5099
          %v5209 = vadd.f32 %v5069, %v5103
          %v5210 = vadd.f32 %v5070, %v5099
          %v5211 = vadd.f32 %v5071, %v5103
          %v5212 = vadd.f32 %v5072, %v5099
          %v5213 = vadd.f32 %v5073, %v5103
          %v5214 = vadd.f32 %v5074, %v5099
          %v5215 = vadd.f32 %v5075, %v5103
          %v5216 = vadd.f32 %v5076, %v5099
          %v5217 = vadd.f32 %v5077, %v5103
          %v5218 = vadd.f32 %v5078, %v5099
          %v5219 = vadd.f32 %v5079, %v5103
          %v5220 = vadd.f32 %v5080, %v5099
          %v5221 = vadd.f32 %v5081, %v5103
          %v5222 = vadd.f32 %v5082, %v5099
          %v5223 = vadd.f32 %v5083, %v5103
          %v5224 = vadd.f32 %v5084, %v5099
          %v5225 = vadd.f32 %v5085, %v5103
          %v5226 = vadd.f32 %v5086, %v5099
          %v5227 = vadd.f32 %v5087, %v5103
          %v5228 = vadd.f32 %v5088, %v5099
          %v5229 = vadd.f32 %v5089, %v5103
          %v5230 = vadd.f32 %v5090, %v5099
          %v5231 = vadd.f32 %v5091, %v5103
          %v5232 = vadd.f32 %v5092, %v5099
          %v5233 = vadd.f32 %v5093, %v5103
          %5234 = vst [vmem:[%s430] sm:$0xff] %v5106
          %5235 = vst [vmem:[%s430 + $0x8] sm:$0xff] %v5107
          %5236 = vst [vmem:[%s430 + $0x10] sm:$0xff] %v5108
          %5237 = vst [vmem:[%s430 + $0x18] sm:$0xff] %v5109
          %5238 = vst [vmem:[%s430 + $0x20] sm:$0xff] %v5110
          %5239 = vst [vmem:[%s430 + $0x28] sm:$0xff] %v5111
          %5240 = vst [vmem:[%s430 + $0x30] sm:$0xff] %v5112
          %5241 = vst [vmem:[%s430 + $0x38] sm:$0xff] %v5113
          %5242 = vst [vmem:[%s430 + $0x40] sm:$0xff] %v5114
          %5243 = vst [vmem:[%s430 + $0x48] sm:$0xff] %v5115
          %5244 = vst [vmem:[%s430 + $0x50] sm:$0xff] %v5116
          %5245 = vst [vmem:[%s430 + $0x58] sm:$0xff] %v5117
          %5246 = vst [vmem:[%s430 + $0x60] sm:$0xff] %v5118
          %5247 = vst [vmem:[%s430 + $0x68] sm:$0xff] %v5119
          %5248 = vst [vmem:[%s430 + $0x70] sm:$0xff] %v5120
          %5249 = vst [vmem:[%s430 + $0x78] sm:$0xff] %v5121
          %5250 = vst [vmem:[%s430 + $0x80] sm:$0xff] %v5122
          %5251 = vst [vmem:[%s430 + $0x88] sm:$0xff] %v5123
          %5252 = vst [vmem:[%s430 + $0x90] sm:$0xff] %v5124
          %5253 = vst [vmem:[%s430 + $0x98] sm:$0xff] %v5125
          %5254 = vst [vmem:[%s430 + $0xa0] sm:$0xff] %v5126
          %5255 = vst [vmem:[%s430 + $0xa8] sm:$0xff] %v5127
          %5256 = vst [vmem:[%s430 + $0xb0] sm:$0xff] %v5128
          %5257 = vst [vmem:[%s430 + $0xb8] sm:$0xff] %v5129
          %5258 = vst [vmem:[%s430 + $0xc0] sm:$0xff] %v5130
          %5259 = vst [vmem:[%s430 + $0xc8] sm:$0xff] %v5131
          %5260 = vst [vmem:[%s430 + $0xd0] sm:$0xff] %v5132
          %5261 = vst [vmem:[%s430 + $0xd8] sm:$0xff] %v5133
          %5262 = vst [vmem:[%s430 + $0xe0] sm:$0xff] %v5134
          %5263 = vst [vmem:[%s430 + $0xe8] sm:$0xff] %v5135
          %5264 = vst [vmem:[%s430 + $0xf0] sm:$0xff] %v5136
          %5265 = vst [vmem:[%s430 + $0xf8] sm:$0xff] %v5137
          %5266 = vst [vmem:[%s430 + $0x100] sm:$0xff] %v5138
          %5267 = vst [vmem:[%s430 + $0x108] sm:$0xff] %v5139
          %5268 = vst [vmem:[%s430 + $0x110] sm:$0xff] %v5140
          %5269 = vst [vmem:[%s430 + $0x118] sm:$0xff] %v5141
          %5270 = vst [vmem:[%s430 + $0x120] sm:$0xff] %v5142
          %5271 = vst [vmem:[%s430 + $0x128] sm:$0xff] %v5143
          %5272 = vst [vmem:[%s430 + $0x130] sm:$0xff] %v5144
          %5273 = vst [vmem:[%s430 + $0x138] sm:$0xff] %v5145
          %5274 = vst [vmem:[%s430 + $0x140] sm:$0xff] %v5146
          %5275 = vst [vmem:[%s430 + $0x148] sm:$0xff] %v5147
          %5276 = vst [vmem:[%s430 + $0x150] sm:$0xff] %v5148
          %5277 = vst [vmem:[%s430 + $0x158] sm:$0xff] %v5149
          %5278 = vst [vmem:[%s430 + $0x160] sm:$0xff] %v5150
          %5279 = vst [vmem:[%s430 + $0x168] sm:$0xff] %v5151
          %5280 = vst [vmem:[%s430 + $0x170] sm:$0xff] %v5152
          %5281 = vst [vmem:[%s430 + $0x178] sm:$0xff] %v5153
          %5282 = vst [vmem:[%s430 + $0x180] sm:$0xff] %v5154
          %5283 = vst [vmem:[%s430 + $0x188] sm:$0xff] %v5155
          %5284 = vst [vmem:[%s430 + $0x190] sm:$0xff] %v5156
          %5285 = vst [vmem:[%s430 + $0x198] sm:$0xff] %v5157
          %5286 = vst [vmem:[%s430 + $0x1a0] sm:$0xff] %v5158
          %5287 = vst [vmem:[%s430 + $0x1a8] sm:$0xff] %v5159
          %5288 = vst [vmem:[%s430 + $0x1b0] sm:$0xff] %v5160
          %5289 = vst [vmem:[%s430 + $0x1b8] sm:$0xff] %v5161
          %5290 = vst [vmem:[%s430 + $0x1c0] sm:$0xff] %v5162
          %5291 = vst [vmem:[%s430 + $0x1c8] sm:$0xff] %v5163
          %5292 = vst [vmem:[%s430 + $0x1d0] sm:$0xff] %v5164
          %5293 = vst [vmem:[%s430 + $0x1d8] sm:$0xff] %v5165
          %5294 = vst [vmem:[%s430 + $0x1e0] sm:$0xff] %v5166
          %5295 = vst [vmem:[%s430 + $0x1e8] sm:$0xff] %v5167
          %5296 = vst [vmem:[%s430 + $0x1f0] sm:$0xff] %v5168
          %5297 = vst [vmem:[%s430 + $0x1f8] sm:$0xff] %v5169
          %5298 = vst [vmem:[%s430 + $0x200] sm:$0xff] %v5170
          %5299 = vst [vmem:[%s430 + $0x208] sm:$0xff] %v5171
          %5300 = vst [vmem:[%s430 + $0x210] sm:$0xff] %v5172
          %5301 = vst [vmem:[%s430 + $0x218] sm:$0xff] %v5173
          %5302 = vst [vmem:[%s430 + $0x220] sm:$0xff] %v5174
          %5303 = vst [vmem:[%s430 + $0x228] sm:$0xff] %v5175
          %5304 = vst [vmem:[%s430 + $0x230] sm:$0xff] %v5176
          %5305 = vst [vmem:[%s430 + $0x238] sm:$0xff] %v5177
          %5306 = vst [vmem:[%s430 + $0x240] sm:$0xff] %v5178
          %5307 = vst [vmem:[%s430 + $0x248] sm:$0xff] %v5179
          %5308 = vst [vmem:[%s430 + $0x250] sm:$0xff] %v5180
          %5309 = vst [vmem:[%s430 + $0x258] sm:$0xff] %v5181
          %5310 = vst [vmem:[%s430 + $0x260] sm:$0xff] %v5182
          %5311 = vst [vmem:[%s430 + $0x268] sm:$0xff] %v5183
          %5312 = vst [vmem:[%s430 + $0x270] sm:$0xff] %v5184
          %5313 = vst [vmem:[%s430 + $0x278] sm:$0xff] %v5185
          %5314 = vst [vmem:[%s430 + $0x280] sm:$0xff] %v5186
          %5315 = vst [vmem:[%s430 + $0x288] sm:$0xff] %v5187
          %5316 = vst [vmem:[%s430 + $0x290] sm:$0xff] %v5188
          %5317 = vst [vmem:[%s430 + $0x298] sm:$0xff] %v5189
          %5318 = vst [vmem:[%s430 + $0x2a0] sm:$0xff] %v5190
          %5319 = vst [vmem:[%s430 + $0x2a8] sm:$0xff] %v5191
          %5320 = vst [vmem:[%s430 + $0x2b0] sm:$0xff] %v5192
          %5321 = vst [vmem:[%s430 + $0x2b8] sm:$0xff] %v5193
          %5322 = vst [vmem:[%s430 + $0x2c0] sm:$0xff] %v5194
          %5323 = vst [vmem:[%s430 + $0x2c8] sm:$0xff] %v5195
          %5324 = vst [vmem:[%s430 + $0x2d0] sm:$0xff] %v5196
          %5325 = vst [vmem:[%s430 + $0x2d8] sm:$0xff] %v5197
          %5326 = vst [vmem:[%s430 + $0x2e0] sm:$0xff] %v5198
          %5327 = vst [vmem:[%s430 + $0x2e8] sm:$0xff] %v5199
          %5328 = vst [vmem:[%s430 + $0x2f0] sm:$0xff] %v5200
          %5329 = vst [vmem:[%s430 + $0x2f8] sm:$0xff] %v5201
          %5330 = vst [vmem:[%s430 + $0x300] sm:$0xff] %v5202
          %5331 = vst [vmem:[%s430 + $0x308] sm:$0xff] %v5203
          %5332 = vst [vmem:[%s430 + $0x310] sm:$0xff] %v5204
          %5333 = vst [vmem:[%s430 + $0x318] sm:$0xff] %v5205
          %5334 = vst [vmem:[%s430 + $0x320] sm:$0xff] %v5206
          %5335 = vst [vmem:[%s430 + $0x328] sm:$0xff] %v5207
          %5336 = vst [vmem:[%s430 + $0x330] sm:$0xff] %v5208
          %5337 = vst [vmem:[%s430 + $0x338] sm:$0xff] %v5209
          %5338 = vst [vmem:[%s430 + $0x340] sm:$0xff] %v5210
          %5339 = vst [vmem:[%s430 + $0x348] sm:$0xff] %v5211
          %5340 = vst [vmem:[%s430 + $0x350] sm:$0xff] %v5212
          %5341 = vst [vmem:[%s430 + $0x358] sm:$0xff] %v5213
          %5342 = vst [vmem:[%s430 + $0x360] sm:$0xff] %v5214
          %5343 = vst [vmem:[%s430 + $0x368] sm:$0xff] %v5215
          %5344 = vst [vmem:[%s430 + $0x370] sm:$0xff] %v5216
          %5345 = vst [vmem:[%s430 + $0x378] sm:$0xff] %v5217
          %5346 = vst [vmem:[%s430 + $0x380] sm:$0xff] %v5218
          %5347 = vst [vmem:[%s430 + $0x388] sm:$0xff] %v5219
          %5348 = vst [vmem:[%s430 + $0x390] sm:$0xff] %v5220
          %5349 = vst [vmem:[%s430 + $0x398] sm:$0xff] %v5221
          %5350 = vst [vmem:[%s430 + $0x3a0] sm:$0xff] %v5222
          %5351 = vst [vmem:[%s430 + $0x3a8] sm:$0xff] %v5223
          %5352 = vst [vmem:[%s430 + $0x3b0] sm:$0xff] %v5224
          %5353 = vst [vmem:[%s430 + $0x3b8] sm:$0xff] %v5225
          %5354 = vst [vmem:[%s430 + $0x3c0] sm:$0xff] %v5226
          %5355 = vst [vmem:[%s430 + $0x3c8] sm:$0xff] %v5227
          %5356 = vst [vmem:[%s430 + $0x3d0] sm:$0xff] %v5228
          %5357 = vst [vmem:[%s430 + $0x3d8] sm:$0xff] %v5229
          %5358 = vst [vmem:[%s430 + $0x3e0] sm:$0xff] %v5230
          %5359 = vst [vmem:[%s430 + $0x3e8] sm:$0xff] %v5231
          %5360 = vst [vmem:[%s430 + $0x3f0] sm:$0xff] %v5232
          %5361 = vst [vmem:[%s430 + $0x3f8] sm:$0xff] %v5233
        $region71: #{mlp_forward.1} parent=58 // pred_fallthru
          _
        %s5362 = sand.u32 %s164, 1
        %s5363 = scalar_lea.sflag [#allocation5], %s5362
        %s5364 = sand.u32 %s164, 1
        %s5365 = smul.addr %s5364, 1024
        %s5366 = scalar_lea.vmem [#allocation4], %s5365
        // Predicated region
        $region72: #{mlp_forward.1} parent=58 // pred_check
          %p5367 = pneg %p174
        $region73: #{mlp_forward.1} parent=58 // pred_check_branch
          %5369 = sbr.rel (%p5367) target = $region75
        $region74: #{mlp_forward.1} parent=58 // pred_region
          %s5370 = smul.u32 64, %s23
          %s5372 = ssub.s32 16384, 16384
          %5373 = vsyncadd %s5363, %s5372
          %s5374 = smul.addr %s5370, 2
          %s5375 = smul.addr %s5374, 128
          %s5376 = scalar_lea.hbm %s5, %s5375
          %s5377 = sshll.u32 %s5366, 4
          %s5378 = int_to_ptr.vmem [resolvable:$true] %s5377
          %5383 = dma.vmem_to_hbm [thread:$0]  %s5378, 16384, %s5376, %s5363, 256, 256, 16
        $region75: #{mlp_forward.1} parent=58 // pred_fallthru
          _
      $region59: #{mlp_forward.1} parent=5 // pred_fallthru
        _
      %p5384 = scmp.le.s32.totalorder 2, %s14
      // Predicated region
      $region76: #{mlp_forward.1} parent=5 // pred_check
        %p5385 = pneg %p5384
      $region77: #{mlp_forward.1} parent=5 // pred_check_branch
        %5387 = sbr.rel (%p5385) target = $region79
      $region78: #{mlp_forward.1} parent=5 // pred_region
        %s5388 = ssub.s32 %s14, 2
        // Predicated region
        $region80: #{mlp_forward.1} parent=78 // pred_check
          %p5389 = pneg %p180
        $region81: #{mlp_forward.1} parent=78 // pred_check_branch
          %5391 = sbr.rel (%p5389) target = $region83
        $region82: #{mlp_forward.1} parent=78 // pred_region
          %s5392 = sand.u32 %s165, 1
          %s5393 = scalar_lea.sflag [#allocation5], %s5392
          %s5394 = sand.u32 %s165, 1
          %s5395 = smul.addr %s5394, 1024
          %s5396 = scalar_lea.vmem [#allocation4], %s5395
          %5397 = dma.done %s5393, 16384
        $region83: #{mlp_forward.1} parent=78 // pred_fallthru
          _
      $region79: #{mlp_forward.1} parent=5 // pred_fallthru
        _
    $region6: #{mlp_forward.1} parent=1 // loop_footer
      %s18 = sadd.s32 1, %s14
    $region7: #{mlp_forward.1} parent=1 // loop_footer_branch
      %13 = sbr.rel target = $region3
    $region8: #{mlp_forward.1} parent=1 // loop_exit
      _
    %5398 = vsyncpa [#allocation5], 1
    %s5399 = scalar_lea.sflag [#allocation5], 1
    %5400 = vsyncpa %s5399, 1

</llo_original>
